<compile_context>
chip_gen: v7x
topology: tpu7x:2x2x1
jax: 0.10.0
libtpu: 0.0.40
codegen_flags: <defaults>
</compile_context>

<pallas_src>
import numpy as np
import jax
import jax.numpy as jnp
from jax.experimental import pallas as pl
from jax.experimental.pallas import tpu as pltpu

N_BLOCKS = 8          # MiddleFlow repeats the block 8 times
CONVS_PER_BLOCK = 3   # each block has 3 (ReLU -> SepConv -> BN) stages
BN_EPS = 1e-5


# ----------------------------------------------------------------------------
# Fused kernel: one grid step = one MiddleFlowBlock for one batch tile.
# ----------------------------------------------------------------------------
def middle_flow_kernel(x_ref, dw_ref, pw_ref, sc_ref, bi_ref, o_ref, xpad_ref):
    """Refs (per grid step (n, b)):
      x_ref   : (1, H, W, C)      input activation (only used at b == 0)
      dw_ref  : (1, 3, 9, C)      depthwise 3x3 weights of block b, (dy*3+dx, C)
      pw_ref  : (1, 3, C, C)      pointwise 1x1 weights of block b, (in, out)
      sc_ref  : (1, 3, C)         folded BN scale  = gamma / sqrt(var + eps)
      bi_ref  : (1, 3, C)         folded BN bias   = beta - mean * scale
      o_ref   : (1, H, W, C)      output; resident accumulator across blocks
      xpad_ref: (1, H+2, W+2, C)  VMEM scratch, zero halo + ReLU'd interior
    """
    blk = pl.program_id(1)

    @pl.when(blk == 0)
    def _():
        # Carry-in activation for this batch tile; zero the padded scratch once
        # (the halo stays zero because only the interior is ever rewritten).
        o_ref[...] = x_ref[...]
        xpad_ref[...] = jnp.zeros_like(xpad_ref)

    shortcut = o_ref[...]                         # (1, H, W, C), resident in VMEM
    _, h, w, c = shortcut.shape

    hcur = shortcut
    for s in range(CONVS_PER_BLOCK):
        # Pre-activation ReLU, written into the interior of the zero-padded
        # VMEM buffer (ReLU commutes with zero padding since ReLU(0) == 0).
        xpad_ref[:, 1:h + 1, 1:w + 1, :] = jnp.maximum(hcur, 0.0)
        xp = xpad_ref[...]                        # (1, H+2, W+2, C)

        # Depthwise 3x3: 9 shifted, per-channel-scaled windows (VPU).
        # TODO(synk): dx-shifted W slices cause sublane relayouts; a
        # pltpu.roll-based formulation would move them to the XLU slot.
        dwr = dw_ref[0, s].reshape(9, 1, 1, 1, c)
        acc = xp[:, 1:1 + h, 1:1 + w, :] * dwr[4]          # center tap first
        for k in range(9):
            if k == 4:
                continue
            dy, dx = k // 3, k % 3
            acc = acc + xp[:, dy:dy + h, dx:dx + w, :] * dwr[k]

        # Pointwise 1x1: (H*W, C) @ (C, C) on the MXU, bf16 in / f32 accumulate.
        pw = pw_ref[0, s].astype(jnp.bfloat16)
        y = jnp.dot(acc.reshape(h * w, c).astype(jnp.bfloat16), pw,
                    preferred_element_type=jnp.float32)

        # Folded BatchNorm (inference) as a per-channel affine.
        y = y * sc_ref[0, s].reshape(1, c) + bi_ref[0, s].reshape(1, c)
        hcur = y.reshape(1, h, w, c)

    # Block residual; o_ref stays resident in VMEM across the block axis and is
    # written back to HBM only once per batch tile.
    o_ref[...] = shortcut + hcur


# ----------------------------------------------------------------------------
# Wrapper
# ----------------------------------------------------------------------------
def middle_flow(x, params):
    """x: (N, H, W, C) f32; params = (dw, pw, scale, bias) stacked over
    (N_BLOCKS, CONVS_PER_BLOCK, ...)."""
    dw_all, pw_all, scale_all, bias_all = params
    n, h, w, c = x.shape

    return pl.pallas_call(
        middle_flow_kernel,
        out_shape=jax.ShapeDtypeStruct((n, h, w, c), jnp.float32),
        grid_spec=pltpu.PrefetchScalarGridSpec(
            num_scalar_prefetch=0,
            grid=(n, N_BLOCKS),
            in_specs=[
                pl.BlockSpec((1, h, w, c), lambda i, b: (i, 0, 0, 0)),
                pl.BlockSpec((1, CONVS_PER_BLOCK, 9, c),
                             lambda i, b: (b, 0, 0, 0)),
                pl.BlockSpec((1, CONVS_PER_BLOCK, c, c),
                             lambda i, b: (b, 0, 0, 0)),
                pl.BlockSpec((1, CONVS_PER_BLOCK, c), lambda i, b: (b, 0, 0)),
                pl.BlockSpec((1, CONVS_PER_BLOCK, c), lambda i, b: (b, 0, 0)),
            ],
            out_specs=pl.BlockSpec((1, h, w, c), lambda i, b: (i, 0, 0, 0)),
            scratch_shapes=[pltpu.VMEM((1, h + 2, w + 2, c), jnp.float32)],
        ),
        compiler_params=pltpu.CompilerParams(
            dimension_semantics=("parallel", "arbitrary")),
    )(x, dw_all, pw_all, scale_all, bias_all)


# ----------------------------------------------------------------------------
# Deterministic parameter init (synthetic — mimics module __init__ shapes)
# ----------------------------------------------------------------------------
def init_params(key, c):
    ks = jax.random.split(key, 6)
    lead = (N_BLOCKS, CONVS_PER_BLOCK)
    dw = jax.random.normal(ks[0], lead + (9, c), jnp.float32) * 0.1
    pw = jax.random.normal(ks[1], lead + (c, c), jnp.float32) / np.sqrt(c)
    gamma = 1.0 + 0.1 * jax.random.normal(ks[2], lead + (c,), jnp.float32)
    beta = 0.1 * jax.random.normal(ks[3], lead + (c,), jnp.float32)
    mean = 0.1 * jax.random.normal(ks[4], lead + (c,), jnp.float32)
    var = jax.random.uniform(ks[5], lead + (c,), jnp.float32,
                             minval=0.5, maxval=1.5)
    scale = gamma / jnp.sqrt(var + BN_EPS)
    bias = beta - mean * scale
    return dw, pw, scale, bias


# ----------------------------------------------------------------------------
# Pure-JAX reference (same math, same bf16 matmul precision) for sanity check
# ----------------------------------------------------------------------------
def _ref_stage(hcur, dw, pw, scale, bias):
    n, hh, ww, c = hcur.shape
    xp = jnp.pad(jnp.maximum(hcur, 0.0), ((0, 0), (1, 1), (1, 1), (0, 0)))
    dwr = dw.reshape(9, 1, 1, 1, c)
    acc = xp[:, 1:1 + hh, 1:1 + ww, :] * dwr[4]
    for k in range(9):
        if k == 4:
            continue
        dy, dx = k // 3, k % 3
        acc = acc + xp[:, dy:dy + hh, dx:dx + ww, :] * dwr[k]
    y = jnp.einsum("nhwc,cd->nhwd",
                   acc.astype(jnp.bfloat16), pw.astype(jnp.bfloat16),
                   preferred_element_type=jnp.float32)
    return y * scale.reshape(1, 1, 1, c) + bias.reshape(1, 1, 1, c)


def middle_flow_ref(x, params):
    dw_all, pw_all, scale_all, bias_all = params
    for b in range(N_BLOCKS):
        shortcut = x
        hcur = x
        for s in range(CONVS_PER_BLOCK):
            hcur = _ref_stage(hcur, dw_all[b, s], pw_all[b, s],
                              scale_all[b, s], bias_all[b, s])
        x = shortcut + hcur
    return x


# ----------------------------------------------------------------------------
if __name__ == "__main__":
    key = jax.random.PRNGKey(0)
    kx, kp = jax.random.split(key)

    N, H, W, C = 2, 16, 16, 32            # small shapes (real Xception: C=728)
    x = jax.random.normal(kx, (N, H, W, C), jnp.float32)
    params = init_params(kp, C)

    out = jax.jit(middle_flow)(x, params)
    out = jax.block_until_ready(out)

    ref = middle_flow_ref(x, params)
    np.testing.assert_allclose(np.asarray(out), np.asarray(ref),
                               rtol=1e-2, atol=1e-2)

    print("KERNEL_OK")
</pallas_src>

<mosaic_0001>
module attributes {stable_mosaic.version = 11 : i64} {
  func.func @middle_flow_kernel(%arg0: i32, %arg1: i32, %arg2: memref<1x16x16x32xf32, #tpu.memory_space<vmem>>, %arg3: memref<1x3x9x32xf32, #tpu.memory_space<vmem>>, %arg4: memref<1x3x32x32xf32, #tpu.memory_space<vmem>>, %arg5: memref<1x3x32xf32, #tpu.memory_space<vmem>>, %arg6: memref<1x3x32xf32, #tpu.memory_space<vmem>>, %arg7: memref<1x16x16x32xf32, #tpu.memory_space<vmem>>, %arg8: memref<1x18x18x32xf32, #tpu.memory_space<vmem>>) attributes {dimension_semantics = [#tpu.dimension_semantics<parallel>, #tpu.dimension_semantics<arbitrary>], iteration_bounds = array<i64: 2, 8>, scalar_prefetch = 0 : i64, scratch_operands = 1 : i64, tpu.core_type = #tpu.core_type<tc>, window_params = [{transform_indices = @transform_0, window_bounds = array<i64: 1, 16, 16, 32>}, {transform_indices = @transform_1, window_bounds = array<i64: 1, 3, 9, 32>}, {transform_indices = @transform_2, window_bounds = array<i64: 1, 3, 32, 32>}, {transform_indices = @transform_3, window_bounds = array<i64: 1, 3, 32>}, {transform_indices = @transform_4, window_bounds = array<i64: 1, 3, 32>}, {transform_indices = @transform_5, window_bounds = array<i64: 1, 16, 16, 32>}]} {
    %c0_i32 = arith.constant 0 : i32
    %0 = arith.cmpi eq, %arg1, %c0_i32 : i32
    %1 = arith.extui %0 : i1 to i32
    %c0_i32_0 = arith.constant 0 : i32
    %2 = arith.cmpi ne, %1, %c0_i32_0 : i32
    scf.if %2 {
      %c0_77 = arith.constant 0 : index
      %c0_78 = arith.constant 0 : index
      %c0_79 = arith.constant 0 : index
      %c0_80 = arith.constant 0 : index
      %237 = vector.load %arg2[%c0_77, %c0_78, %c0_79, %c0_80] : memref<1x16x16x32xf32, #tpu.memory_space<vmem>>, vector<1x16x16x32xf32>
      %c0_81 = arith.constant 0 : index
      %c0_82 = arith.constant 0 : index
      %c0_83 = arith.constant 0 : index
      %c0_84 = arith.constant 0 : index
      %238 = vector.load %arg7[%c0_81, %c0_82, %c0_83, %c0_84] : memref<1x16x16x32xf32, #tpu.memory_space<vmem>>, vector<1x16x16x32xf32>
      tpu.vector_store %arg7[%c0_81, %c0_82, %c0_83, %c0_84], %237 {strides = array<i32>} : memref<1x16x16x32xf32, #tpu.memory_space<vmem>>, vector<1x16x16x32xf32>,
      %cst_85 = arith.constant 0.000000e+00 : f32
      %239 = vector.broadcast %cst_85 : f32 to vector<1x18x18x32xf32>
      %c0_86 = arith.constant 0 : index
      %c0_87 = arith.constant 0 : index
      %c0_88 = arith.constant 0 : index
      %c0_89 = arith.constant 0 : index
      %240 = vector.load %arg8[%c0_86, %c0_87, %c0_88, %c0_89] : memref<1x18x18x32xf32, #tpu.memory_space<vmem>>, vector<1x18x18x32xf32>
      tpu.vector_store %arg8[%c0_86, %c0_87, %c0_88, %c0_89], %239 {strides = array<i32>} : memref<1x18x18x32xf32, #tpu.memory_space<vmem>>, vector<1x18x18x32xf32>,
    } else {
    }
    %c0 = arith.constant 0 : index
    %c0_1 = arith.constant 0 : index
    %c0_2 = arith.constant 0 : index
    %c0_3 = arith.constant 0 : index
    %3 = vector.load %arg7[%c0, %c0_1, %c0_2, %c0_3] : memref<1x16x16x32xf32, #tpu.memory_space<vmem>>, vector<1x16x16x32xf32>
    %cst = arith.constant 0.000000e+00 : f32
    %4 = vector.broadcast %cst : f32 to vector<1x16x16x32xf32>
    %5 = arith.maximumf %3, %4 : vector<1x16x16x32xf32>
    %c0_4 = arith.constant 0 : index
    %c1 = arith.constant 1 : index
    %c1_5 = arith.constant 1 : index
    %c0_6 = arith.constant 0 : index
    %6 = vector.load %arg8[%c0_4, %c1, %c1_5, %c0_6] : memref<1x18x18x32xf32, #tpu.memory_space<vmem>>, vector<1x16x16x32xf32>
    tpu.vector_store %arg8[%c0_4, %c1, %c1_5, %c0_6], %5 {strides = array<i32>} : memref<1x18x18x32xf32, #tpu.memory_space<vmem>>, vector<1x16x16x32xf32>,
    %c0_7 = arith.constant 0 : index
    %c0_8 = arith.constant 0 : index
    %c0_9 = arith.constant 0 : index
    %c0_10 = arith.constant 0 : index
    %7 = vector.load %arg8[%c0_7, %c0_8, %c0_9, %c0_10] : memref<1x18x18x32xf32, #tpu.memory_space<vmem>>, vector<1x18x18x32xf32>
    %c0_11 = arith.constant 0 : index
    %c0_12 = arith.constant 0 : index
    %c0_13 = arith.constant 0 : index
    %c0_14 = arith.constant 0 : index
    %8 = vector.load %arg3[%c0_11, %c0_12, %c0_13, %c0_14] : memref<1x3x9x32xf32, #tpu.memory_space<vmem>>, vector<1x1x9x32xf32>
    %9 = vector.shape_cast %8 : vector<1x1x9x32xf32> to vector<9x32xf32>
    %10 = vector.shape_cast %9 : vector<9x32xf32> to vector<9x1x1x1x32xf32>
    %11 = vector.extract_strided_slice %7 {offsets = [0, 1, 1, 0], sizes = [1, 16, 16, 32], strides = [1, 1, 1, 1]} : vector<1x18x18x32xf32> to vector<1x16x16x32xf32>
    %12 = vector.extract_strided_slice %10 {offsets = [4, 0, 0, 0, 0], sizes = [1, 1, 1, 1, 32], strides = [1, 1, 1, 1, 1]} : vector<9x1x1x1x32xf32> to vector<1x1x1x1x32xf32>
    %13 = vector.shape_cast %12 : vector<1x1x1x1x32xf32> to vector<1x1x1x32xf32>
    %14 = vector.broadcast %13 : vector<1x1x1x32xf32> to vector<1x16x16x32xf32>
    %15 = arith.mulf %11, %14 : vector<1x16x16x32xf32>
    %16 = vector.extract_strided_slice %7 {offsets = [0, 0, 0, 0], sizes = [1, 16, 16, 32], strides = [1, 1, 1, 1]} : vector<1x18x18x32xf32> to vector<1x16x16x32xf32>
    %17 = vector.extract_strided_slice %10 {offsets = [0, 0, 0, 0, 0], sizes = [1, 1, 1, 1, 32], strides = [1, 1, 1, 1, 1]} : vector<9x1x1x1x32xf32> to vector<1x1x1x1x32xf32>
    %18 = vector.shape_cast %17 : vector<1x1x1x1x32xf32> to vector<1x1x1x32xf32>
    %19 = vector.broadcast %18 : vector<1x1x1x32xf32> to vector<1x16x16x32xf32>
    %20 = arith.mulf %16, %19 : vector<1x16x16x32xf32>
    %21 = arith.addf %15, %20 : vector<1x16x16x32xf32>
    %22 = vector.extract_strided_slice %7 {offsets = [0, 0, 1, 0], sizes = [1, 16, 16, 32], strides = [1, 1, 1, 1]} : vector<1x18x18x32xf32> to vector<1x16x16x32xf32>
    %23 = vector.extract_strided_slice %10 {offsets = [1, 0, 0, 0, 0], sizes = [1, 1, 1, 1, 32], strides = [1, 1, 1, 1, 1]} : vector<9x1x1x1x32xf32> to vector<1x1x1x1x32xf32>
    %24 = vector.shape_cast %23 : vector<1x1x1x1x32xf32> to vector<1x1x1x32xf32>
    %25 = vector.broadcast %24 : vector<1x1x1x32xf32> to vector<1x16x16x32xf32>
    %26 = arith.mulf %22, %25 : vector<1x16x16x32xf32>
    %27 = arith.addf %21, %26 : vector<1x16x16x32xf32>
    %28 = vector.extract_strided_slice %7 {offsets = [0, 0, 2, 0], sizes = [1, 16, 16, 32], strides = [1, 1, 1, 1]} : vector<1x18x18x32xf32> to vector<1x16x16x32xf32>
    %29 = vector.extract_strided_slice %10 {offsets = [2, 0, 0, 0, 0], sizes = [1, 1, 1, 1, 32], strides = [1, 1, 1, 1, 1]} : vector<9x1x1x1x32xf32> to vector<1x1x1x1x32xf32>
    %30 = vector.shape_cast %29 : vector<1x1x1x1x32xf32> to vector<1x1x1x32xf32>
    %31 = vector.broadcast %30 : vector<1x1x1x32xf32> to vector<1x16x16x32xf32>
    %32 = arith.mulf %28, %31 : vector<1x16x16x32xf32>
    %33 = arith.addf %27, %32 : vector<1x16x16x32xf32>
    %34 = vector.extract_strided_slice %7 {offsets = [0, 1, 0, 0], sizes = [1, 16, 16, 32], strides = [1, 1, 1, 1]} : vector<1x18x18x32xf32> to vector<1x16x16x32xf32>
    %35 = vector.extract_strided_slice %10 {offsets = [3, 0, 0, 0, 0], sizes = [1, 1, 1, 1, 32], strides = [1, 1, 1, 1, 1]} : vector<9x1x1x1x32xf32> to vector<1x1x1x1x32xf32>
    %36 = vector.shape_cast %35 : vector<1x1x1x1x32xf32> to vector<1x1x1x32xf32>
    %37 = vector.broadcast %36 : vector<1x1x1x32xf32> to vector<1x16x16x32xf32>
    %38 = arith.mulf %34, %37 : vector<1x16x16x32xf32>
    %39 = arith.addf %33, %38 : vector<1x16x16x32xf32>
    %40 = vector.extract_strided_slice %7 {offsets = [0, 1, 2, 0], sizes = [1, 16, 16, 32], strides = [1, 1, 1, 1]} : vector<1x18x18x32xf32> to vector<1x16x16x32xf32>
    %41 = vector.extract_strided_slice %10 {offsets = [5, 0, 0, 0, 0], sizes = [1, 1, 1, 1, 32], strides = [1, 1, 1, 1, 1]} : vector<9x1x1x1x32xf32> to vector<1x1x1x1x32xf32>
    %42 = vector.shape_cast %41 : vector<1x1x1x1x32xf32> to vector<1x1x1x32xf32>
    %43 = vector.broadcast %42 : vector<1x1x1x32xf32> to vector<1x16x16x32xf32>
    %44 = arith.mulf %40, %43 : vector<1x16x16x32xf32>
    %45 = arith.addf %39, %44 : vector<1x16x16x32xf32>
    %46 = vector.extract_strided_slice %7 {offsets = [0, 2, 0, 0], sizes = [1, 16, 16, 32], strides = [1, 1, 1, 1]} : vector<1x18x18x32xf32> to vector<1x16x16x32xf32>
    %47 = vector.extract_strided_slice %10 {offsets = [6, 0, 0, 0, 0], sizes = [1, 1, 1, 1, 32], strides = [1, 1, 1, 1, 1]} : vector<9x1x1x1x32xf32> to vector<1x1x1x1x32xf32>
    %48 = vector.shape_cast %47 : vector<1x1x1x1x32xf32> to vector<1x1x1x32xf32>
    %49 = vector.broadcast %48 : vector<1x1x1x32xf32> to vector<1x16x16x32xf32>
    %50 = arith.mulf %46, %49 : vector<1x16x16x32xf32>
    %51 = arith.addf %45, %50 : vector<1x16x16x32xf32>
    %52 = vector.extract_strided_slice %7 {offsets = [0, 2, 1, 0], sizes = [1, 16, 16, 32], strides = [1, 1, 1, 1]} : vector<1x18x18x32xf32> to vector<1x16x16x32xf32>
    %53 = vector.extract_strided_slice %10 {offsets = [7, 0, 0, 0, 0], sizes = [1, 1, 1, 1, 32], strides = [1, 1, 1, 1, 1]} : vector<9x1x1x1x32xf32> to vector<1x1x1x1x32xf32>
    %54 = vector.shape_cast %53 : vector<1x1x1x1x32xf32> to vector<1x1x1x32xf32>
    %55 = vector.broadcast %54 : vector<1x1x1x32xf32> to vector<1x16x16x32xf32>
    %56 = arith.mulf %52, %55 : vector<1x16x16x32xf32>
    %57 = arith.addf %51, %56 : vector<1x16x16x32xf32>
    %58 = vector.extract_strided_slice %7 {offsets = [0, 2, 2, 0], sizes = [1, 16, 16, 32], strides = [1, 1, 1, 1]} : vector<1x18x18x32xf32> to vector<1x16x16x32xf32>
    %59 = vector.extract_strided_slice %10 {offsets = [8, 0, 0, 0, 0], sizes = [1, 1, 1, 1, 32], strides = [1, 1, 1, 1, 1]} : vector<9x1x1x1x32xf32> to vector<1x1x1x1x32xf32>
    %60 = vector.shape_cast %59 : vector<1x1x1x1x32xf32> to vector<1x1x1x32xf32>
    %61 = vector.broadcast %60 : vector<1x1x1x32xf32> to vector<1x16x16x32xf32>
    %62 = arith.mulf %58, %61 : vector<1x16x16x32xf32>
    %63 = arith.addf %57, %62 : vector<1x16x16x32xf32>
    %c0_15 = arith.constant 0 : index
    %c0_16 = arith.constant 0 : index
    %c0_17 = arith.constant 0 : index
    %c0_18 = arith.constant 0 : index
    %64 = vector.load %arg4[%c0_15, %c0_16, %c0_17, %c0_18] : memref<1x3x32x32xf32, #tpu.memory_space<vmem>>, vector<1x1x32x32xf32>
    %65 = vector.shape_cast %64 : vector<1x1x32x32xf32> to vector<32x32xf32>
    %66 = arith.truncf %65 : vector<32x32xf32> to vector<32x32xbf16>
    %67 = vector.shape_cast %63 : vector<1x16x16x32xf32> to vector<256x32xf32>
    %68 = arith.truncf %67 : vector<256x32xf32> to vector<256x32xbf16>
    %cst_19 = arith.constant dense<0.000000e+00> : vector<256x32xf32>
    %69 = tpu.matmul %68, %66, %cst_19 {dimension_numbers = #tpu.dot_dimension_numbers<[1], [0], [0], [1], [0, 0, 1, 1], [], []>} : vector<256x32xbf16>, vector<32x32xbf16>, vector<256x32xf32> -> vector<256x32xf32>
    %c0_20 = arith.constant 0 : index
    %c0_21 = arith.constant 0 : index
    %c0_22 = arith.constant 0 : index
    %70 = vector.load %arg5[%c0_20, %c0_21, %c0_22] : memref<1x3x32xf32, #tpu.memory_space<vmem>>, vector<1x1x32xf32>
    %71 = vector.shape_cast %70 : vector<1x1x32xf32> to vector<32xf32>
    %72 = vector.shape_cast %71 : vector<32xf32> to vector<1x32xf32>
    %73 = vector.broadcast %72 : vector<1x32xf32> to vector<256x32xf32>
    %74 = arith.mulf %69, %73 : vector<256x32xf32>
    %c0_23 = arith.constant 0 : index
    %c0_24 = arith.constant 0 : index
    %c0_25 = arith.constant 0 : index
    %75 = vector.load %arg6[%c0_23, %c0_24, %c0_25] : memref<1x3x32xf32, #tpu.memory_space<vmem>>, vector<1x1x32xf32>
    %76 = vector.shape_cast %75 : vector<1x1x32xf32> to vector<32xf32>
    %77 = vector.shape_cast %76 : vector<32xf32> to vector<1x32xf32>
    %78 = vector.broadcast %77 : vector<1x32xf32> to vector<256x32xf32>
    %79 = arith.addf %74, %78 : vector<256x32xf32>
    %80 = vector.shape_cast %79 : vector<256x32xf32> to vector<1x16x16x32xf32>
    %cst_26 = arith.constant 0.000000e+00 : f32
    %81 = vector.broadcast %cst_26 : f32 to vector<1x16x16x32xf32>
    %82 = arith.maximumf %80, %81 : vector<1x16x16x32xf32>
    %c0_27 = arith.constant 0 : index
    %c1_28 = arith.constant 1 : index
    %c1_29 = arith.constant 1 : index
    %c0_30 = arith.constant 0 : index
    %83 = vector.load %arg8[%c0_27, %c1_28, %c1_29, %c0_30] : memref<1x18x18x32xf32, #tpu.memory_space<vmem>>, vector<1x16x16x32xf32>
    tpu.vector_store %arg8[%c0_27, %c1_28, %c1_29, %c0_30], %82 {strides = array<i32>} : memref<1x18x18x32xf32, #tpu.memory_space<vmem>>, vector<1x16x16x32xf32>,
    %c0_31 = arith.constant 0 : index
    %c0_32 = arith.constant 0 : index
    %c0_33 = arith.constant 0 : index
    %c0_34 = arith.constant 0 : index
    %84 = vector.load %arg8[%c0_31, %c0_32, %c0_33, %c0_34] : memref<1x18x18x32xf32, #tpu.memory_space<vmem>>, vector<1x18x18x32xf32>
    %c0_35 = arith.constant 0 : index
    %c1_36 = arith.constant 1 : index
    %c0_37 = arith.constant 0 : index
    %c0_38 = arith.constant 0 : index
    %85 = vector.load %arg3[%c0_35, %c1_36, %c0_37, %c0_38] : memref<1x3x9x32xf32, #tpu.memory_space<vmem>>, vector<1x1x9x32xf32>
    %86 = vector.shape_cast %85 : vector<1x1x9x32xf32> to vector<9x32xf32>
    %87 = vector.shape_cast %86 : vector<9x32xf32> to vector<9x1x1x1x32xf32>
    %88 = vector.extract_strided_slice %84 {offsets = [0, 1, 1, 0], sizes = [1, 16, 16, 32], strides = [1, 1, 1, 1]} : vector<1x18x18x32xf32> to vector<1x16x16x32xf32>
    %89 = vector.extract_strided_slice %87 {offsets = [4, 0, 0, 0, 0], sizes = [1, 1, 1, 1, 32], strides = [1, 1, 1, 1, 1]} : vector<9x1x1x1x32xf32> to vector<1x1x1x1x32xf32>
    %90 = vector.shape_cast %89 : vector<1x1x1x1x32xf32> to vector<1x1x1x32xf32>
    %91 = vector.broadcast %90 : vector<1x1x1x32xf32> to vector<1x16x16x32xf32>
    %92 = arith.mulf %88, %91 : vector<1x16x16x32xf32>
    %93 = vector.extract_strided_slice %84 {offsets = [0, 0, 0, 0], sizes = [1, 16, 16, 32], strides = [1, 1, 1, 1]} : vector<1x18x18x32xf32> to vector<1x16x16x32xf32>
    %94 = vector.extract_strided_slice %87 {offsets = [0, 0, 0, 0, 0], sizes = [1, 1, 1, 1, 32], strides = [1, 1, 1, 1, 1]} : vector<9x1x1x1x32xf32> to vector<1x1x1x1x32xf32>
    %95 = vector.shape_cast %94 : vector<1x1x1x1x32xf32> to vector<1x1x1x32xf32>
    %96 = vector.broadcast %95 : vector<1x1x1x32xf32> to vector<1x16x16x32xf32>
    %97 = arith.mulf %93, %96 : vector<1x16x16x32xf32>
    %98 = arith.addf %92, %97 : vector<1x16x16x32xf32>
    %99 = vector.extract_strided_slice %84 {offsets = [0, 0, 1, 0], sizes = [1, 16, 16, 32], strides = [1, 1, 1, 1]} : vector<1x18x18x32xf32> to vector<1x16x16x32xf32>
    %100 = vector.extract_strided_slice %87 {offsets = [1, 0, 0, 0, 0], sizes = [1, 1, 1, 1, 32], strides = [1, 1, 1, 1, 1]} : vector<9x1x1x1x32xf32> to vector<1x1x1x1x32xf32>
    %101 = vector.shape_cast %100 : vector<1x1x1x1x32xf32> to vector<1x1x1x32xf32>
    %102 = vector.broadcast %101 : vector<1x1x1x32xf32> to vector<1x16x16x32xf32>
    %103 = arith.mulf %99, %102 : vector<1x16x16x32xf32>
    %104 = arith.addf %98, %103 : vector<1x16x16x32xf32>
    %105 = vector.extract_strided_slice %84 {offsets = [0, 0, 2, 0], sizes = [1, 16, 16, 32], strides = [1, 1, 1, 1]} : vector<1x18x18x32xf32> to vector<1x16x16x32xf32>
    %106 = vector.extract_strided_slice %87 {offsets = [2, 0, 0, 0, 0], sizes = [1, 1, 1, 1, 32], strides = [1, 1, 1, 1, 1]} : vector<9x1x1x1x32xf32> to vector<1x1x1x1x32xf32>
    %107 = vector.shape_cast %106 : vector<1x1x1x1x32xf32> to vector<1x1x1x32xf32>
    %108 = vector.broadcast %107 : vector<1x1x1x32xf32> to vector<1x16x16x32xf32>
    %109 = arith.mulf %105, %108 : vector<1x16x16x32xf32>
    %110 = arith.addf %104, %109 : vector<1x16x16x32xf32>
    %111 = vector.extract_strided_slice %84 {offsets = [0, 1, 0, 0], sizes = [1, 16, 16, 32], strides = [1, 1, 1, 1]} : vector<1x18x18x32xf32> to vector<1x16x16x32xf32>
    %112 = vector.extract_strided_slice %87 {offsets = [3, 0, 0, 0, 0], sizes = [1, 1, 1, 1, 32], strides = [1, 1, 1, 1, 1]} : vector<9x1x1x1x32xf32> to vector<1x1x1x1x32xf32>
    %113 = vector.shape_cast %112 : vector<1x1x1x1x32xf32> to vector<1x1x1x32xf32>
    %114 = vector.broadcast %113 : vector<1x1x1x32xf32> to vector<1x16x16x32xf32>
    %115 = arith.mulf %111, %114 : vector<1x16x16x32xf32>
    %116 = arith.addf %110, %115 : vector<1x16x16x32xf32>
    %117 = vector.extract_strided_slice %84 {offsets = [0, 1, 2, 0], sizes = [1, 16, 16, 32], strides = [1, 1, 1, 1]} : vector<1x18x18x32xf32> to vector<1x16x16x32xf32>
    %118 = vector.extract_strided_slice %87 {offsets = [5, 0, 0, 0, 0], sizes = [1, 1, 1, 1, 32], strides = [1, 1, 1, 1, 1]} : vector<9x1x1x1x32xf32> to vector<1x1x1x1x32xf32>
    %119 = vector.shape_cast %118 : vector<1x1x1x1x32xf32> to vector<1x1x1x32xf32>
    %120 = vector.broadcast %119 : vector<1x1x1x32xf32> to vector<1x16x16x32xf32>
    %121 = arith.mulf %117, %120 : vector<1x16x16x32xf32>
    %122 = arith.addf %116, %121 : vector<1x16x16x32xf32>
    %123 = vector.extract_strided_slice %84 {offsets = [0, 2, 0, 0], sizes = [1, 16, 16, 32], strides = [1, 1, 1, 1]} : vector<1x18x18x32xf32> to vector<1x16x16x32xf32>
    %124 = vector.extract_strided_slice %87 {offsets = [6, 0, 0, 0, 0], sizes = [1, 1, 1, 1, 32], strides = [1, 1, 1, 1, 1]} : vector<9x1x1x1x32xf32> to vector<1x1x1x1x32xf32>
    %125 = vector.shape_cast %124 : vector<1x1x1x1x32xf32> to vector<1x1x1x32xf32>
    %126 = vector.broadcast %125 : vector<1x1x1x32xf32> to vector<1x16x16x32xf32>
    %127 = arith.mulf %123, %126 : vector<1x16x16x32xf32>
    %128 = arith.addf %122, %127 : vector<1x16x16x32xf32>
    %129 = vector.extract_strided_slice %84 {offsets = [0, 2, 1, 0], sizes = [1, 16, 16, 32], strides = [1, 1, 1, 1]} : vector<1x18x18x32xf32> to vector<1x16x16x32xf32>
    %130 = vector.extract_strided_slice %87 {offsets = [7, 0, 0, 0, 0], sizes = [1, 1, 1, 1, 32], strides = [1, 1, 1, 1, 1]} : vector<9x1x1x1x32xf32> to vector<1x1x1x1x32xf32>
    %131 = vector.shape_cast %130 : vector<1x1x1x1x32xf32> to vector<1x1x1x32xf32>
    %132 = vector.broadcast %131 : vector<1x1x1x32xf32> to vector<1x16x16x32xf32>
    %133 = arith.mulf %129, %132 : vector<1x16x16x32xf32>
    %134 = arith.addf %128, %133 : vector<1x16x16x32xf32>
    %135 = vector.extract_strided_slice %84 {offsets = [0, 2, 2, 0], sizes = [1, 16, 16, 32], strides = [1, 1, 1, 1]} : vector<1x18x18x32xf32> to vector<1x16x16x32xf32>
    %136 = vector.extract_strided_slice %87 {offsets = [8, 0, 0, 0, 0], sizes = [1, 1, 1, 1, 32], strides = [1, 1, 1, 1, 1]} : vector<9x1x1x1x32xf32> to vector<1x1x1x1x32xf32>
    %137 = vector.shape_cast %136 : vector<1x1x1x1x32xf32> to vector<1x1x1x32xf32>
    %138 = vector.broadcast %137 : vector<1x1x1x32xf32> to vector<1x16x16x32xf32>
    %139 = arith.mulf %135, %138 : vector<1x16x16x32xf32>
    %140 = arith.addf %134, %139 : vector<1x16x16x32xf32>
    %c0_39 = arith.constant 0 : index
    %c1_40 = arith.constant 1 : index
    %c0_41 = arith.constant 0 : index
    %c0_42 = arith.constant 0 : index
    %141 = vector.load %arg4[%c0_39, %c1_40, %c0_41, %c0_42] : memref<1x3x32x32xf32, #tpu.memory_space<vmem>>, vector<1x1x32x32xf32>
    %142 = vector.shape_cast %141 : vector<1x1x32x32xf32> to vector<32x32xf32>
    %143 = arith.truncf %142 : vector<32x32xf32> to vector<32x32xbf16>
    %144 = vector.shape_cast %140 : vector<1x16x16x32xf32> to vector<256x32xf32>
    %145 = arith.truncf %144 : vector<256x32xf32> to vector<256x32xbf16>
    %cst_43 = arith.constant dense<0.000000e+00> : vector<256x32xf32>
    %146 = tpu.matmul %145, %143, %cst_43 {dimension_numbers = #tpu.dot_dimension_numbers<[1], [0], [0], [1], [0, 0, 1, 1], [], []>} : vector<256x32xbf16>, vector<32x32xbf16>, vector<256x32xf32> -> vector<256x32xf32>
    %c0_44 = arith.constant 0 : index
    %c1_45 = arith.constant 1 : index
    %c0_46 = arith.constant 0 : index
    %147 = vector.load %arg5[%c0_44, %c1_45, %c0_46] : memref<1x3x32xf32, #tpu.memory_space<vmem>>, vector<1x1x32xf32>
    %148 = vector.shape_cast %147 : vector<1x1x32xf32> to vector<32xf32>
    %149 = vector.shape_cast %148 : vector<32xf32> to vector<1x32xf32>
    %150 = vector.broadcast %149 : vector<1x32xf32> to vector<256x32xf32>
    %151 = arith.mulf %146, %150 : vector<256x32xf32>
    %c0_47 = arith.constant 0 : index
    %c1_48 = arith.constant 1 : index
    %c0_49 = arith.constant 0 : index
    %152 = vector.load %arg6[%c0_47, %c1_48, %c0_49] : memref<1x3x32xf32, #tpu.memory_space<vmem>>, vector<1x1x32xf32>
    %153 = vector.shape_cast %152 : vector<1x1x32xf32> to vector<32xf32>
    %154 = vector.shape_cast %153 : vector<32xf32> to vector<1x32xf32>
    %155 = vector.broadcast %154 : vector<1x32xf32> to vector<256x32xf32>
    %156 = arith.addf %151, %155 : vector<256x32xf32>
    %157 = vector.shape_cast %156 : vector<256x32xf32> to vector<1x16x16x32xf32>
    %cst_50 = arith.constant 0.000000e+00 : f32
    %158 = vector.broadcast %cst_50 : f32 to vector<1x16x16x32xf32>
    %159 = arith.maximumf %157, %158 : vector<1x16x16x32xf32>
    %c0_51 = arith.constant 0 : index
    %c1_52 = arith.constant 1 : index
    %c1_53 = arith.constant 1 : index
    %c0_54 = arith.constant 0 : index
    %160 = vector.load %arg8[%c0_51, %c1_52, %c1_53, %c0_54] : memref<1x18x18x32xf32, #tpu.memory_space<vmem>>, vector<1x16x16x32xf32>
    tpu.vector_store %arg8[%c0_51, %c1_52, %c1_53, %c0_54], %159 {strides = array<i32>} : memref<1x18x18x32xf32, #tpu.memory_space<vmem>>, vector<1x16x16x32xf32>,
    %c0_55 = arith.constant 0 : index
    %c0_56 = arith.constant 0 : index
    %c0_57 = arith.constant 0 : index
    %c0_58 = arith.constant 0 : index
    %161 = vector.load %arg8[%c0_55, %c0_56, %c0_57, %c0_58] : memref<1x18x18x32xf32, #tpu.memory_space<vmem>>, vector<1x18x18x32xf32>
    %c0_59 = arith.constant 0 : index
    %c2 = arith.constant 2 : index
    %c0_60 = arith.constant 0 : index
    %c0_61 = arith.constant 0 : index
    %162 = vector.load %arg3[%c0_59, %c2, %c0_60, %c0_61] : memref<1x3x9x32xf32, #tpu.memory_space<vmem>>, vector<1x1x9x32xf32>
    %163 = vector.shape_cast %162 : vector<1x1x9x32xf32> to vector<9x32xf32>
    %164 = vector.shape_cast %163 : vector<9x32xf32> to vector<9x1x1x1x32xf32>
    %165 = vector.extract_strided_slice %161 {offsets = [0, 1, 1, 0], sizes = [1, 16, 16, 32], strides = [1, 1, 1, 1]} : vector<1x18x18x32xf32> to vector<1x16x16x32xf32>
    %166 = vector.extract_strided_slice %164 {offsets = [4, 0, 0, 0, 0], sizes = [1, 1, 1, 1, 32], strides = [1, 1, 1, 1, 1]} : vector<9x1x1x1x32xf32> to vector<1x1x1x1x32xf32>
    %167 = vector.shape_cast %166 : vector<1x1x1x1x32xf32> to vector<1x1x1x32xf32>
    %168 = vector.broadcast %167 : vector<1x1x1x32xf32> to vector<1x16x16x32xf32>
    %169 = arith.mulf %165, %168 : vector<1x16x16x32xf32>
    %170 = vector.extract_strided_slice %161 {offsets = [0, 0, 0, 0], sizes = [1, 16, 16, 32], strides = [1, 1, 1, 1]} : vector<1x18x18x32xf32> to vector<1x16x16x32xf32>
    %171 = vector.extract_strided_slice %164 {offsets = [0, 0, 0, 0, 0], sizes = [1, 1, 1, 1, 32], strides = [1, 1, 1, 1, 1]} : vector<9x1x1x1x32xf32> to vector<1x1x1x1x32xf32>
    %172 = vector.shape_cast %171 : vector<1x1x1x1x32xf32> to vector<1x1x1x32xf32>
    %173 = vector.broadcast %172 : vector<1x1x1x32xf32> to vector<1x16x16x32xf32>
    %174 = arith.mulf %170, %173 : vector<1x16x16x32xf32>
    %175 = arith.addf %169, %174 : vector<1x16x16x32xf32>
    %176 = vector.extract_strided_slice %161 {offsets = [0, 0, 1, 0], sizes = [1, 16, 16, 32], strides = [1, 1, 1, 1]} : vector<1x18x18x32xf32> to vector<1x16x16x32xf32>
    %177 = vector.extract_strided_slice %164 {offsets = [1, 0, 0, 0, 0], sizes = [1, 1, 1, 1, 32], strides = [1, 1, 1, 1, 1]} : vector<9x1x1x1x32xf32> to vector<1x1x1x1x32xf32>
    %178 = vector.shape_cast %177 : vector<1x1x1x1x32xf32> to vector<1x1x1x32xf32>
    %179 = vector.broadcast %178 : vector<1x1x1x32xf32> to vector<1x16x16x32xf32>
    %180 = arith.mulf %176, %179 : vector<1x16x16x32xf32>
    %181 = arith.addf %175, %180 : vector<1x16x16x32xf32>
    %182 = vector.extract_strided_slice %161 {offsets = [0, 0, 2, 0], sizes = [1, 16, 16, 32], strides = [1, 1, 1, 1]} : vector<1x18x18x32xf32> to vector<1x16x16x32xf32>
    %183 = vector.extract_strided_slice %164 {offsets = [2, 0, 0, 0, 0], sizes = [1, 1, 1, 1, 32], strides = [1, 1, 1, 1, 1]} : vector<9x1x1x1x32xf32> to vector<1x1x1x1x32xf32>
    %184 = vector.shape_cast %183 : vector<1x1x1x1x32xf32> to vector<1x1x1x32xf32>
    %185 = vector.broadcast %184 : vector<1x1x1x32xf32> to vector<1x16x16x32xf32>
    %186 = arith.mulf %182, %185 : vector<1x16x16x32xf32>
    %187 = arith.addf %181, %186 : vector<1x16x16x32xf32>
    %188 = vector.extract_strided_slice %161 {offsets = [0, 1, 0, 0], sizes = [1, 16, 16, 32], strides = [1, 1, 1, 1]} : vector<1x18x18x32xf32> to vector<1x16x16x32xf32>
    %189 = vector.extract_strided_slice %164 {offsets = [3, 0, 0, 0, 0], sizes = [1, 1, 1, 1, 32], strides = [1, 1, 1, 1, 1]} : vector<9x1x1x1x32xf32> to vector<1x1x1x1x32xf32>
    %190 = vector.shape_cast %189 : vector<1x1x1x1x32xf32> to vector<1x1x1x32xf32>
    %191 = vector.broadcast %190 : vector<1x1x1x32xf32> to vector<1x16x16x32xf32>
    %192 = arith.mulf %188, %191 : vector<1x16x16x32xf32>
    %193 = arith.addf %187, %192 : vector<1x16x16x32xf32>
    %194 = vector.extract_strided_slice %161 {offsets = [0, 1, 2, 0], sizes = [1, 16, 16, 32], strides = [1, 1, 1, 1]} : vector<1x18x18x32xf32> to vector<1x16x16x32xf32>
    %195 = vector.extract_strided_slice %164 {offsets = [5, 0, 0, 0, 0], sizes = [1, 1, 1, 1, 32], strides = [1, 1, 1, 1, 1]} : vector<9x1x1x1x32xf32> to vector<1x1x1x1x32xf32>
    %196 = vector.shape_cast %195 : vector<1x1x1x1x32xf32> to vector<1x1x1x32xf32>
    %197 = vector.broadcast %196 : vector<1x1x1x32xf32> to vector<1x16x16x32xf32>
    %198 = arith.mulf %194, %197 : vector<1x16x16x32xf32>
    %199 = arith.addf %193, %198 : vector<1x16x16x32xf32>
    %200 = vector.extract_strided_slice %161 {offsets = [0, 2, 0, 0], sizes = [1, 16, 16, 32], strides = [1, 1, 1, 1]} : vector<1x18x18x32xf32> to vector<1x16x16x32xf32>
    %201 = vector.extract_strided_slice %164 {offsets = [6, 0, 0, 0, 0], sizes = [1, 1, 1, 1, 32], strides = [1, 1, 1, 1, 1]} : vector<9x1x1x1x32xf32> to vector<1x1x1x1x32xf32>
    %202 = vector.shape_cast %201 : vector<1x1x1x1x32xf32> to vector<1x1x1x32xf32>
    %203 = vector.broadcast %202 : vector<1x1x1x32xf32> to vector<1x16x16x32xf32>
    %204 = arith.mulf %200, %203 : vector<1x16x16x32xf32>
    %205 = arith.addf %199, %204 : vector<1x16x16x32xf32>
    %206 = vector.extract_strided_slice %161 {offsets = [0, 2, 1, 0], sizes = [1, 16, 16, 32], strides = [1, 1, 1, 1]} : vector<1x18x18x32xf32> to vector<1x16x16x32xf32>
    %207 = vector.extract_strided_slice %164 {offsets = [7, 0, 0, 0, 0], sizes = [1, 1, 1, 1, 32], strides = [1, 1, 1, 1, 1]} : vector<9x1x1x1x32xf32> to vector<1x1x1x1x32xf32>
    %208 = vector.shape_cast %207 : vector<1x1x1x1x32xf32> to vector<1x1x1x32xf32>
    %209 = vector.broadcast %208 : vector<1x1x1x32xf32> to vector<1x16x16x32xf32>
    %210 = arith.mulf %206, %209 : vector<1x16x16x32xf32>
    %211 = arith.addf %205, %210 : vector<1x16x16x32xf32>
    %212 = vector.extract_strided_slice %161 {offsets = [0, 2, 2, 0], sizes = [1, 16, 16, 32], strides = [1, 1, 1, 1]} : vector<1x18x18x32xf32> to vector<1x16x16x32xf32>
    %213 = vector.extract_strided_slice %164 {offsets = [8, 0, 0, 0, 0], sizes = [1, 1, 1, 1, 32], strides = [1, 1, 1, 1, 1]} : vector<9x1x1x1x32xf32> to vector<1x1x1x1x32xf32>
    %214 = vector.shape_cast %213 : vector<1x1x1x1x32xf32> to vector<1x1x1x32xf32>
    %215 = vector.broadcast %214 : vector<1x1x1x32xf32> to vector<1x16x16x32xf32>
    %216 = arith.mulf %212, %215 : vector<1x16x16x32xf32>
    %217 = arith.addf %211, %216 : vector<1x16x16x32xf32>
    %c0_62 = arith.constant 0 : index
    %c2_63 = arith.constant 2 : index
    %c0_64 = arith.constant 0 : index
    %c0_65 = arith.constant 0 : index
    %218 = vector.load %arg4[%c0_62, %c2_63, %c0_64, %c0_65] : memref<1x3x32x32xf32, #tpu.memory_space<vmem>>, vector<1x1x32x32xf32>
    %219 = vector.shape_cast %218 : vector<1x1x32x32xf32> to vector<32x32xf32>
    %220 = arith.truncf %219 : vector<32x32xf32> to vector<32x32xbf16>
    %221 = vector.shape_cast %217 : vector<1x16x16x32xf32> to vector<256x32xf32>
    %222 = arith.truncf %221 : vector<256x32xf32> to vector<256x32xbf16>
    %cst_66 = arith.constant dense<0.000000e+00> : vector<256x32xf32>
    %223 = tpu.matmul %222, %220, %cst_66 {dimension_numbers = #tpu.dot_dimension_numbers<[1], [0], [0], [1], [0, 0, 1, 1], [], []>} : vector<256x32xbf16>, vector<32x32xbf16>, vector<256x32xf32> -> vector<256x32xf32>
    %c0_67 = arith.constant 0 : index
    %c2_68 = arith.constant 2 : index
    %c0_69 = arith.constant 0 : index
    %224 = vector.load %arg5[%c0_67, %c2_68, %c0_69] : memref<1x3x32xf32, #tpu.memory_space<vmem>>, vector<1x1x32xf32>
    %225 = vector.shape_cast %224 : vector<1x1x32xf32> to vector<32xf32>
    %226 = vector.shape_cast %225 : vector<32xf32> to vector<1x32xf32>
    %227 = vector.broadcast %226 : vector<1x32xf32> to vector<256x32xf32>
    %228 = arith.mulf %223, %227 : vector<256x32xf32>
    %c0_70 = arith.constant 0 : index
    %c2_71 = arith.constant 2 : index
    %c0_72 = arith.constant 0 : index
    %229 = vector.load %arg6[%c0_70, %c2_71, %c0_72] : memref<1x3x32xf32, #tpu.memory_space<vmem>>, vector<1x1x32xf32>
    %230 = vector.shape_cast %229 : vector<1x1x32xf32> to vector<32xf32>
    %231 = vector.shape_cast %230 : vector<32xf32> to vector<1x32xf32>
    %232 = vector.broadcast %231 : vector<1x32xf32> to vector<256x32xf32>
    %233 = arith.addf %228, %232 : vector<256x32xf32>
    %234 = vector.shape_cast %233 : vector<256x32xf32> to vector<1x16x16x32xf32>
    %235 = arith.addf %3, %234 : vector<1x16x16x32xf32>
    %c0_73 = arith.constant 0 : index
    %c0_74 = arith.constant 0 : index
    %c0_75 = arith.constant 0 : index
    %c0_76 = arith.constant 0 : index
    %236 = vector.load %arg7[%c0_73, %c0_74, %c0_75, %c0_76] : memref<1x16x16x32xf32, #tpu.memory_space<vmem>>, vector<1x16x16x32xf32>
    tpu.vector_store %arg7[%c0_73, %c0_74, %c0_75, %c0_76], %235 {strides = array<i32>} : memref<1x16x16x32xf32, #tpu.memory_space<vmem>>, vector<1x16x16x32xf32>,
    return
  }
  func.func @transform_0(%arg0: i32, %arg1: i32) -> (i32, i32, i32, i32) {
    %c0_i32 = arith.constant 0 : i32
    %c0_i32_0 = arith.constant 0 : i32
    %c0_i32_1 = arith.constant 0 : i32
    %c0_i32_2 = arith.constant 0 : i32
    return %arg0, %c0_i32, %c0_i32_0, %c0_i32_1 : i32, i32, i32, i32
  }
  func.func @transform_1(%arg0: i32, %arg1: i32) -> (i32, i32, i32, i32) {
    %c0_i32 = arith.constant 0 : i32
    %c0_i32_0 = arith.constant 0 : i32
    %c0_i32_1 = arith.constant 0 : i32
    %c0_i32_2 = arith.constant 0 : i32
    return %arg1, %c0_i32, %c0_i32_0, %c0_i32_1 : i32, i32, i32, i32
  }
  func.func @transform_2(%arg0: i32, %arg1: i32) -> (i32, i32, i32, i32) {
    %c0_i32 = arith.constant 0 : i32
    %c0_i32_0 = arith.constant 0 : i32
    %c0_i32_1 = arith.constant 0 : i32
    %c0_i32_2 = arith.constant 0 : i32
    return %arg1, %c0_i32, %c0_i32_0, %c0_i32_1 : i32, i32, i32, i32
  }
  func.func @transform_3(%arg0: i32, %arg1: i32) -> (i32, i32, i32) {
    %c0_i32 = arith.constant 0 : i32
    %c0_i32_0 = arith.constant 0 : i32
    %c0_i32_1 = arith.constant 0 : i32
    return %arg1, %c0_i32, %c0_i32_0 : i32, i32, i32
  }
  func.func @transform_4(%arg0: i32, %arg1: i32) -> (i32, i32, i32) {
    %c0_i32 = arith.constant 0 : i32
    %c0_i32_0 = arith.constant 0 : i32
    %c0_i32_1 = arith.constant 0 : i32
    return %arg1, %c0_i32, %c0_i32_0 : i32, i32, i32
  }
  func.func @transform_5(%arg0: i32, %arg1: i32) -> (i32, i32, i32, i32) {
    %c0_i32 = arith.constant 0 : i32
    %c0_i32_0 = arith.constant 0 : i32
    %c0_i32_1 = arith.constant 0 : i32
    %c0_i32_2 = arith.constant 0 : i32
    return %arg0, %c0_i32, %c0_i32_0, %c0_i32_1 : i32, i32, i32, i32
  }
}

</mosaic_0001>

<llo_original>
// kernel: middle_flow.1
$region0: #{middle_flow.1}
  #allocation0 [shape = 'u32[]', space=smem, size = 0x4, offset = 0x4, fixed_abs, tag = 'smem constant byte address 0x4 - core index']
  #allocation1 [shape = 'u32[144,128]{1,0:T(1,128)}', space=vmem, size = 0x12000, scoped, tag = 'internal scratch']
  #allocation2 [shape = 'f32[1,18,18,32]{3,2,1,0:T(8,128)}', space=vmem, size = 0x36000, scoped, tag = 'scratch operand']
  %s0 = inlined_call_operand.vmem [shape: f32[2,16,16,32], index: 0, kind: input, shape index: {}]
  %s1 = inlined_call_operand.vmem [shape: f32[8,3,9,32], index: 1, kind: input, shape index: {}]
  %s2 = inlined_call_operand.hbm [shape: f32[8,3,32,32], index: 2, kind: input, shape index: {}]
  %s3 = inlined_call_operand.vmem [shape: f32[8,3,32], index: 3, kind: input, shape index: {}]
  %s4 = inlined_call_operand.vmem [shape: f32[8,3,32], index: 4, kind: input, shape index: {}]
  %s5 = inlined_call_operand.hbm [shape: f32[2,16,16,32], index: 5, kind: output, shape index: {}]
  %s6 = sld [smem:[#allocation0]]
  $region61: #{middle_flow.1} parent=0
    _
  %s8 = ssub.s32 1, %s6
  %s9 = scalar_select 0, %s8, %s6
  $region1: #{middle_flow.1} parent=0
    #allocation3 [shape = 'u8[98304]{0}', space=vmem, size = 0x18000, scoped, tag = 'input window, operand 2']
    #allocation4 [shape = 's32[2]{0}', space=sflag, size = 0x8, scoped, tag = 'scoped memory for middle_flow.1']
    #allocation5 [shape = 's32[2]{0}', space=sflag, size = 0x8, scoped, tag = 'scoped memory for middle_flow.1']
    #allocation6 [shape = 'u8[262144]{0}', space=vmem, size = 0x40000, scoped, tag = 'output window, operand 0']
    %10 = vsyncpa [#allocation4], 0
    %s11 = scalar_lea.sflag [#allocation4], 1
    %12 = vsyncpa %s11, 0
    %13 = vsyncpa [#allocation5], 0
    %s14 = scalar_lea.sflag [#allocation5], 1
    %15 = vsyncpa %s14, 0
    loop: start=0, step=1, limit=18
    $region2: #{middle_flow.1} parent=1 // loop_pre_header
      _
    $region3: #{middle_flow.1} parent=1 // loop_header
      %s17 = sphi 0, %s21
      %p18 = scmp.ge.s32.totalorder %s17, 18
      %s24 = sphi 0, %s36
      %s25 = sphi 0, %s32
      %s26 = sphi 0, %s24
      %s27 = sphi 0, %s25
      %s28 = sphi 0, %s26
      %s29 = sphi 0, %s27
      %s39 = sphi 0, %s41
      %s42 = sphi 0, %s39
      %s43 = sphi 0, %s42
      %s59 = sphi 0, %s43
      %s65 = sphi 0, %s67
      %s68 = sphi 0, %s65
      %s69 = sphi 0, %s68
      %s85 = sphi 0, %s69
      %s91 = sphi 0, %s93
      %s94 = sphi 0, %s91
      %s95 = sphi 0, %s94
      %s111 = sphi 0, %s95
      %s117 = sphi 0, %s119
      %s120 = sphi 0, %s117
      %s121 = sphi 0, %s120
      %s137 = sphi 0, %s121
      %s143 = sphi 0, %s145
      %s146 = sphi 0, %s143
      %s147 = sphi 0, %s146
      %s163 = sphi 0, %s147
      %s169 = sphi 0, %s171
      %s172 = sphi 0, %s169
      %s173 = sphi 0, %s172
      %s189 = sphi 0, %s173
    $region4: #{middle_flow.1} parent=1 // loop_header_branch
      %20 = sbr.rel (%p18) target = $region8
    $region5: #{middle_flow.1} parent=1 // loop_body
      %s22 = ssub.s32 %s17, 1
      %s23 = ssub.s32 %s17, 2
      %s30 = sadd.s32 1, %s25
      %p31 = scmp.ge.s32.totalorder %s30, 8
      %s32 = scalar_select %p31, 0, %s30
      %s33 = sadd.s32 1, %s24
      %s34 = scalar_select %p31, %s33, %s24
      %p35 = scmp.ge.s32.totalorder %s34, 2
      %s36 = scalar_select %p35, 0, %s34
      %s37 = ssub.s32 %s24, %s36
      %p38 = scmp.eq.s32.totalorder %s37, 0
      %s40 = sadd.s32 %s39, 1
      %s41 = scalar_select %p38, %s39, %s40
      %p44 = pneg %p38
      %p45 = scmp.eq.s32.totalorder %s17, 15
      %p46 = por %p44, %p45
      %p47 = scmp.ne.s32.totalorder %s39, %s42
      %p48 = scmp.eq.s32.totalorder %s17, 0
      %p49 = por %p47, %p48
      %p50 = scmp.ne.s32.totalorder %s39, %s42
      %p51 = scmp.eq.s32.totalorder %s22, 15
      %p52 = por %p50, %p51
      %p53 = scmp.ne.s32.totalorder %s42, %s43
      %p54 = scmp.eq.s32.totalorder %s22, 0
      %p55 = por %p53, %p54
      %p56 = scmp.ne.s32.totalorder %s42, %s43
      %p57 = scmp.eq.s32.totalorder %s23, 15
      %p58 = por %p56, %p57
      %p60 = scmp.ne.s32.totalorder %s43, %s59
      %p61 = scmp.eq.s32.totalorder %s23, 0
      %p62 = por %p60, %p61
      %s63 = ssub.s32 %s25, %s32
      %p64 = scmp.eq.s32.totalorder %s63, 0
      %s66 = sadd.s32 %s65, 1
      %s67 = scalar_select %p64, %s65, %s66
      %p70 = pneg %p64
      %p71 = scmp.eq.s32.totalorder %s17, 15
      %p72 = por %p70, %p71
      %p73 = scmp.ne.s32.totalorder %s65, %s68
      %p74 = scmp.eq.s32.totalorder %s17, 0
      %p75 = por %p73, %p74
      %p76 = scmp.ne.s32.totalorder %s65, %s68
      %p77 = scmp.eq.s32.totalorder %s22, 15
      %p78 = por %p76, %p77
      %p79 = scmp.ne.s32.totalorder %s68, %s69
      %p80 = scmp.eq.s32.totalorder %s22, 0
      %p81 = por %p79, %p80
      %p82 = scmp.ne.s32.totalorder %s68, %s69
      %p83 = scmp.eq.s32.totalorder %s23, 15
      %p84 = por %p82, %p83
      %p86 = scmp.ne.s32.totalorder %s69, %s85
      %p87 = scmp.eq.s32.totalorder %s23, 0
      %p88 = por %p86, %p87
      %s89 = ssub.s32 %s25, %s32
      %p90 = scmp.eq.s32.totalorder %s89, 0
      %s92 = sadd.s32 %s91, 1
      %s93 = scalar_select %p90, %s91, %s92
      %p96 = pneg %p90
      %p97 = scmp.eq.s32.totalorder %s17, 15
      %p98 = por %p96, %p97
      %p99 = scmp.ne.s32.totalorder %s91, %s94
      %p100 = scmp.eq.s32.totalorder %s17, 0
      %p101 = por %p99, %p100
      %p102 = scmp.ne.s32.totalorder %s91, %s94
      %p103 = scmp.eq.s32.totalorder %s22, 15
      %p104 = por %p102, %p103
      %p105 = scmp.ne.s32.totalorder %s94, %s95
      %p106 = scmp.eq.s32.totalorder %s22, 0
      %p107 = por %p105, %p106
      %p108 = scmp.ne.s32.totalorder %s94, %s95
      %p109 = scmp.eq.s32.totalorder %s23, 15
      %p110 = por %p108, %p109
      %p112 = scmp.ne.s32.totalorder %s95, %s111
      %p113 = scmp.eq.s32.totalorder %s23, 0
      %p114 = por %p112, %p113
      %s115 = ssub.s32 %s25, %s32
      %p116 = scmp.eq.s32.totalorder %s115, 0
      %s118 = sadd.s32 %s117, 1
      %s119 = scalar_select %p116, %s117, %s118
      %p122 = pneg %p116
      %p123 = scmp.eq.s32.totalorder %s17, 15
      %p124 = por %p122, %p123
      %p125 = scmp.ne.s32.totalorder %s117, %s120
      %p126 = scmp.eq.s32.totalorder %s17, 0
      %p127 = por %p125, %p126
      %p128 = scmp.ne.s32.totalorder %s117, %s120
      %p129 = scmp.eq.s32.totalorder %s22, 15
      %p130 = por %p128, %p129
      %p131 = scmp.ne.s32.totalorder %s120, %s121
      %p132 = scmp.eq.s32.totalorder %s22, 0
      %p133 = por %p131, %p132
      %p134 = scmp.ne.s32.totalorder %s120, %s121
      %p135 = scmp.eq.s32.totalorder %s23, 15
      %p136 = por %p134, %p135
      %p138 = scmp.ne.s32.totalorder %s121, %s137
      %p139 = scmp.eq.s32.totalorder %s23, 0
      %p140 = por %p138, %p139
      %s141 = ssub.s32 %s25, %s32
      %p142 = scmp.eq.s32.totalorder %s141, 0
      %s144 = sadd.s32 %s143, 1
      %s145 = scalar_select %p142, %s143, %s144
      %p148 = pneg %p142
      %p149 = scmp.eq.s32.totalorder %s17, 15
      %p150 = por %p148, %p149
      %p151 = scmp.ne.s32.totalorder %s143, %s146
      %p152 = scmp.eq.s32.totalorder %s17, 0
      %p153 = por %p151, %p152
      %p154 = scmp.ne.s32.totalorder %s143, %s146
      %p155 = scmp.eq.s32.totalorder %s22, 15
      %p156 = por %p154, %p155
      %p157 = scmp.ne.s32.totalorder %s146, %s147
      %p158 = scmp.eq.s32.totalorder %s22, 0
      %p159 = por %p157, %p158
      %p160 = scmp.ne.s32.totalorder %s146, %s147
      %p161 = scmp.eq.s32.totalorder %s23, 15
      %p162 = por %p160, %p161
      %p164 = scmp.ne.s32.totalorder %s147, %s163
      %p165 = scmp.eq.s32.totalorder %s23, 0
      %p166 = por %p164, %p165
      %s167 = ssub.s32 %s24, %s36
      %p168 = scmp.eq.s32.totalorder %s167, 0
      %s170 = sadd.s32 %s169, 1
      %s171 = scalar_select %p168, %s169, %s170
      %p174 = pneg %p168
      %p175 = scmp.eq.s32.totalorder %s17, 15
      %p176 = por %p174, %p175
      %p177 = scmp.ne.s32.totalorder %s169, %s172
      %p178 = scmp.eq.s32.totalorder %s17, 0
      %p179 = por %p177, %p178
      %p180 = scmp.ne.s32.totalorder %s169, %s172
      %p181 = scmp.eq.s32.totalorder %s22, 15
      %p182 = por %p180, %p181
      %p183 = scmp.ne.s32.totalorder %s172, %s173
      %p184 = scmp.eq.s32.totalorder %s22, 0
      %p185 = por %p183, %p184
      %p186 = scmp.ne.s32.totalorder %s172, %s173
      %p187 = scmp.eq.s32.totalorder %s23, 15
      %p188 = por %p186, %p187
      %p190 = scmp.ne.s32.totalorder %s173, %s189
      %p191 = scmp.eq.s32.totalorder %s23, 0
      %p192 = por %p190, %p191
      %p193 = scmp.le.s32.totalorder 1, %s17
      %p194 = scmp.lt.s32.totalorder %s17, 17
      %p195 = pnand %p193, %p194
      %p196 = pneg %p195
      // Predicated region
      $region9: #{middle_flow.1} parent=5 // pred_check
        _
      $region10: #{middle_flow.1} parent=5 // pred_check_branch
        %198 = sbr.rel (%p195) target = $region12
      $region11: #{middle_flow.1} parent=5 // pred_region
        %s199 = ssub.s32 %s17, 1
      $region12: #{middle_flow.1} parent=5 // pred_fallthru
        _
      %p200 = scmp.lt.s32.totalorder %s17, 16
      // Predicated region
      $region13: #{middle_flow.1} parent=5 // pred_check
        %p201 = pneg %p200
      $region14: #{middle_flow.1} parent=5 // pred_check_branch
        %203 = sbr.rel (%p201) target = $region16
      $region15: #{middle_flow.1} parent=5 // pred_region
        // Predicated region
        $region17: #{middle_flow.1} parent=15 // pred_check
          %p204 = pneg %p49
        $region18: #{middle_flow.1} parent=15 // pred_check_branch
          %206 = sbr.rel (%p204) target = $region20
        $region19: #{middle_flow.1} parent=15 // pred_region
          %p207 = scmp.lt.s32.totalorder %s24, 1
          %s208 = scalar_select %p207, %s24, 1
          %s209 = smul.addr %s208, 32
          %s210 = smul.addr %s209, 8
          %s211 = scalar_lea.vmem %s0, %s210
        $region20: #{middle_flow.1} parent=15 // pred_fallthru
          _
        // Predicated region
        $region21: #{middle_flow.1} parent=15 // pred_check
          %p212 = pneg %p75
        $region22: #{middle_flow.1} parent=15 // pred_check_branch
          %214 = sbr.rel (%p212) target = $region24
        $region23: #{middle_flow.1} parent=15 // pred_region
          %p215 = scmp.lt.s32.totalorder %s25, 7
          %s216 = scalar_select %p215, %s25, 7
          %s217 = smul.addr %s216, 6
          %s218 = smul.addr %s217, 8
          %s219 = scalar_lea.vmem %s1, %s218
        $region24: #{middle_flow.1} parent=15 // pred_fallthru
          _
        // Predicated region
        $region25: #{middle_flow.1} parent=15 // pred_check
          %p220 = pneg %p101
        $region26: #{middle_flow.1} parent=15 // pred_check_branch
          %222 = sbr.rel (%p220) target = $region28
        $region27: #{middle_flow.1} parent=15 // pred_region
          %s223 = sand.u32 %s91, 1
          %s224 = scalar_lea.sflag [#allocation4], %s223
          %s225 = sand.u32 %s91, 1
          %s226 = smul.addr %s225, 96
          %s227 = scalar_lea.vmem [#allocation3], %s226
          %s229 = ssub.s32 1536, 1536
          %230 = vsyncadd %s224, %s229
          %s231 = smul.addr %s25, 12
          %s232 = smul.addr %s231, 128
          %s233 = scalar_lea.hbm %s2, %s232
          %s234 = sshll.u32 %s227, 4
          %s235 = int_to_ptr.vmem [resolvable:$true] %s234
          %240 = dma.hbm_to_vmem [thread:$0]  %s233, 1536, %s235, %s224, 128, 128, 8
        $region28: #{middle_flow.1} parent=15 // pred_fallthru
          _
        // Predicated region
        $region29: #{middle_flow.1} parent=15 // pred_check
          %p241 = pneg %p127
        $region30: #{middle_flow.1} parent=15 // pred_check_branch
          %243 = sbr.rel (%p241) target = $region32
        $region31: #{middle_flow.1} parent=15 // pred_region
          %p244 = scmp.lt.s32.totalorder %s25, 7
          %s245 = scalar_select %p244, %s25, 7
          %s246 = smul.addr %s245, 4
          %s247 = scalar_lea.vmem %s3, %s246
        $region32: #{middle_flow.1} parent=15 // pred_fallthru
          _
        // Predicated region
        $region33: #{middle_flow.1} parent=15 // pred_check
          %p248 = pneg %p153
        $region34: #{middle_flow.1} parent=15 // pred_check_branch
          %250 = sbr.rel (%p248) target = $region36
        $region35: #{middle_flow.1} parent=15 // pred_region
          %p251 = scmp.lt.s32.totalorder %s25, 7
          %s252 = scalar_select %p251, %s25, 7
          %s253 = smul.addr %s252, 4
          %s254 = scalar_lea.vmem %s4, %s253
        $region36: #{middle_flow.1} parent=15 // pred_fallthru
          _
      $region16: #{middle_flow.1} parent=5 // pred_fallthru
        _
      %p255 = scmp.le.s32.totalorder 1, %s17
      %p256 = scmp.lt.s32.totalorder %s17, 17
      %p257 = pnand %p255, %p256
      %p258 = pneg %p257
      // Predicated region
      $region37: #{middle_flow.1} parent=5 // pred_check
        _
      $region38: #{middle_flow.1} parent=5 // pred_check_branch
        %260 = sbr.rel (%p257) target = $region40
      $region39: #{middle_flow.1} parent=5 // pred_region
        %s261 = ssub.s32 %s17, 1
        %s262 = sand.u32 %s94, 1
        %s263 = scalar_lea.sflag [#allocation4], %s262
        %s264 = sand.u32 %s94, 1
        %s265 = smul.addr %s264, 96
        %s266 = scalar_lea.vmem [#allocation3], %s265
        // Predicated region
        $region41: #{middle_flow.1} parent=39 // pred_check
          %p267 = pneg %p107
        $region42: #{middle_flow.1} parent=39 // pred_check_branch
          %269 = sbr.rel (%p267) target = $region44
        $region43: #{middle_flow.1} parent=39 // pred_region
          %270 = dma.done %s263, 1536
        $region44: #{middle_flow.1} parent=39 // pred_fallthru
          _
        %p271 = scmp.lt.s32.totalorder %s26, 1
        %s272 = scalar_select %p271, %s26, 1
        %s273 = smul.addr %s272, 32
        %s274 = smul.addr %s273, 8
        %s275 = scalar_lea.vmem %s0, %s274
        %p276 = pneg %p55
        %p277 = pneg %p52
        %p278 = scmp.lt.s32.totalorder %s27, 7
        %s279 = scalar_select %p278, %s27, 7
        %s280 = smul.addr %s279, 6
        %s281 = smul.addr %s280, 8
        %s282 = scalar_lea.vmem %s1, %s281
        %p283 = pneg %p81
        %p284 = pneg %p78
        %s285 = sand.u32 %s94, 1
        %s286 = scalar_lea.sflag [#allocation4], %s285
        %s287 = sand.u32 %s94, 1
        %s288 = smul.addr %s287, 96
        %s289 = scalar_lea.vmem [#allocation3], %s288
        %p290 = pneg %p107
        %p291 = pneg %p104
        %p292 = scmp.lt.s32.totalorder %s27, 7
        %s293 = scalar_select %p292, %s27, 7
        %s294 = smul.addr %s293, 4
        %s295 = scalar_lea.vmem %s3, %s294
        %p296 = pneg %p133
        %p297 = pneg %p130
        %p298 = scmp.lt.s32.totalorder %s27, 7
        %s299 = scalar_select %p298, %s27, 7
        %s300 = smul.addr %s299, 4
        %s301 = scalar_lea.vmem %s4, %s300
        %p302 = pneg %p159
        %p303 = pneg %p156
        %p304 = pneg %p185
        %p305 = pneg %p182
        %s306 = sand.u32 %s172, 1
        %s307 = scalar_lea.sflag [#allocation5], %s306
        %s308 = sand.u32 %s172, 1
        %s309 = smul.addr %s308, 256
        %s310 = scalar_lea.vmem [#allocation6], %s309
        %p311 = scmp.lt.s32.totalorder %s26, 1
        %s312 = scalar_select %p311, %s26, 1
        %s313 = smul.addr %s312, 32
        %s314 = smul.addr %s313, 8
        %s315 = scalar_lea.vmem %s0, %s314
        %p316 = scmp.lt.s32.totalorder %s27, 7
        %s317 = scalar_select %p316, %s27, 7
        %s318 = smul.addr %s317, 6
        %s319 = smul.addr %s318, 8
        %s320 = scalar_lea.vmem %s1, %s319
        %p321 = scmp.lt.s32.totalorder %s27, 7
        %s322 = scalar_select %p321, %s27, 7
        %s323 = smul.addr %s322, 4
        %s324 = scalar_lea.vmem %s3, %s323
        %p325 = scmp.lt.s32.totalorder %s27, 7
        %s326 = scalar_select %p325, %s27, 7
        %s327 = smul.addr %s326, 4
        %s328 = scalar_lea.vmem %s4, %s327
        %p330 = scmp.eq.s32.totalorder %s27, 0
        // Predicated region
        $region45: #{middle_flow.1} parent=39 // pred_check
          %p331 = pneg %p330
        $region46: #{middle_flow.1} parent=39 // pred_check_branch
          %333 = sbr.rel (%p331) target = $region48
        $region47: #{middle_flow.1} parent=39 // pred_region
          %v334 = vld [vmem:[%s315] sm:$0xff]
          %v335 = vld [vmem:[%s315 + $0x8] sm:$0xff]
          %v336 = vld [vmem:[%s315 + $0x10] sm:$0xff]
          %v337 = vld [vmem:[%s315 + $0x18] sm:$0xff]
          %v338 = vld [vmem:[%s315 + $0x20] sm:$0xff]
          %v339 = vld [vmem:[%s315 + $0x28] sm:$0xff]
          %v340 = vld [vmem:[%s315 + $0x30] sm:$0xff]
          %v341 = vld [vmem:[%s315 + $0x38] sm:$0xff]
          %v342 = vld [vmem:[%s315 + $0x40] sm:$0xff]
          %v343 = vld [vmem:[%s315 + $0x48] sm:$0xff]
          %v344 = vld [vmem:[%s315 + $0x50] sm:$0xff]
          %v345 = vld [vmem:[%s315 + $0x58] sm:$0xff]
          %v346 = vld [vmem:[%s315 + $0x60] sm:$0xff]
          %v347 = vld [vmem:[%s315 + $0x68] sm:$0xff]
          %v348 = vld [vmem:[%s315 + $0x70] sm:$0xff]
          %v349 = vld [vmem:[%s315 + $0x78] sm:$0xff]
          %v350 = vld [vmem:[%s315 + $0x80] sm:$0xff]
          %v351 = vld [vmem:[%s315 + $0x88] sm:$0xff]
          %v352 = vld [vmem:[%s315 + $0x90] sm:$0xff]
          %v353 = vld [vmem:[%s315 + $0x98] sm:$0xff]
          %v354 = vld [vmem:[%s315 + $0xa0] sm:$0xff]
          %v355 = vld [vmem:[%s315 + $0xa8] sm:$0xff]
          %v356 = vld [vmem:[%s315 + $0xb0] sm:$0xff]
          %v357 = vld [vmem:[%s315 + $0xb8] sm:$0xff]
          %v358 = vld [vmem:[%s315 + $0xc0] sm:$0xff]
          %v359 = vld [vmem:[%s315 + $0xc8] sm:$0xff]
          %v360 = vld [vmem:[%s315 + $0xd0] sm:$0xff]
          %v361 = vld [vmem:[%s315 + $0xd8] sm:$0xff]
          %v362 = vld [vmem:[%s315 + $0xe0] sm:$0xff]
          %v363 = vld [vmem:[%s315 + $0xe8] sm:$0xff]
          %v364 = vld [vmem:[%s315 + $0xf0] sm:$0xff]
          %v365 = vld [vmem:[%s315 + $0xf8] sm:$0xff]
          %vm366 = vcmask 261120
          %367 = vst.msk [vmem:[%s310] sm:$0xff] %vm366, %v334
          %368 = vst.msk [vmem:[%s310 + $0x8] sm:$0xff] %vm366, %v335
          %369 = vst.msk [vmem:[%s310 + $0x10] sm:$0xff] %vm366, %v336
          %370 = vst.msk [vmem:[%s310 + $0x18] sm:$0xff] %vm366, %v337
          %371 = vst.msk [vmem:[%s310 + $0x20] sm:$0xff] %vm366, %v338
          %372 = vst.msk [vmem:[%s310 + $0x28] sm:$0xff] %vm366, %v339
          %373 = vst.msk [vmem:[%s310 + $0x30] sm:$0xff] %vm366, %v340
          %374 = vst.msk [vmem:[%s310 + $0x38] sm:$0xff] %vm366, %v341
          %375 = vst.msk [vmem:[%s310 + $0x40] sm:$0xff] %vm366, %v342
          %376 = vst.msk [vmem:[%s310 + $0x48] sm:$0xff] %vm366, %v343
          %377 = vst.msk [vmem:[%s310 + $0x50] sm:$0xff] %vm366, %v344
          %378 = vst.msk [vmem:[%s310 + $0x58] sm:$0xff] %vm366, %v345
          %379 = vst.msk [vmem:[%s310 + $0x60] sm:$0xff] %vm366, %v346
          %380 = vst.msk [vmem:[%s310 + $0x68] sm:$0xff] %vm366, %v347
          %381 = vst.msk [vmem:[%s310 + $0x70] sm:$0xff] %vm366, %v348
          %382 = vst.msk [vmem:[%s310 + $0x78] sm:$0xff] %vm366, %v349
          %383 = vst.msk [vmem:[%s310 + $0x80] sm:$0xff] %vm366, %v350
          %384 = vst.msk [vmem:[%s310 + $0x88] sm:$0xff] %vm366, %v351
          %385 = vst.msk [vmem:[%s310 + $0x90] sm:$0xff] %vm366, %v352
          %386 = vst.msk [vmem:[%s310 + $0x98] sm:$0xff] %vm366, %v353
          %387 = vst.msk [vmem:[%s310 + $0xa0] sm:$0xff] %vm366, %v354
          %388 = vst.msk [vmem:[%s310 + $0xa8] sm:$0xff] %vm366, %v355
          %389 = vst.msk [vmem:[%s310 + $0xb0] sm:$0xff] %vm366, %v356
          %390 = vst.msk [vmem:[%s310 + $0xb8] sm:$0xff] %vm366, %v357
          %391 = vst.msk [vmem:[%s310 + $0xc0] sm:$0xff] %vm366, %v358
          %392 = vst.msk [vmem:[%s310 + $0xc8] sm:$0xff] %vm366, %v359
          %393 = vst.msk [vmem:[%s310 + $0xd0] sm:$0xff] %vm366, %v360
          %394 = vst.msk [vmem:[%s310 + $0xd8] sm:$0xff] %vm366, %v361
          %395 = vst.msk [vmem:[%s310 + $0xe0] sm:$0xff] %vm366, %v362
          %396 = vst.msk [vmem:[%s310 + $0xe8] sm:$0xff] %vm366, %v363
          %397 = vst.msk [vmem:[%s310 + $0xf0] sm:$0xff] %vm366, %v364
          %398 = vst.msk [vmem:[%s310 + $0xf8] sm:$0xff] %vm366, %v365
          %399 = vst.msk [vmem:[#allocation2] sm:$0xff] %vm366, 0.0
          %400 = vst.msk [vmem:[#allocation2 + $0x8] sm:$0xff] %vm366, 0.0
          %vm401 = vcmask 254976
          %402 = vst.msk [vmem:[#allocation2 + $0x10] sm:$0x3] %vm401, 0.0
          %403 = vst.msk [vmem:[#allocation2 + $0x18] sm:$0xff] %vm366, 0.0
          %404 = vst.msk [vmem:[#allocation2 + $0x20] sm:$0xff] %vm366, 0.0
          %405 = vst.msk [vmem:[#allocation2 + $0x28] sm:$0x3] %vm401, 0.0
          %406 = vst.msk [vmem:[#allocation2 + $0x30] sm:$0xff] %vm366, 0.0
          %407 = vst.msk [vmem:[#allocation2 + $0x38] sm:$0xff] %vm366, 0.0
          %408 = vst.msk [vmem:[#allocation2 + $0x40] sm:$0x3] %vm401, 0.0
          %409 = vst.msk [vmem:[#allocation2 + $0x48] sm:$0xff] %vm366, 0.0
          %410 = vst.msk [vmem:[#allocation2 + $0x50] sm:$0xff] %vm366, 0.0
          %411 = vst.msk [vmem:[#allocation2 + $0x58] sm:$0x3] %vm401, 0.0
          %412 = vst.msk [vmem:[#allocation2 + $0x60] sm:$0xff] %vm366, 0.0
          %413 = vst.msk [vmem:[#allocation2 + $0x68] sm:$0xff] %vm366, 0.0
          %414 = vst.msk [vmem:[#allocation2 + $0x70] sm:$0x3] %vm401, 0.0
          %415 = vst.msk [vmem:[#allocation2 + $0x78] sm:$0xff] %vm366, 0.0
          %416 = vst.msk [vmem:[#allocation2 + $0x80] sm:$0xff] %vm366, 0.0
          %417 = vst.msk [vmem:[#allocation2 + $0x88] sm:$0x3] %vm401, 0.0
          %418 = vst.msk [vmem:[#allocation2 + $0x90] sm:$0xff] %vm366, 0.0
          %419 = vst.msk [vmem:[#allocation2 + $0x98] sm:$0xff] %vm366, 0.0
          %420 = vst.msk [vmem:[#allocation2 + $0xa0] sm:$0x3] %vm401, 0.0
          %421 = vst.msk [vmem:[#allocation2 + $0xa8] sm:$0xff] %vm366, 0.0
          %422 = vst.msk [vmem:[#allocation2 + $0xb0] sm:$0xff] %vm366, 0.0
          %423 = vst.msk [vmem:[#allocation2 + $0xb8] sm:$0x3] %vm401, 0.0
          %424 = vst.msk [vmem:[#allocation2 + $0xc0] sm:$0xff] %vm366, 0.0
          %425 = vst.msk [vmem:[#allocation2 + $0xc8] sm:$0xff] %vm366, 0.0
          %426 = vst.msk [vmem:[#allocation2 + $0xd0] sm:$0x3] %vm401, 0.0
          %427 = vst.msk [vmem:[#allocation2 + $0xd8] sm:$0xff] %vm366, 0.0
          %428 = vst.msk [vmem:[#allocation2 + $0xe0] sm:$0xff] %vm366, 0.0
          %429 = vst.msk [vmem:[#allocation2 + $0xe8] sm:$0x3] %vm401, 0.0
          %430 = vst.msk [vmem:[#allocation2 + $0xf0] sm:$0xff] %vm366, 0.0
          %431 = vst.msk [vmem:[#allocation2 + $0xf8] sm:$0xff] %vm366, 0.0
          %432 = vst.msk [vmem:[#allocation2 + $0x100] sm:$0x3] %vm401, 0.0
          %433 = vst.msk [vmem:[#allocation2 + $0x108] sm:$0xff] %vm366, 0.0
          %434 = vst.msk [vmem:[#allocation2 + $0x110] sm:$0xff] %vm366, 0.0
          %435 = vst.msk [vmem:[#allocation2 + $0x118] sm:$0x3] %vm401, 0.0
          %436 = vst.msk [vmem:[#allocation2 + $0x120] sm:$0xff] %vm366, 0.0
          %437 = vst.msk [vmem:[#allocation2 + $0x128] sm:$0xff] %vm366, 0.0
          %438 = vst.msk [vmem:[#allocation2 + $0x130] sm:$0x3] %vm401, 0.0
          %439 = vst.msk [vmem:[#allocation2 + $0x138] sm:$0xff] %vm366, 0.0
          %440 = vst.msk [vmem:[#allocation2 + $0x140] sm:$0xff] %vm366, 0.0
          %441 = vst.msk [vmem:[#allocation2 + $0x148] sm:$0x3] %vm401, 0.0
          %442 = vst.msk [vmem:[#allocation2 + $0x150] sm:$0xff] %vm366, 0.0
          %443 = vst.msk [vmem:[#allocation2 + $0x158] sm:$0xff] %vm366, 0.0
          %444 = vst.msk [vmem:[#allocation2 + $0x160] sm:$0x3] %vm401, 0.0
          %445 = vst.msk [vmem:[#allocation2 + $0x168] sm:$0xff] %vm366, 0.0
          %446 = vst.msk [vmem:[#allocation2 + $0x170] sm:$0xff] %vm366, 0.0
          %447 = vst.msk [vmem:[#allocation2 + $0x178] sm:$0x3] %vm401, 0.0
          %448 = vst.msk [vmem:[#allocation2 + $0x180] sm:$0xff] %vm366, 0.0
          %449 = vst.msk [vmem:[#allocation2 + $0x188] sm:$0xff] %vm366, 0.0
          %450 = vst.msk [vmem:[#allocation2 + $0x190] sm:$0x3] %vm401, 0.0
          %451 = vst.msk [vmem:[#allocation2 + $0x198] sm:$0xff] %vm366, 0.0
          %452 = vst.msk [vmem:[#allocation2 + $0x1a0] sm:$0xff] %vm366, 0.0
          %453 = vst.msk [vmem:[#allocation2 + $0x1a8] sm:$0x3] %vm401, 0.0
        $region48: #{middle_flow.1} parent=39 // pred_fallthru
          _
        %v454 = vld [vmem:[%s310] sm:$0xff]
        %v455 = vld [vmem:[%s310 + $0x8] sm:$0xff]
        %v456 = vld [vmem:[%s310 + $0x10] sm:$0xff]
        %v457 = vld [vmem:[%s310 + $0x18] sm:$0xff]
        %v458 = vld [vmem:[%s310 + $0x20] sm:$0xff]
        %v459 = vld [vmem:[%s310 + $0x28] sm:$0xff]
        %v460 = vld [vmem:[%s310 + $0x30] sm:$0xff]
        %v461 = vld [vmem:[%s310 + $0x38] sm:$0xff]
        %v462 = vld [vmem:[%s310 + $0x40] sm:$0xff]
        %v463 = vld [vmem:[%s310 + $0x48] sm:$0xff]
        %v464 = vld [vmem:[%s310 + $0x50] sm:$0xff]
        %v465 = vld [vmem:[%s310 + $0x58] sm:$0xff]
        %v466 = vld [vmem:[%s310 + $0x60] sm:$0xff]
        %v467 = vld [vmem:[%s310 + $0x68] sm:$0xff]
        %v468 = vld [vmem:[%s310 + $0x70] sm:$0xff]
        %v469 = vld [vmem:[%s310 + $0x78] sm:$0xff]
        %v470 = vld [vmem:[%s310 + $0x80] sm:$0xff]
        %v471 = vld [vmem:[%s310 + $0x88] sm:$0xff]
        %v472 = vld [vmem:[%s310 + $0x90] sm:$0xff]
        %v473 = vld [vmem:[%s310 + $0x98] sm:$0xff]
        %v474 = vld [vmem:[%s310 + $0xa0] sm:$0xff]
        %v475 = vld [vmem:[%s310 + $0xa8] sm:$0xff]
        %v476 = vld [vmem:[%s310 + $0xb0] sm:$0xff]
        %v477 = vld [vmem:[%s310 + $0xb8] sm:$0xff]
        %v478 = vld [vmem:[%s310 + $0xc0] sm:$0xff]
        %v479 = vld [vmem:[%s310 + $0xc8] sm:$0xff]
        %v480 = vld [vmem:[%s310 + $0xd0] sm:$0xff]
        %v481 = vld [vmem:[%s310 + $0xd8] sm:$0xff]
        %v482 = vld [vmem:[%s310 + $0xe0] sm:$0xff]
        %v483 = vld [vmem:[%s310 + $0xe8] sm:$0xff]
        %v484 = vld [vmem:[%s310 + $0xf0] sm:$0xff]
        %v485 = vld [vmem:[%s310 + $0xf8] sm:$0xff]
        %v486 = vmax.f32 %v454, 0.0
        %v487 = vmax.f32 %v455, 0.0
        %v488 = vmax.f32 %v456, 0.0
        %v489 = vmax.f32 %v457, 0.0
        %v490 = vmax.f32 %v458, 0.0
        %v491 = vmax.f32 %v459, 0.0
        %v492 = vmax.f32 %v460, 0.0
        %v493 = vmax.f32 %v461, 0.0
        %v494 = vmax.f32 %v462, 0.0
        %v495 = vmax.f32 %v463, 0.0
        %v496 = vmax.f32 %v464, 0.0
        %v497 = vmax.f32 %v465, 0.0
        %v498 = vmax.f32 %v466, 0.0
        %v499 = vmax.f32 %v467, 0.0
        %v500 = vmax.f32 %v468, 0.0
        %v501 = vmax.f32 %v469, 0.0
        %v502 = vmax.f32 %v470, 0.0
        %v503 = vmax.f32 %v471, 0.0
        %v504 = vmax.f32 %v472, 0.0
        %v505 = vmax.f32 %v473, 0.0
        %v506 = vmax.f32 %v474, 0.0
        %v507 = vmax.f32 %v475, 0.0
        %v508 = vmax.f32 %v476, 0.0
        %v509 = vmax.f32 %v477, 0.0
        %v510 = vmax.f32 %v478, 0.0
        %v511 = vmax.f32 %v479, 0.0
        %v512 = vmax.f32 %v480, 0.0
        %v513 = vmax.f32 %v481, 0.0
        %v514 = vmax.f32 %v482, 0.0
        %v515 = vmax.f32 %v483, 0.0
        %v516 = vmax.f32 %v484, 0.0
        %v517 = vmax.f32 %v485, 0.0
        %s518 = scalar_lea.vmem [#allocation2], 24
        %vm519 = vcmask 261120
        %520 = vst.msk [vmem:[%s518 + $0x1] sm:$0xff] %vm519, %v486
        %521 = vst.msk [vmem:[%s518 + $0x9] sm:$0xff] %vm519, %v487
        %522 = vst.msk [vmem:[%s518 + $0x19] sm:$0xff] %vm519, %v488
        %523 = vst.msk [vmem:[%s518 + $0x21] sm:$0xff] %vm519, %v489
        %524 = vst.msk [vmem:[%s518 + $0x31] sm:$0xff] %vm519, %v490
        %525 = vst.msk [vmem:[%s518 + $0x39] sm:$0xff] %vm519, %v491
        %526 = vst.msk [vmem:[%s518 + $0x49] sm:$0xff] %vm519, %v492
        %527 = vst.msk [vmem:[%s518 + $0x51] sm:$0xff] %vm519, %v493
        %528 = vst.msk [vmem:[%s518 + $0x61] sm:$0xff] %vm519, %v494
        %529 = vst.msk [vmem:[%s518 + $0x69] sm:$0xff] %vm519, %v495
        %530 = vst.msk [vmem:[%s518 + $0x79] sm:$0xff] %vm519, %v496
        %531 = vst.msk [vmem:[%s518 + $0x81] sm:$0xff] %vm519, %v497
        %532 = vst.msk [vmem:[%s518 + $0x91] sm:$0xff] %vm519, %v498
        %533 = vst.msk [vmem:[%s518 + $0x99] sm:$0xff] %vm519, %v499
        %534 = vst.msk [vmem:[%s518 + $0xa9] sm:$0xff] %vm519, %v500
        %535 = vst.msk [vmem:[%s518 + $0xb1] sm:$0xff] %vm519, %v501
        %536 = vst.msk [vmem:[%s518 + $0xc1] sm:$0xff] %vm519, %v502
        %537 = vst.msk [vmem:[%s518 + $0xc9] sm:$0xff] %vm519, %v503
        %538 = vst.msk [vmem:[%s518 + $0xd9] sm:$0xff] %vm519, %v504
        %539 = vst.msk [vmem:[%s518 + $0xe1] sm:$0xff] %vm519, %v505
        %540 = vst.msk [vmem:[%s518 + $0xf1] sm:$0xff] %vm519, %v506
        %541 = vst.msk [vmem:[%s518 + $0xf9] sm:$0xff] %vm519, %v507
        %542 = vst.msk [vmem:[%s518 + $0x109] sm:$0xff] %vm519, %v508
        %543 = vst.msk [vmem:[%s518 + $0x111] sm:$0xff] %vm519, %v509
        %544 = vst.msk [vmem:[%s518 + $0x121] sm:$0xff] %vm519, %v510
        %545 = vst.msk [vmem:[%s518 + $0x129] sm:$0xff] %vm519, %v511
        %546 = vst.msk [vmem:[%s518 + $0x139] sm:$0xff] %vm519, %v512
        %547 = vst.msk [vmem:[%s518 + $0x141] sm:$0xff] %vm519, %v513
        %548 = vst.msk [vmem:[%s518 + $0x151] sm:$0xff] %vm519, %v514
        %549 = vst.msk [vmem:[%s518 + $0x159] sm:$0xff] %vm519, %v515
        %550 = vst.msk [vmem:[%s518 + $0x169] sm:$0xff] %vm519, %v516
        %551 = vst.msk [vmem:[%s518 + $0x171] sm:$0xff] %vm519, %v517
        %v552 = vld [vmem:[#allocation2] sm:$0xff]
        %v553 = vld [vmem:[#allocation2 + $0x8] sm:$0xff]
        %v554 = vld [vmem:[#allocation2 + $0x10] sm:$0x3]
        %v555 = vld [vmem:[#allocation2 + $0x18] sm:$0xff]
        %v556 = vld [vmem:[#allocation2 + $0x20] sm:$0xff]
        %v557 = vld [vmem:[#allocation2 + $0x28] sm:$0x3]
        %v558 = vld [vmem:[#allocation2 + $0x30] sm:$0xff]
        %v559 = vld [vmem:[#allocation2 + $0x38] sm:$0xff]
        %v560 = vld [vmem:[#allocation2 + $0x40] sm:$0x3]
        %v561 = vld [vmem:[#allocation2 + $0x48] sm:$0xff]
        %v562 = vld [vmem:[#allocation2 + $0x50] sm:$0xff]
        %v563 = vld [vmem:[#allocation2 + $0x58] sm:$0x3]
        %v564 = vld [vmem:[#allocation2 + $0x60] sm:$0xff]
        %v565 = vld [vmem:[#allocation2 + $0x68] sm:$0xff]
        %v566 = vld [vmem:[#allocation2 + $0x70] sm:$0x3]
        %v567 = vld [vmem:[#allocation2 + $0x78] sm:$0xff]
        %v568 = vld [vmem:[#allocation2 + $0x80] sm:$0xff]
        %v569 = vld [vmem:[#allocation2 + $0x88] sm:$0x3]
        %v570 = vld [vmem:[#allocation2 + $0x90] sm:$0xff]
        %v571 = vld [vmem:[#allocation2 + $0x98] sm:$0xff]
        %v572 = vld [vmem:[#allocation2 + $0xa0] sm:$0x3]
        %v573 = vld [vmem:[#allocation2 + $0xa8] sm:$0xff]
        %v574 = vld [vmem:[#allocation2 + $0xb0] sm:$0xff]
        %v575 = vld [vmem:[#allocation2 + $0xb8] sm:$0x3]
        %v576 = vld [vmem:[#allocation2 + $0xc0] sm:$0xff]
        %v577 = vld [vmem:[#allocation2 + $0xc8] sm:$0xff]
        %v578 = vld [vmem:[#allocation2 + $0xd0] sm:$0x3]
        %v579 = vld [vmem:[#allocation2 + $0xd8] sm:$0xff]
        %v580 = vld [vmem:[#allocation2 + $0xe0] sm:$0xff]
        %v581 = vld [vmem:[#allocation2 + $0xe8] sm:$0x3]
        %v582 = vld [vmem:[#allocation2 + $0xf0] sm:$0xff]
        %v583 = vld [vmem:[#allocation2 + $0xf8] sm:$0xff]
        %v584 = vld [vmem:[#allocation2 + $0x100] sm:$0x3]
        %v585 = vld [vmem:[#allocation2 + $0x108] sm:$0xff]
        %v586 = vld [vmem:[#allocation2 + $0x110] sm:$0xff]
        %v587 = vld [vmem:[#allocation2 + $0x118] sm:$0x3]
        %v588 = vld [vmem:[#allocation2 + $0x120] sm:$0xff]
        %v589 = vld [vmem:[#allocation2 + $0x128] sm:$0xff]
        %v590 = vld [vmem:[#allocation2 + $0x130] sm:$0x3]
        %v591 = vld [vmem:[#allocation2 + $0x138] sm:$0xff]
        %v592 = vld [vmem:[#allocation2 + $0x140] sm:$0xff]
        %v593 = vld [vmem:[#allocation2 + $0x148] sm:$0x3]
        %v594 = vld [vmem:[#allocation2 + $0x150] sm:$0xff]
        %v595 = vld [vmem:[#allocation2 + $0x158] sm:$0xff]
        %v596 = vld [vmem:[#allocation2 + $0x160] sm:$0x3]
        %v597 = vld [vmem:[#allocation2 + $0x168] sm:$0xff]
        %v598 = vld [vmem:[#allocation2 + $0x170] sm:$0xff]
        %v599 = vld [vmem:[#allocation2 + $0x178] sm:$0x3]
        %v600 = vld [vmem:[#allocation2 + $0x180] sm:$0xff]
        %v601 = vld [vmem:[#allocation2 + $0x188] sm:$0xff]
        %v602 = vld [vmem:[#allocation2 + $0x190] sm:$0x3]
        %v603 = vld [vmem:[#allocation2 + $0x198] sm:$0xff]
        %v604 = vld [vmem:[#allocation2 + $0x1a0] sm:$0xff]
        %v605 = vld [vmem:[#allocation2 + $0x1a8] sm:$0x3]
        %v606 = vld [vmem:[%s320] sm:$0xff]
        %v607 = vld [vmem:[%s320 + $0x8] sm:$0x1]
        %v608 = vlaneseq
        %v609 = vshrl.u32 %v608, 7
        %v610 = vsub.s32 4, %v609
        %v611 = vrot.slane %v606, %v610
        %v612 = vmul.f32 %v555, %v611
        %v613 = vmul.f32 %v556, %v611
        %v614 = vmul.f32 %v557, %v611
        %v615 = vmul.f32 %v558, %v611
        %v616 = vmul.f32 %v559, %v611
        %v617 = vmul.f32 %v560, %v611
        %v618 = vmul.f32 %v561, %v611
        %v619 = vmul.f32 %v562, %v611
        %v620 = vmul.f32 %v563, %v611
        %v621 = vmul.f32 %v564, %v611
        %v622 = vmul.f32 %v565, %v611
        %v623 = vmul.f32 %v566, %v611
        %v624 = vmul.f32 %v567, %v611
        %v625 = vmul.f32 %v568, %v611
        %v626 = vmul.f32 %v569, %v611
        %v627 = vmul.f32 %v570, %v611
        %v628 = vmul.f32 %v571, %v611
        %v629 = vmul.f32 %v572, %v611
        %v630 = vmul.f32 %v573, %v611
        %v631 = vmul.f32 %v574, %v611
        %v632 = vmul.f32 %v575, %v611
        %v633 = vmul.f32 %v576, %v611
        %v634 = vmul.f32 %v577, %v611
        %v635 = vmul.f32 %v578, %v611
        %v636 = vmul.f32 %v579, %v611
        %v637 = vmul.f32 %v580, %v611
        %v638 = vmul.f32 %v581, %v611
        %v639 = vmul.f32 %v582, %v611
        %v640 = vmul.f32 %v583, %v611
        %v641 = vmul.f32 %v584, %v611
        %v642 = vmul.f32 %v585, %v611
        %v643 = vmul.f32 %v586, %v611
        %v644 = vmul.f32 %v587, %v611
        %v645 = vmul.f32 %v588, %v611
        %v646 = vmul.f32 %v589, %v611
        %v647 = vmul.f32 %v590, %v611
        %v648 = vmul.f32 %v591, %v611
        %v649 = vmul.f32 %v592, %v611
        %v650 = vmul.f32 %v593, %v611
        %v651 = vmul.f32 %v594, %v611
        %v652 = vmul.f32 %v595, %v611
        %v653 = vmul.f32 %v596, %v611
        %v654 = vmul.f32 %v597, %v611
        %v655 = vmul.f32 %v598, %v611
        %v656 = vmul.f32 %v599, %v611
        %v657 = vmul.f32 %v600, %v611
        %v658 = vmul.f32 %v601, %v611
        %v659 = vmul.f32 %v602, %v611
        %v660 = vlaneseq
        %v661 = vshrl.u32 %v660, 7
        %v662 = vsub.s32 0, %v661
        %v663 = vrot.slane %v606, %v662
        %v664 = vmul.f32 %v552, %v663
        %v665 = vmul.f32 %v553, %v663
        %v666 = vmul.f32 %v555, %v663
        %v667 = vmul.f32 %v556, %v663
        %v668 = vmul.f32 %v558, %v663
        %v669 = vmul.f32 %v559, %v663
        %v670 = vmul.f32 %v561, %v663
        %v671 = vmul.f32 %v562, %v663
        %v672 = vmul.f32 %v564, %v663
        %v673 = vmul.f32 %v565, %v663
        %v674 = vmul.f32 %v567, %v663
        %v675 = vmul.f32 %v568, %v663
        %v676 = vmul.f32 %v570, %v663
        %v677 = vmul.f32 %v571, %v663
        %v678 = vmul.f32 %v573, %v663
        %v679 = vmul.f32 %v574, %v663
        %v680 = vmul.f32 %v576, %v663
        %v681 = vmul.f32 %v577, %v663
        %v682 = vmul.f32 %v579, %v663
        %v683 = vmul.f32 %v580, %v663
        %v684 = vmul.f32 %v582, %v663
        %v685 = vmul.f32 %v583, %v663
        %v686 = vmul.f32 %v585, %v663
        %v687 = vmul.f32 %v586, %v663
        %v688 = vmul.f32 %v588, %v663
        %v689 = vmul.f32 %v589, %v663
        %v690 = vmul.f32 %v591, %v663
        %v691 = vmul.f32 %v592, %v663
        %v692 = vmul.f32 %v594, %v663
        %v693 = vmul.f32 %v595, %v663
        %v694 = vmul.f32 %v597, %v663
        %v695 = vmul.f32 %v598, %v663
        %vm728 = vcmask 1040384
        %v729 = vrot.slane %v664, 7
        %v730 = vrot.slane %v665, 7
        %v731 = vsel %vm728, %v729, %v730
        %v732 = vrot.slane %v666, 7
        %v733 = vrot.slane %v667, 7
        %v734 = vsel %vm728, %v732, %v733
        %v735 = vrot.slane %v668, 7
        %v736 = vrot.slane %v669, 7
        %v737 = vsel %vm728, %v735, %v736
        %v738 = vrot.slane %v670, 7
        %v739 = vrot.slane %v671, 7
        %v740 = vsel %vm728, %v738, %v739
        %v741 = vrot.slane %v672, 7
        %v742 = vrot.slane %v673, 7
        %v743 = vsel %vm728, %v741, %v742
        %v744 = vrot.slane %v674, 7
        %v745 = vrot.slane %v675, 7
        %v746 = vsel %vm728, %v744, %v745
        %v747 = vrot.slane %v676, 7
        %v748 = vrot.slane %v677, 7
        %v749 = vsel %vm728, %v747, %v748
        %v750 = vrot.slane %v678, 7
        %v751 = vrot.slane %v679, 7
        %v752 = vsel %vm728, %v750, %v751
        %v753 = vrot.slane %v680, 7
        %v754 = vrot.slane %v681, 7
        %v755 = vsel %vm728, %v753, %v754
        %v756 = vrot.slane %v682, 7
        %v757 = vrot.slane %v683, 7
        %v758 = vsel %vm728, %v756, %v757
        %v759 = vrot.slane %v684, 7
        %v760 = vrot.slane %v685, 7
        %v761 = vsel %vm728, %v759, %v760
        %v762 = vrot.slane %v686, 7
        %v763 = vrot.slane %v687, 7
        %v764 = vsel %vm728, %v762, %v763
        %v765 = vrot.slane %v688, 7
        %v766 = vrot.slane %v689, 7
        %v767 = vsel %vm728, %v765, %v766
        %v768 = vrot.slane %v690, 7
        %v769 = vrot.slane %v691, 7
        %v770 = vsel %vm728, %v768, %v769
        %v771 = vrot.slane %v692, 7
        %v772 = vrot.slane %v693, 7
        %v773 = vsel %vm728, %v771, %v772
        %v774 = vrot.slane %v694, 7
        %v775 = vrot.slane %v695, 7
        %v776 = vsel %vm728, %v774, %v775
        %v825 = vadd.f32 %v612, %v729
        %v826 = vadd.f32 %v613, %v731
        %v827 = vadd.f32 %v614, %v730
        %v828 = vadd.f32 %v615, %v732
        %v829 = vadd.f32 %v616, %v734
        %v830 = vadd.f32 %v617, %v733
        %v831 = vadd.f32 %v618, %v735
        %v832 = vadd.f32 %v619, %v737
        %v833 = vadd.f32 %v620, %v736
        %v834 = vadd.f32 %v621, %v738
        %v835 = vadd.f32 %v622, %v740
        %v836 = vadd.f32 %v623, %v739
        %v837 = vadd.f32 %v624, %v741
        %v838 = vadd.f32 %v625, %v743
        %v839 = vadd.f32 %v626, %v742
        %v840 = vadd.f32 %v627, %v744
        %v841 = vadd.f32 %v628, %v746
        %v842 = vadd.f32 %v629, %v745
        %v843 = vadd.f32 %v630, %v747
        %v844 = vadd.f32 %v631, %v749
        %v845 = vadd.f32 %v632, %v748
        %v846 = vadd.f32 %v633, %v750
        %v847 = vadd.f32 %v634, %v752
        %v848 = vadd.f32 %v635, %v751
        %v849 = vadd.f32 %v636, %v753
        %v850 = vadd.f32 %v637, %v755
        %v851 = vadd.f32 %v638, %v754
        %v852 = vadd.f32 %v639, %v756
        %v853 = vadd.f32 %v640, %v758
        %v854 = vadd.f32 %v641, %v757
        %v855 = vadd.f32 %v642, %v759
        %v856 = vadd.f32 %v643, %v761
        %v857 = vadd.f32 %v644, %v760
        %v858 = vadd.f32 %v645, %v762
        %v859 = vadd.f32 %v646, %v764
        %v860 = vadd.f32 %v647, %v763
        %v861 = vadd.f32 %v648, %v765
        %v862 = vadd.f32 %v649, %v767
        %v863 = vadd.f32 %v650, %v766
        %v864 = vadd.f32 %v651, %v768
        %v865 = vadd.f32 %v652, %v770
        %v866 = vadd.f32 %v653, %v769
        %v867 = vadd.f32 %v654, %v771
        %v868 = vadd.f32 %v655, %v773
        %v869 = vadd.f32 %v656, %v772
        %v870 = vadd.f32 %v657, %v774
        %v871 = vadd.f32 %v658, %v776
        %v872 = vadd.f32 %v659, %v775
        %v873 = vlaneseq
        %v874 = vshrl.u32 %v873, 7
        %v875 = vsub.s32 1, %v874
        %v876 = vrot.slane %v606, %v875
        %v877 = vmul.f32 %v552, %v876
        %v878 = vmul.f32 %v553, %v876
        %v879 = vmul.f32 %v554, %v876
        %v880 = vmul.f32 %v555, %v876
        %v881 = vmul.f32 %v556, %v876
        %v882 = vmul.f32 %v557, %v876
        %v883 = vmul.f32 %v558, %v876
        %v884 = vmul.f32 %v559, %v876
        %v885 = vmul.f32 %v560, %v876
        %v886 = vmul.f32 %v561, %v876
        %v887 = vmul.f32 %v562, %v876
        %v888 = vmul.f32 %v563, %v876
        %v889 = vmul.f32 %v564, %v876
        %v890 = vmul.f32 %v565, %v876
        %v891 = vmul.f32 %v566, %v876
        %v892 = vmul.f32 %v567, %v876
        %v893 = vmul.f32 %v568, %v876
        %v894 = vmul.f32 %v569, %v876
        %v895 = vmul.f32 %v570, %v876
        %v896 = vmul.f32 %v571, %v876
        %v897 = vmul.f32 %v572, %v876
        %v898 = vmul.f32 %v573, %v876
        %v899 = vmul.f32 %v574, %v876
        %v900 = vmul.f32 %v575, %v876
        %v901 = vmul.f32 %v576, %v876
        %v902 = vmul.f32 %v577, %v876
        %v903 = vmul.f32 %v578, %v876
        %v904 = vmul.f32 %v579, %v876
        %v905 = vmul.f32 %v580, %v876
        %v906 = vmul.f32 %v581, %v876
        %v907 = vmul.f32 %v582, %v876
        %v908 = vmul.f32 %v583, %v876
        %v909 = vmul.f32 %v584, %v876
        %v910 = vmul.f32 %v585, %v876
        %v911 = vmul.f32 %v586, %v876
        %v912 = vmul.f32 %v587, %v876
        %v913 = vmul.f32 %v588, %v876
        %v914 = vmul.f32 %v589, %v876
        %v915 = vmul.f32 %v590, %v876
        %v916 = vmul.f32 %v591, %v876
        %v917 = vmul.f32 %v592, %v876
        %v918 = vmul.f32 %v593, %v876
        %v919 = vmul.f32 %v594, %v876
        %v920 = vmul.f32 %v595, %v876
        %v921 = vmul.f32 %v596, %v876
        %v922 = vmul.f32 %v597, %v876
        %v923 = vmul.f32 %v598, %v876
        %v924 = vmul.f32 %v599, %v876
        %v925 = vadd.f32 %v825, %v877
        %v926 = vadd.f32 %v826, %v878
        %v927 = vadd.f32 %v827, %v879
        %v928 = vadd.f32 %v828, %v880
        %v929 = vadd.f32 %v829, %v881
        %v930 = vadd.f32 %v830, %v882
        %v931 = vadd.f32 %v831, %v883
        %v932 = vadd.f32 %v832, %v884
        %v933 = vadd.f32 %v833, %v885
        %v934 = vadd.f32 %v834, %v886
        %v935 = vadd.f32 %v835, %v887
        %v936 = vadd.f32 %v836, %v888
        %v937 = vadd.f32 %v837, %v889
        %v938 = vadd.f32 %v838, %v890
        %v939 = vadd.f32 %v839, %v891
        %v940 = vadd.f32 %v840, %v892
        %v941 = vadd.f32 %v841, %v893
        %v942 = vadd.f32 %v842, %v894
        %v943 = vadd.f32 %v843, %v895
        %v944 = vadd.f32 %v844, %v896
        %v945 = vadd.f32 %v845, %v897
        %v946 = vadd.f32 %v846, %v898
        %v947 = vadd.f32 %v847, %v899
        %v948 = vadd.f32 %v848, %v900
        %v949 = vadd.f32 %v849, %v901
        %v950 = vadd.f32 %v850, %v902
        %v951 = vadd.f32 %v851, %v903
        %v952 = vadd.f32 %v852, %v904
        %v953 = vadd.f32 %v853, %v905
        %v954 = vadd.f32 %v854, %v906
        %v955 = vadd.f32 %v855, %v907
        %v956 = vadd.f32 %v856, %v908
        %v957 = vadd.f32 %v857, %v909
        %v958 = vadd.f32 %v858, %v910
        %v959 = vadd.f32 %v859, %v911
        %v960 = vadd.f32 %v860, %v912
        %v961 = vadd.f32 %v861, %v913
        %v962 = vadd.f32 %v862, %v914
        %v963 = vadd.f32 %v863, %v915
        %v964 = vadd.f32 %v864, %v916
        %v965 = vadd.f32 %v865, %v917
        %v966 = vadd.f32 %v866, %v918
        %v967 = vadd.f32 %v867, %v919
        %v968 = vadd.f32 %v868, %v920
        %v969 = vadd.f32 %v869, %v921
        %v970 = vadd.f32 %v870, %v922
        %v971 = vadd.f32 %v871, %v923
        %v972 = vadd.f32 %v872, %v924
        %v973 = vlaneseq
        %v974 = vshrl.u32 %v973, 7
        %v975 = vsub.s32 2, %v974
        %v976 = vrot.slane %v606, %v975
        %v977 = vmul.f32 %v552, %v976
        %v978 = vmul.f32 %v553, %v976
        %v979 = vmul.f32 %v554, %v976
        %v980 = vmul.f32 %v555, %v976
        %v981 = vmul.f32 %v556, %v976
        %v982 = vmul.f32 %v557, %v976
        %v983 = vmul.f32 %v558, %v976
        %v984 = vmul.f32 %v559, %v976
        %v985 = vmul.f32 %v560, %v976
        %v986 = vmul.f32 %v561, %v976
        %v987 = vmul.f32 %v562, %v976
        %v988 = vmul.f32 %v563, %v976
        %v989 = vmul.f32 %v564, %v976
        %v990 = vmul.f32 %v565, %v976
        %v991 = vmul.f32 %v566, %v976
        %v992 = vmul.f32 %v567, %v976
        %v993 = vmul.f32 %v568, %v976
        %v994 = vmul.f32 %v569, %v976
        %v995 = vmul.f32 %v570, %v976
        %v996 = vmul.f32 %v571, %v976
        %v997 = vmul.f32 %v572, %v976
        %v998 = vmul.f32 %v573, %v976
        %v999 = vmul.f32 %v574, %v976
        %v1000 = vmul.f32 %v575, %v976
        %v1001 = vmul.f32 %v576, %v976
        %v1002 = vmul.f32 %v577, %v976
        %v1003 = vmul.f32 %v578, %v976
        %v1004 = vmul.f32 %v579, %v976
        %v1005 = vmul.f32 %v580, %v976
        %v1006 = vmul.f32 %v581, %v976
        %v1007 = vmul.f32 %v582, %v976
        %v1008 = vmul.f32 %v583, %v976
        %v1009 = vmul.f32 %v584, %v976
        %v1010 = vmul.f32 %v585, %v976
        %v1011 = vmul.f32 %v586, %v976
        %v1012 = vmul.f32 %v587, %v976
        %v1013 = vmul.f32 %v588, %v976
        %v1014 = vmul.f32 %v589, %v976
        %v1015 = vmul.f32 %v590, %v976
        %v1016 = vmul.f32 %v591, %v976
        %v1017 = vmul.f32 %v592, %v976
        %v1018 = vmul.f32 %v593, %v976
        %v1019 = vmul.f32 %v594, %v976
        %v1020 = vmul.f32 %v595, %v976
        %v1021 = vmul.f32 %v596, %v976
        %v1022 = vmul.f32 %v597, %v976
        %v1023 = vmul.f32 %v598, %v976
        %v1024 = vmul.f32 %v599, %v976
        %vm1073 = vcmask 1046528
        %v1074 = vrot.slane %v977, 1
        %v1075 = vrot.slane %v978, 1
        %v1076 = vsel %vm1073, %v1074, %v1075
        %v1077 = vrot.slane %v979, 1
        %v1078 = vsel %vm1073, %v1075, %v1077
        %v1079 = vrot.slane %v980, 1
        %v1080 = vrot.slane %v981, 1
        %v1081 = vsel %vm1073, %v1079, %v1080
        %v1082 = vrot.slane %v982, 1
        %v1083 = vsel %vm1073, %v1080, %v1082
        %v1084 = vrot.slane %v983, 1
        %v1085 = vrot.slane %v984, 1
        %v1086 = vsel %vm1073, %v1084, %v1085
        %v1087 = vrot.slane %v985, 1
        %v1088 = vsel %vm1073, %v1085, %v1087
        %v1089 = vrot.slane %v986, 1
        %v1090 = vrot.slane %v987, 1
        %v1091 = vsel %vm1073, %v1089, %v1090
        %v1092 = vrot.slane %v988, 1
        %v1093 = vsel %vm1073, %v1090, %v1092
        %v1094 = vrot.slane %v989, 1
        %v1095 = vrot.slane %v990, 1
        %v1096 = vsel %vm1073, %v1094, %v1095
        %v1097 = vrot.slane %v991, 1
        %v1098 = vsel %vm1073, %v1095, %v1097
        %v1099 = vrot.slane %v992, 1
        %v1100 = vrot.slane %v993, 1
        %v1101 = vsel %vm1073, %v1099, %v1100
        %v1102 = vrot.slane %v994, 1
        %v1103 = vsel %vm1073, %v1100, %v1102
        %v1104 = vrot.slane %v995, 1
        %v1105 = vrot.slane %v996, 1
        %v1106 = vsel %vm1073, %v1104, %v1105
        %v1107 = vrot.slane %v997, 1
        %v1108 = vsel %vm1073, %v1105, %v1107
        %v1109 = vrot.slane %v998, 1
        %v1110 = vrot.slane %v999, 1
        %v1111 = vsel %vm1073, %v1109, %v1110
        %v1112 = vrot.slane %v1000, 1
        %v1113 = vsel %vm1073, %v1110, %v1112
        %v1114 = vrot.slane %v1001, 1
        %v1115 = vrot.slane %v1002, 1
        %v1116 = vsel %vm1073, %v1114, %v1115
        %v1117 = vrot.slane %v1003, 1
        %v1118 = vsel %vm1073, %v1115, %v1117
        %v1119 = vrot.slane %v1004, 1
        %v1120 = vrot.slane %v1005, 1
        %v1121 = vsel %vm1073, %v1119, %v1120
        %v1122 = vrot.slane %v1006, 1
        %v1123 = vsel %vm1073, %v1120, %v1122
        %v1124 = vrot.slane %v1007, 1
        %v1125 = vrot.slane %v1008, 1
        %v1126 = vsel %vm1073, %v1124, %v1125
        %v1127 = vrot.slane %v1009, 1
        %v1128 = vsel %vm1073, %v1125, %v1127
        %v1129 = vrot.slane %v1010, 1
        %v1130 = vrot.slane %v1011, 1
        %v1131 = vsel %vm1073, %v1129, %v1130
        %v1132 = vrot.slane %v1012, 1
        %v1133 = vsel %vm1073, %v1130, %v1132
        %v1134 = vrot.slane %v1013, 1
        %v1135 = vrot.slane %v1014, 1
        %v1136 = vsel %vm1073, %v1134, %v1135
        %v1137 = vrot.slane %v1015, 1
        %v1138 = vsel %vm1073, %v1135, %v1137
        %v1139 = vrot.slane %v1016, 1
        %v1140 = vrot.slane %v1017, 1
        %v1141 = vsel %vm1073, %v1139, %v1140
        %v1142 = vrot.slane %v1018, 1
        %v1143 = vsel %vm1073, %v1140, %v1142
        %v1144 = vrot.slane %v1019, 1
        %v1145 = vrot.slane %v1020, 1
        %v1146 = vsel %vm1073, %v1144, %v1145
        %v1147 = vrot.slane %v1021, 1
        %v1148 = vsel %vm1073, %v1145, %v1147
        %v1149 = vrot.slane %v1022, 1
        %v1150 = vrot.slane %v1023, 1
        %v1151 = vsel %vm1073, %v1149, %v1150
        %v1152 = vrot.slane %v1024, 1
        %v1153 = vsel %vm1073, %v1150, %v1152
        %v1202 = vadd.f32 %v925, %v1076
        %v1203 = vadd.f32 %v926, %v1078
        %v1204 = vadd.f32 %v927, %v1077
        %v1205 = vadd.f32 %v928, %v1081
        %v1206 = vadd.f32 %v929, %v1083
        %v1207 = vadd.f32 %v930, %v1082
        %v1208 = vadd.f32 %v931, %v1086
        %v1209 = vadd.f32 %v932, %v1088
        %v1210 = vadd.f32 %v933, %v1087
        %v1211 = vadd.f32 %v934, %v1091
        %v1212 = vadd.f32 %v935, %v1093
        %v1213 = vadd.f32 %v936, %v1092
        %v1214 = vadd.f32 %v937, %v1096
        %v1215 = vadd.f32 %v938, %v1098
        %v1216 = vadd.f32 %v939, %v1097
        %v1217 = vadd.f32 %v940, %v1101
        %v1218 = vadd.f32 %v941, %v1103
        %v1219 = vadd.f32 %v942, %v1102
        %v1220 = vadd.f32 %v943, %v1106
        %v1221 = vadd.f32 %v944, %v1108
        %v1222 = vadd.f32 %v945, %v1107
        %v1223 = vadd.f32 %v946, %v1111
        %v1224 = vadd.f32 %v947, %v1113
        %v1225 = vadd.f32 %v948, %v1112
        %v1226 = vadd.f32 %v949, %v1116
        %v1227 = vadd.f32 %v950, %v1118
        %v1228 = vadd.f32 %v951, %v1117
        %v1229 = vadd.f32 %v952, %v1121
        %v1230 = vadd.f32 %v953, %v1123
        %v1231 = vadd.f32 %v954, %v1122
        %v1232 = vadd.f32 %v955, %v1126
        %v1233 = vadd.f32 %v956, %v1128
        %v1234 = vadd.f32 %v957, %v1127
        %v1235 = vadd.f32 %v958, %v1131
        %v1236 = vadd.f32 %v959, %v1133
        %v1237 = vadd.f32 %v960, %v1132
        %v1238 = vadd.f32 %v961, %v1136
        %v1239 = vadd.f32 %v962, %v1138
        %v1240 = vadd.f32 %v963, %v1137
        %v1241 = vadd.f32 %v964, %v1141
        %v1242 = vadd.f32 %v965, %v1143
        %v1243 = vadd.f32 %v966, %v1142
        %v1244 = vadd.f32 %v967, %v1146
        %v1245 = vadd.f32 %v968, %v1148
        %v1246 = vadd.f32 %v969, %v1147
        %v1247 = vadd.f32 %v970, %v1151
        %v1248 = vadd.f32 %v971, %v1153
        %v1249 = vadd.f32 %v972, %v1152
        %v1250 = vlaneseq
        %v1251 = vshrl.u32 %v1250, 7
        %v1252 = vsub.s32 3, %v1251
        %v1253 = vrot.slane %v606, %v1252
        %v1254 = vmul.f32 %v555, %v1253
        %v1255 = vmul.f32 %v556, %v1253
        %v1256 = vmul.f32 %v558, %v1253
        %v1257 = vmul.f32 %v559, %v1253
        %v1258 = vmul.f32 %v561, %v1253
        %v1259 = vmul.f32 %v562, %v1253
        %v1260 = vmul.f32 %v564, %v1253
        %v1261 = vmul.f32 %v565, %v1253
        %v1262 = vmul.f32 %v567, %v1253
        %v1263 = vmul.f32 %v568, %v1253
        %v1264 = vmul.f32 %v570, %v1253
        %v1265 = vmul.f32 %v571, %v1253
        %v1266 = vmul.f32 %v573, %v1253
        %v1267 = vmul.f32 %v574, %v1253
        %v1268 = vmul.f32 %v576, %v1253
        %v1269 = vmul.f32 %v577, %v1253
        %v1270 = vmul.f32 %v579, %v1253
        %v1271 = vmul.f32 %v580, %v1253
        %v1272 = vmul.f32 %v582, %v1253
        %v1273 = vmul.f32 %v583, %v1253
        %v1274 = vmul.f32 %v585, %v1253
        %v1275 = vmul.f32 %v586, %v1253
        %v1276 = vmul.f32 %v588, %v1253
        %v1277 = vmul.f32 %v589, %v1253
        %v1278 = vmul.f32 %v591, %v1253
        %v1279 = vmul.f32 %v592, %v1253
        %v1280 = vmul.f32 %v594, %v1253
        %v1281 = vmul.f32 %v595, %v1253
        %v1282 = vmul.f32 %v597, %v1253
        %v1283 = vmul.f32 %v598, %v1253
        %v1284 = vmul.f32 %v600, %v1253
        %v1285 = vmul.f32 %v601, %v1253
        %v1318 = vrot.slane %v1254, 7
        %v1319 = vrot.slane %v1255, 7
        %v1320 = vsel %vm728, %v1318, %v1319
        %v1321 = vrot.slane %v1256, 7
        %v1322 = vrot.slane %v1257, 7
        %v1323 = vsel %vm728, %v1321, %v1322
        %v1324 = vrot.slane %v1258, 7
        %v1325 = vrot.slane %v1259, 7
        %v1326 = vsel %vm728, %v1324, %v1325
        %v1327 = vrot.slane %v1260, 7
        %v1328 = vrot.slane %v1261, 7
        %v1329 = vsel %vm728, %v1327, %v1328
        %v1330 = vrot.slane %v1262, 7
        %v1331 = vrot.slane %v1263, 7
        %v1332 = vsel %vm728, %v1330, %v1331
        %v1333 = vrot.slane %v1264, 7
        %v1334 = vrot.slane %v1265, 7
        %v1335 = vsel %vm728, %v1333, %v1334
        %v1336 = vrot.slane %v1266, 7
        %v1337 = vrot.slane %v1267, 7
        %v1338 = vsel %vm728, %v1336, %v1337
        %v1339 = vrot.slane %v1268, 7
        %v1340 = vrot.slane %v1269, 7
        %v1341 = vsel %vm728, %v1339, %v1340
        %v1342 = vrot.slane %v1270, 7
        %v1343 = vrot.slane %v1271, 7
        %v1344 = vsel %vm728, %v1342, %v1343
        %v1345 = vrot.slane %v1272, 7
        %v1346 = vrot.slane %v1273, 7
        %v1347 = vsel %vm728, %v1345, %v1346
        %v1348 = vrot.slane %v1274, 7
        %v1349 = vrot.slane %v1275, 7
        %v1350 = vsel %vm728, %v1348, %v1349
        %v1351 = vrot.slane %v1276, 7
        %v1352 = vrot.slane %v1277, 7
        %v1353 = vsel %vm728, %v1351, %v1352
        %v1354 = vrot.slane %v1278, 7
        %v1355 = vrot.slane %v1279, 7
        %v1356 = vsel %vm728, %v1354, %v1355
        %v1357 = vrot.slane %v1280, 7
        %v1358 = vrot.slane %v1281, 7
        %v1359 = vsel %vm728, %v1357, %v1358
        %v1360 = vrot.slane %v1282, 7
        %v1361 = vrot.slane %v1283, 7
        %v1362 = vsel %vm728, %v1360, %v1361
        %v1363 = vrot.slane %v1284, 7
        %v1364 = vrot.slane %v1285, 7
        %v1365 = vsel %vm728, %v1363, %v1364
        %v1414 = vadd.f32 %v1202, %v1318
        %v1415 = vadd.f32 %v1203, %v1320
        %v1416 = vadd.f32 %v1204, %v1319
        %v1417 = vadd.f32 %v1205, %v1321
        %v1418 = vadd.f32 %v1206, %v1323
        %v1419 = vadd.f32 %v1207, %v1322
        %v1420 = vadd.f32 %v1208, %v1324
        %v1421 = vadd.f32 %v1209, %v1326
        %v1422 = vadd.f32 %v1210, %v1325
        %v1423 = vadd.f32 %v1211, %v1327
        %v1424 = vadd.f32 %v1212, %v1329
        %v1425 = vadd.f32 %v1213, %v1328
        %v1426 = vadd.f32 %v1214, %v1330
        %v1427 = vadd.f32 %v1215, %v1332
        %v1428 = vadd.f32 %v1216, %v1331
        %v1429 = vadd.f32 %v1217, %v1333
        %v1430 = vadd.f32 %v1218, %v1335
        %v1431 = vadd.f32 %v1219, %v1334
        %v1432 = vadd.f32 %v1220, %v1336
        %v1433 = vadd.f32 %v1221, %v1338
        %v1434 = vadd.f32 %v1222, %v1337
        %v1435 = vadd.f32 %v1223, %v1339
        %v1436 = vadd.f32 %v1224, %v1341
        %v1437 = vadd.f32 %v1225, %v1340
        %v1438 = vadd.f32 %v1226, %v1342
        %v1439 = vadd.f32 %v1227, %v1344
        %v1440 = vadd.f32 %v1228, %v1343
        %v1441 = vadd.f32 %v1229, %v1345
        %v1442 = vadd.f32 %v1230, %v1347
        %v1443 = vadd.f32 %v1231, %v1346
        %v1444 = vadd.f32 %v1232, %v1348
        %v1445 = vadd.f32 %v1233, %v1350
        %v1446 = vadd.f32 %v1234, %v1349
        %v1447 = vadd.f32 %v1235, %v1351
        %v1448 = vadd.f32 %v1236, %v1353
        %v1449 = vadd.f32 %v1237, %v1352
        %v1450 = vadd.f32 %v1238, %v1354
        %v1451 = vadd.f32 %v1239, %v1356
        %v1452 = vadd.f32 %v1240, %v1355
        %v1453 = vadd.f32 %v1241, %v1357
        %v1454 = vadd.f32 %v1242, %v1359
        %v1455 = vadd.f32 %v1243, %v1358
        %v1456 = vadd.f32 %v1244, %v1360
        %v1457 = vadd.f32 %v1245, %v1362
        %v1458 = vadd.f32 %v1246, %v1361
        %v1459 = vadd.f32 %v1247, %v1363
        %v1460 = vadd.f32 %v1248, %v1365
        %v1461 = vadd.f32 %v1249, %v1364
        %v1462 = vlaneseq
        %v1463 = vshrl.u32 %v1462, 7
        %v1464 = vsub.s32 5, %v1463
        %v1465 = vrot.slane %v606, %v1464
        %v1466 = vmul.f32 %v555, %v1465
        %v1467 = vmul.f32 %v556, %v1465
        %v1468 = vmul.f32 %v557, %v1465
        %v1469 = vmul.f32 %v558, %v1465
        %v1470 = vmul.f32 %v559, %v1465
        %v1471 = vmul.f32 %v560, %v1465
        %v1472 = vmul.f32 %v561, %v1465
        %v1473 = vmul.f32 %v562, %v1465
        %v1474 = vmul.f32 %v563, %v1465
        %v1475 = vmul.f32 %v564, %v1465
        %v1476 = vmul.f32 %v565, %v1465
        %v1477 = vmul.f32 %v566, %v1465
        %v1478 = vmul.f32 %v567, %v1465
        %v1479 = vmul.f32 %v568, %v1465
        %v1480 = vmul.f32 %v569, %v1465
        %v1481 = vmul.f32 %v570, %v1465
        %v1482 = vmul.f32 %v571, %v1465
        %v1483 = vmul.f32 %v572, %v1465
        %v1484 = vmul.f32 %v573, %v1465
        %v1485 = vmul.f32 %v574, %v1465
        %v1486 = vmul.f32 %v575, %v1465
        %v1487 = vmul.f32 %v576, %v1465
        %v1488 = vmul.f32 %v577, %v1465
        %v1489 = vmul.f32 %v578, %v1465
        %v1490 = vmul.f32 %v579, %v1465
        %v1491 = vmul.f32 %v580, %v1465
        %v1492 = vmul.f32 %v581, %v1465
        %v1493 = vmul.f32 %v582, %v1465
        %v1494 = vmul.f32 %v583, %v1465
        %v1495 = vmul.f32 %v584, %v1465
        %v1496 = vmul.f32 %v585, %v1465
        %v1497 = vmul.f32 %v586, %v1465
        %v1498 = vmul.f32 %v587, %v1465
        %v1499 = vmul.f32 %v588, %v1465
        %v1500 = vmul.f32 %v589, %v1465
        %v1501 = vmul.f32 %v590, %v1465
        %v1502 = vmul.f32 %v591, %v1465
        %v1503 = vmul.f32 %v592, %v1465
        %v1504 = vmul.f32 %v593, %v1465
        %v1505 = vmul.f32 %v594, %v1465
        %v1506 = vmul.f32 %v595, %v1465
        %v1507 = vmul.f32 %v596, %v1465
        %v1508 = vmul.f32 %v597, %v1465
        %v1509 = vmul.f32 %v598, %v1465
        %v1510 = vmul.f32 %v599, %v1465
        %v1511 = vmul.f32 %v600, %v1465
        %v1512 = vmul.f32 %v601, %v1465
        %v1513 = vmul.f32 %v602, %v1465
        %v1562 = vrot.slane %v1466, 1
        %v1563 = vrot.slane %v1467, 1
        %v1564 = vsel %vm1073, %v1562, %v1563
        %v1565 = vrot.slane %v1468, 1
        %v1566 = vsel %vm1073, %v1563, %v1565
        %v1567 = vrot.slane %v1469, 1
        %v1568 = vrot.slane %v1470, 1
        %v1569 = vsel %vm1073, %v1567, %v1568
        %v1570 = vrot.slane %v1471, 1
        %v1571 = vsel %vm1073, %v1568, %v1570
        %v1572 = vrot.slane %v1472, 1
        %v1573 = vrot.slane %v1473, 1
        %v1574 = vsel %vm1073, %v1572, %v1573
        %v1575 = vrot.slane %v1474, 1
        %v1576 = vsel %vm1073, %v1573, %v1575
        %v1577 = vrot.slane %v1475, 1
        %v1578 = vrot.slane %v1476, 1
        %v1579 = vsel %vm1073, %v1577, %v1578
        %v1580 = vrot.slane %v1477, 1
        %v1581 = vsel %vm1073, %v1578, %v1580
        %v1582 = vrot.slane %v1478, 1
        %v1583 = vrot.slane %v1479, 1
        %v1584 = vsel %vm1073, %v1582, %v1583
        %v1585 = vrot.slane %v1480, 1
        %v1586 = vsel %vm1073, %v1583, %v1585
        %v1587 = vrot.slane %v1481, 1
        %v1588 = vrot.slane %v1482, 1
        %v1589 = vsel %vm1073, %v1587, %v1588
        %v1590 = vrot.slane %v1483, 1
        %v1591 = vsel %vm1073, %v1588, %v1590
        %v1592 = vrot.slane %v1484, 1
        %v1593 = vrot.slane %v1485, 1
        %v1594 = vsel %vm1073, %v1592, %v1593
        %v1595 = vrot.slane %v1486, 1
        %v1596 = vsel %vm1073, %v1593, %v1595
        %v1597 = vrot.slane %v1487, 1
        %v1598 = vrot.slane %v1488, 1
        %v1599 = vsel %vm1073, %v1597, %v1598
        %v1600 = vrot.slane %v1489, 1
        %v1601 = vsel %vm1073, %v1598, %v1600
        %v1602 = vrot.slane %v1490, 1
        %v1603 = vrot.slane %v1491, 1
        %v1604 = vsel %vm1073, %v1602, %v1603
        %v1605 = vrot.slane %v1492, 1
        %v1606 = vsel %vm1073, %v1603, %v1605
        %v1607 = vrot.slane %v1493, 1
        %v1608 = vrot.slane %v1494, 1
        %v1609 = vsel %vm1073, %v1607, %v1608
        %v1610 = vrot.slane %v1495, 1
        %v1611 = vsel %vm1073, %v1608, %v1610
        %v1612 = vrot.slane %v1496, 1
        %v1613 = vrot.slane %v1497, 1
        %v1614 = vsel %vm1073, %v1612, %v1613
        %v1615 = vrot.slane %v1498, 1
        %v1616 = vsel %vm1073, %v1613, %v1615
        %v1617 = vrot.slane %v1499, 1
        %v1618 = vrot.slane %v1500, 1
        %v1619 = vsel %vm1073, %v1617, %v1618
        %v1620 = vrot.slane %v1501, 1
        %v1621 = vsel %vm1073, %v1618, %v1620
        %v1622 = vrot.slane %v1502, 1
        %v1623 = vrot.slane %v1503, 1
        %v1624 = vsel %vm1073, %v1622, %v1623
        %v1625 = vrot.slane %v1504, 1
        %v1626 = vsel %vm1073, %v1623, %v1625
        %v1627 = vrot.slane %v1505, 1
        %v1628 = vrot.slane %v1506, 1
        %v1629 = vsel %vm1073, %v1627, %v1628
        %v1630 = vrot.slane %v1507, 1
        %v1631 = vsel %vm1073, %v1628, %v1630
        %v1632 = vrot.slane %v1508, 1
        %v1633 = vrot.slane %v1509, 1
        %v1634 = vsel %vm1073, %v1632, %v1633
        %v1635 = vrot.slane %v1510, 1
        %v1636 = vsel %vm1073, %v1633, %v1635
        %v1637 = vrot.slane %v1511, 1
        %v1638 = vrot.slane %v1512, 1
        %v1639 = vsel %vm1073, %v1637, %v1638
        %v1640 = vrot.slane %v1513, 1
        %v1641 = vsel %vm1073, %v1638, %v1640
        %v1690 = vadd.f32 %v1414, %v1564
        %v1691 = vadd.f32 %v1415, %v1566
        %v1692 = vadd.f32 %v1416, %v1565
        %v1693 = vadd.f32 %v1417, %v1569
        %v1694 = vadd.f32 %v1418, %v1571
        %v1695 = vadd.f32 %v1419, %v1570
        %v1696 = vadd.f32 %v1420, %v1574
        %v1697 = vadd.f32 %v1421, %v1576
        %v1698 = vadd.f32 %v1422, %v1575
        %v1699 = vadd.f32 %v1423, %v1579
        %v1700 = vadd.f32 %v1424, %v1581
        %v1701 = vadd.f32 %v1425, %v1580
        %v1702 = vadd.f32 %v1426, %v1584
        %v1703 = vadd.f32 %v1427, %v1586
        %v1704 = vadd.f32 %v1428, %v1585
        %v1705 = vadd.f32 %v1429, %v1589
        %v1706 = vadd.f32 %v1430, %v1591
        %v1707 = vadd.f32 %v1431, %v1590
        %v1708 = vadd.f32 %v1432, %v1594
        %v1709 = vadd.f32 %v1433, %v1596
        %v1710 = vadd.f32 %v1434, %v1595
        %v1711 = vadd.f32 %v1435, %v1599
        %v1712 = vadd.f32 %v1436, %v1601
        %v1713 = vadd.f32 %v1437, %v1600
        %v1714 = vadd.f32 %v1438, %v1604
        %v1715 = vadd.f32 %v1439, %v1606
        %v1716 = vadd.f32 %v1440, %v1605
        %v1717 = vadd.f32 %v1441, %v1609
        %v1718 = vadd.f32 %v1442, %v1611
        %v1719 = vadd.f32 %v1443, %v1610
        %v1720 = vadd.f32 %v1444, %v1614
        %v1721 = vadd.f32 %v1445, %v1616
        %v1722 = vadd.f32 %v1446, %v1615
        %v1723 = vadd.f32 %v1447, %v1619
        %v1724 = vadd.f32 %v1448, %v1621
        %v1725 = vadd.f32 %v1449, %v1620
        %v1726 = vadd.f32 %v1450, %v1624
        %v1727 = vadd.f32 %v1451, %v1626
        %v1728 = vadd.f32 %v1452, %v1625
        %v1729 = vadd.f32 %v1453, %v1629
        %v1730 = vadd.f32 %v1454, %v1631
        %v1731 = vadd.f32 %v1455, %v1630
        %v1732 = vadd.f32 %v1456, %v1634
        %v1733 = vadd.f32 %v1457, %v1636
        %v1734 = vadd.f32 %v1458, %v1635
        %v1735 = vadd.f32 %v1459, %v1639
        %v1736 = vadd.f32 %v1460, %v1641
        %v1737 = vadd.f32 %v1461, %v1640
        %v1738 = vlaneseq
        %v1739 = vshrl.u32 %v1738, 7
        %v1740 = vsub.s32 6, %v1739
        %v1741 = vrot.slane %v606, %v1740
        %v1742 = vmul.f32 %v558, %v1741
        %v1743 = vmul.f32 %v559, %v1741
        %v1744 = vmul.f32 %v561, %v1741
        %v1745 = vmul.f32 %v562, %v1741
        %v1746 = vmul.f32 %v564, %v1741
        %v1747 = vmul.f32 %v565, %v1741
        %v1748 = vmul.f32 %v567, %v1741
        %v1749 = vmul.f32 %v568, %v1741
        %v1750 = vmul.f32 %v570, %v1741
        %v1751 = vmul.f32 %v571, %v1741
        %v1752 = vmul.f32 %v573, %v1741
        %v1753 = vmul.f32 %v574, %v1741
        %v1754 = vmul.f32 %v576, %v1741
        %v1755 = vmul.f32 %v577, %v1741
        %v1756 = vmul.f32 %v579, %v1741
        %v1757 = vmul.f32 %v580, %v1741
        %v1758 = vmul.f32 %v582, %v1741
        %v1759 = vmul.f32 %v583, %v1741
        %v1760 = vmul.f32 %v585, %v1741
        %v1761 = vmul.f32 %v586, %v1741
        %v1762 = vmul.f32 %v588, %v1741
        %v1763 = vmul.f32 %v589, %v1741
        %v1764 = vmul.f32 %v591, %v1741
        %v1765 = vmul.f32 %v592, %v1741
        %v1766 = vmul.f32 %v594, %v1741
        %v1767 = vmul.f32 %v595, %v1741
        %v1768 = vmul.f32 %v597, %v1741
        %v1769 = vmul.f32 %v598, %v1741
        %v1770 = vmul.f32 %v600, %v1741
        %v1771 = vmul.f32 %v601, %v1741
        %v1772 = vmul.f32 %v603, %v1741
        %v1773 = vmul.f32 %v604, %v1741
        %v1806 = vrot.slane %v1742, 7
        %v1807 = vrot.slane %v1743, 7
        %v1808 = vsel %vm728, %v1806, %v1807
        %v1809 = vrot.slane %v1744, 7
        %v1810 = vrot.slane %v1745, 7
        %v1811 = vsel %vm728, %v1809, %v1810
        %v1812 = vrot.slane %v1746, 7
        %v1813 = vrot.slane %v1747, 7
        %v1814 = vsel %vm728, %v1812, %v1813
        %v1815 = vrot.slane %v1748, 7
        %v1816 = vrot.slane %v1749, 7
        %v1817 = vsel %vm728, %v1815, %v1816
        %v1818 = vrot.slane %v1750, 7
        %v1819 = vrot.slane %v1751, 7
        %v1820 = vsel %vm728, %v1818, %v1819
        %v1821 = vrot.slane %v1752, 7
        %v1822 = vrot.slane %v1753, 7
        %v1823 = vsel %vm728, %v1821, %v1822
        %v1824 = vrot.slane %v1754, 7
        %v1825 = vrot.slane %v1755, 7
        %v1826 = vsel %vm728, %v1824, %v1825
        %v1827 = vrot.slane %v1756, 7
        %v1828 = vrot.slane %v1757, 7
        %v1829 = vsel %vm728, %v1827, %v1828
        %v1830 = vrot.slane %v1758, 7
        %v1831 = vrot.slane %v1759, 7
        %v1832 = vsel %vm728, %v1830, %v1831
        %v1833 = vrot.slane %v1760, 7
        %v1834 = vrot.slane %v1761, 7
        %v1835 = vsel %vm728, %v1833, %v1834
        %v1836 = vrot.slane %v1762, 7
        %v1837 = vrot.slane %v1763, 7
        %v1838 = vsel %vm728, %v1836, %v1837
        %v1839 = vrot.slane %v1764, 7
        %v1840 = vrot.slane %v1765, 7
        %v1841 = vsel %vm728, %v1839, %v1840
        %v1842 = vrot.slane %v1766, 7
        %v1843 = vrot.slane %v1767, 7
        %v1844 = vsel %vm728, %v1842, %v1843
        %v1845 = vrot.slane %v1768, 7
        %v1846 = vrot.slane %v1769, 7
        %v1847 = vsel %vm728, %v1845, %v1846
        %v1848 = vrot.slane %v1770, 7
        %v1849 = vrot.slane %v1771, 7
        %v1850 = vsel %vm728, %v1848, %v1849
        %v1851 = vrot.slane %v1772, 7
        %v1852 = vrot.slane %v1773, 7
        %v1853 = vsel %vm728, %v1851, %v1852
        %v1902 = vadd.f32 %v1690, %v1806
        %v1903 = vadd.f32 %v1691, %v1808
        %v1904 = vadd.f32 %v1692, %v1807
        %v1905 = vadd.f32 %v1693, %v1809
        %v1906 = vadd.f32 %v1694, %v1811
        %v1907 = vadd.f32 %v1695, %v1810
        %v1908 = vadd.f32 %v1696, %v1812
        %v1909 = vadd.f32 %v1697, %v1814
        %v1910 = vadd.f32 %v1698, %v1813
        %v1911 = vadd.f32 %v1699, %v1815
        %v1912 = vadd.f32 %v1700, %v1817
        %v1913 = vadd.f32 %v1701, %v1816
        %v1914 = vadd.f32 %v1702, %v1818
        %v1915 = vadd.f32 %v1703, %v1820
        %v1916 = vadd.f32 %v1704, %v1819
        %v1917 = vadd.f32 %v1705, %v1821
        %v1918 = vadd.f32 %v1706, %v1823
        %v1919 = vadd.f32 %v1707, %v1822
        %v1920 = vadd.f32 %v1708, %v1824
        %v1921 = vadd.f32 %v1709, %v1826
        %v1922 = vadd.f32 %v1710, %v1825
        %v1923 = vadd.f32 %v1711, %v1827
        %v1924 = vadd.f32 %v1712, %v1829
        %v1925 = vadd.f32 %v1713, %v1828
        %v1926 = vadd.f32 %v1714, %v1830
        %v1927 = vadd.f32 %v1715, %v1832
        %v1928 = vadd.f32 %v1716, %v1831
        %v1929 = vadd.f32 %v1717, %v1833
        %v1930 = vadd.f32 %v1718, %v1835
        %v1931 = vadd.f32 %v1719, %v1834
        %v1932 = vadd.f32 %v1720, %v1836
        %v1933 = vadd.f32 %v1721, %v1838
        %v1934 = vadd.f32 %v1722, %v1837
        %v1935 = vadd.f32 %v1723, %v1839
        %v1936 = vadd.f32 %v1724, %v1841
        %v1937 = vadd.f32 %v1725, %v1840
        %v1938 = vadd.f32 %v1726, %v1842
        %v1939 = vadd.f32 %v1727, %v1844
        %v1940 = vadd.f32 %v1728, %v1843
        %v1941 = vadd.f32 %v1729, %v1845
        %v1942 = vadd.f32 %v1730, %v1847
        %v1943 = vadd.f32 %v1731, %v1846
        %v1944 = vadd.f32 %v1732, %v1848
        %v1945 = vadd.f32 %v1733, %v1850
        %v1946 = vadd.f32 %v1734, %v1849
        %v1947 = vadd.f32 %v1735, %v1851
        %v1948 = vadd.f32 %v1736, %v1853
        %v1949 = vadd.f32 %v1737, %v1852
        %v1950 = vlaneseq
        %v1951 = vshrl.u32 %v1950, 7
        %v1952 = vsub.s32 7, %v1951
        %v1953 = vrot.slane %v606, %v1952
        %v1954 = vmul.f32 %v558, %v1953
        %v1955 = vmul.f32 %v559, %v1953
        %v1956 = vmul.f32 %v560, %v1953
        %v1957 = vmul.f32 %v561, %v1953
        %v1958 = vmul.f32 %v562, %v1953
        %v1959 = vmul.f32 %v563, %v1953
        %v1960 = vmul.f32 %v564, %v1953
        %v1961 = vmul.f32 %v565, %v1953
        %v1962 = vmul.f32 %v566, %v1953
        %v1963 = vmul.f32 %v567, %v1953
        %v1964 = vmul.f32 %v568, %v1953
        %v1965 = vmul.f32 %v569, %v1953
        %v1966 = vmul.f32 %v570, %v1953
        %v1967 = vmul.f32 %v571, %v1953
        %v1968 = vmul.f32 %v572, %v1953
        %v1969 = vmul.f32 %v573, %v1953
        %v1970 = vmul.f32 %v574, %v1953
        %v1971 = vmul.f32 %v575, %v1953
        %v1972 = vmul.f32 %v576, %v1953
        %v1973 = vmul.f32 %v577, %v1953
        %v1974 = vmul.f32 %v578, %v1953
        %v1975 = vmul.f32 %v579, %v1953
        %v1976 = vmul.f32 %v580, %v1953
        %v1977 = vmul.f32 %v581, %v1953
        %v1978 = vmul.f32 %v582, %v1953
        %v1979 = vmul.f32 %v583, %v1953
        %v1980 = vmul.f32 %v584, %v1953
        %v1981 = vmul.f32 %v585, %v1953
        %v1982 = vmul.f32 %v586, %v1953
        %v1983 = vmul.f32 %v587, %v1953
        %v1984 = vmul.f32 %v588, %v1953
        %v1985 = vmul.f32 %v589, %v1953
        %v1986 = vmul.f32 %v590, %v1953
        %v1987 = vmul.f32 %v591, %v1953
        %v1988 = vmul.f32 %v592, %v1953
        %v1989 = vmul.f32 %v593, %v1953
        %v1990 = vmul.f32 %v594, %v1953
        %v1991 = vmul.f32 %v595, %v1953
        %v1992 = vmul.f32 %v596, %v1953
        %v1993 = vmul.f32 %v597, %v1953
        %v1994 = vmul.f32 %v598, %v1953
        %v1995 = vmul.f32 %v599, %v1953
        %v1996 = vmul.f32 %v600, %v1953
        %v1997 = vmul.f32 %v601, %v1953
        %v1998 = vmul.f32 %v602, %v1953
        %v1999 = vmul.f32 %v603, %v1953
        %v2000 = vmul.f32 %v604, %v1953
        %v2001 = vmul.f32 %v605, %v1953
        %v2002 = vadd.f32 %v1902, %v1954
        %v2003 = vadd.f32 %v1903, %v1955
        %v2004 = vadd.f32 %v1904, %v1956
        %v2005 = vadd.f32 %v1905, %v1957
        %v2006 = vadd.f32 %v1906, %v1958
        %v2007 = vadd.f32 %v1907, %v1959
        %v2008 = vadd.f32 %v1908, %v1960
        %v2009 = vadd.f32 %v1909, %v1961
        %v2010 = vadd.f32 %v1910, %v1962
        %v2011 = vadd.f32 %v1911, %v1963
        %v2012 = vadd.f32 %v1912, %v1964
        %v2013 = vadd.f32 %v1913, %v1965
        %v2014 = vadd.f32 %v1914, %v1966
        %v2015 = vadd.f32 %v1915, %v1967
        %v2016 = vadd.f32 %v1916, %v1968
        %v2017 = vadd.f32 %v1917, %v1969
        %v2018 = vadd.f32 %v1918, %v1970
        %v2019 = vadd.f32 %v1919, %v1971
        %v2020 = vadd.f32 %v1920, %v1972
        %v2021 = vadd.f32 %v1921, %v1973
        %v2022 = vadd.f32 %v1922, %v1974
        %v2023 = vadd.f32 %v1923, %v1975
        %v2024 = vadd.f32 %v1924, %v1976
        %v2025 = vadd.f32 %v1925, %v1977
        %v2026 = vadd.f32 %v1926, %v1978
        %v2027 = vadd.f32 %v1927, %v1979
        %v2028 = vadd.f32 %v1928, %v1980
        %v2029 = vadd.f32 %v1929, %v1981
        %v2030 = vadd.f32 %v1930, %v1982
        %v2031 = vadd.f32 %v1931, %v1983
        %v2032 = vadd.f32 %v1932, %v1984
        %v2033 = vadd.f32 %v1933, %v1985
        %v2034 = vadd.f32 %v1934, %v1986
        %v2035 = vadd.f32 %v1935, %v1987
        %v2036 = vadd.f32 %v1936, %v1988
        %v2037 = vadd.f32 %v1937, %v1989
        %v2038 = vadd.f32 %v1938, %v1990
        %v2039 = vadd.f32 %v1939, %v1991
        %v2040 = vadd.f32 %v1940, %v1992
        %v2041 = vadd.f32 %v1941, %v1993
        %v2042 = vadd.f32 %v1942, %v1994
        %v2043 = vadd.f32 %v1943, %v1995
        %v2044 = vadd.f32 %v1944, %v1996
        %v2045 = vadd.f32 %v1945, %v1997
        %v2046 = vadd.f32 %v1946, %v1998
        %v2047 = vadd.f32 %v1947, %v1999
        %v2048 = vadd.f32 %v1948, %v2000
        %v2049 = vadd.f32 %v1949, %v2001
        %v2050 = vlaneseq
        %v2051 = vshrl.u32 %v2050, 7
        %v2052 = vsub.s32 0, %v2051
        %v2053 = vrot.slane %v607, %v2052
        %v2054 = vmul.f32 %v558, %v2053
        %v2055 = vmul.f32 %v559, %v2053
        %v2056 = vmul.f32 %v560, %v2053
        %v2057 = vmul.f32 %v561, %v2053
        %v2058 = vmul.f32 %v562, %v2053
        %v2059 = vmul.f32 %v563, %v2053
        %v2060 = vmul.f32 %v564, %v2053
        %v2061 = vmul.f32 %v565, %v2053
        %v2062 = vmul.f32 %v566, %v2053
        %v2063 = vmul.f32 %v567, %v2053
        %v2064 = vmul.f32 %v568, %v2053
        %v2065 = vmul.f32 %v569, %v2053
        %v2066 = vmul.f32 %v570, %v2053
        %v2067 = vmul.f32 %v571, %v2053
        %v2068 = vmul.f32 %v572, %v2053
        %v2069 = vmul.f32 %v573, %v2053
        %v2070 = vmul.f32 %v574, %v2053
        %v2071 = vmul.f32 %v575, %v2053
        %v2072 = vmul.f32 %v576, %v2053
        %v2073 = vmul.f32 %v577, %v2053
        %v2074 = vmul.f32 %v578, %v2053
        %v2075 = vmul.f32 %v579, %v2053
        %v2076 = vmul.f32 %v580, %v2053
        %v2077 = vmul.f32 %v581, %v2053
        %v2078 = vmul.f32 %v582, %v2053
        %v2079 = vmul.f32 %v583, %v2053
        %v2080 = vmul.f32 %v584, %v2053
        %v2081 = vmul.f32 %v585, %v2053
        %v2082 = vmul.f32 %v586, %v2053
        %v2083 = vmul.f32 %v587, %v2053
        %v2084 = vmul.f32 %v588, %v2053
        %v2085 = vmul.f32 %v589, %v2053
        %v2086 = vmul.f32 %v590, %v2053
        %v2087 = vmul.f32 %v591, %v2053
        %v2088 = vmul.f32 %v592, %v2053
        %v2089 = vmul.f32 %v593, %v2053
        %v2090 = vmul.f32 %v594, %v2053
        %v2091 = vmul.f32 %v595, %v2053
        %v2092 = vmul.f32 %v596, %v2053
        %v2093 = vmul.f32 %v597, %v2053
        %v2094 = vmul.f32 %v598, %v2053
        %v2095 = vmul.f32 %v599, %v2053
        %v2096 = vmul.f32 %v600, %v2053
        %v2097 = vmul.f32 %v601, %v2053
        %v2098 = vmul.f32 %v602, %v2053
        %v2099 = vmul.f32 %v603, %v2053
        %v2100 = vmul.f32 %v604, %v2053
        %v2101 = vmul.f32 %v605, %v2053
        %v2150 = vrot.slane %v2054, 1
        %v2151 = vrot.slane %v2055, 1
        %v2152 = vsel %vm1073, %v2150, %v2151
        %v2153 = vrot.slane %v2056, 1
        %v2154 = vsel %vm1073, %v2151, %v2153
        %v2155 = vrot.slane %v2057, 1
        %v2156 = vrot.slane %v2058, 1
        %v2157 = vsel %vm1073, %v2155, %v2156
        %v2158 = vrot.slane %v2059, 1
        %v2159 = vsel %vm1073, %v2156, %v2158
        %v2160 = vrot.slane %v2060, 1
        %v2161 = vrot.slane %v2061, 1
        %v2162 = vsel %vm1073, %v2160, %v2161
        %v2163 = vrot.slane %v2062, 1
        %v2164 = vsel %vm1073, %v2161, %v2163
        %v2165 = vrot.slane %v2063, 1
        %v2166 = vrot.slane %v2064, 1
        %v2167 = vsel %vm1073, %v2165, %v2166
        %v2168 = vrot.slane %v2065, 1
        %v2169 = vsel %vm1073, %v2166, %v2168
        %v2170 = vrot.slane %v2066, 1
        %v2171 = vrot.slane %v2067, 1
        %v2172 = vsel %vm1073, %v2170, %v2171
        %v2173 = vrot.slane %v2068, 1
        %v2174 = vsel %vm1073, %v2171, %v2173
        %v2175 = vrot.slane %v2069, 1
        %v2176 = vrot.slane %v2070, 1
        %v2177 = vsel %vm1073, %v2175, %v2176
        %v2178 = vrot.slane %v2071, 1
        %v2179 = vsel %vm1073, %v2176, %v2178
        %v2180 = vrot.slane %v2072, 1
        %v2181 = vrot.slane %v2073, 1
        %v2182 = vsel %vm1073, %v2180, %v2181
        %v2183 = vrot.slane %v2074, 1
        %v2184 = vsel %vm1073, %v2181, %v2183
        %v2185 = vrot.slane %v2075, 1
        %v2186 = vrot.slane %v2076, 1
        %v2187 = vsel %vm1073, %v2185, %v2186
        %v2188 = vrot.slane %v2077, 1
        %v2189 = vsel %vm1073, %v2186, %v2188
        %v2190 = vrot.slane %v2078, 1
        %v2191 = vrot.slane %v2079, 1
        %v2192 = vsel %vm1073, %v2190, %v2191
        %v2193 = vrot.slane %v2080, 1
        %v2194 = vsel %vm1073, %v2191, %v2193
        %v2195 = vrot.slane %v2081, 1
        %v2196 = vrot.slane %v2082, 1
        %v2197 = vsel %vm1073, %v2195, %v2196
        %v2198 = vrot.slane %v2083, 1
        %v2199 = vsel %vm1073, %v2196, %v2198
        %v2200 = vrot.slane %v2084, 1
        %v2201 = vrot.slane %v2085, 1
        %v2202 = vsel %vm1073, %v2200, %v2201
        %v2203 = vrot.slane %v2086, 1
        %v2204 = vsel %vm1073, %v2201, %v2203
        %v2205 = vrot.slane %v2087, 1
        %v2206 = vrot.slane %v2088, 1
        %v2207 = vsel %vm1073, %v2205, %v2206
        %v2208 = vrot.slane %v2089, 1
        %v2209 = vsel %vm1073, %v2206, %v2208
        %v2210 = vrot.slane %v2090, 1
        %v2211 = vrot.slane %v2091, 1
        %v2212 = vsel %vm1073, %v2210, %v2211
        %v2213 = vrot.slane %v2092, 1
        %v2214 = vsel %vm1073, %v2211, %v2213
        %v2215 = vrot.slane %v2093, 1
        %v2216 = vrot.slane %v2094, 1
        %v2217 = vsel %vm1073, %v2215, %v2216
        %v2218 = vrot.slane %v2095, 1
        %v2219 = vsel %vm1073, %v2216, %v2218
        %v2220 = vrot.slane %v2096, 1
        %v2221 = vrot.slane %v2097, 1
        %v2222 = vsel %vm1073, %v2220, %v2221
        %v2223 = vrot.slane %v2098, 1
        %v2224 = vsel %vm1073, %v2221, %v2223
        %v2225 = vrot.slane %v2099, 1
        %v2226 = vrot.slane %v2100, 1
        %v2227 = vsel %vm1073, %v2225, %v2226
        %v2228 = vrot.slane %v2101, 1
        %v2229 = vsel %vm1073, %v2226, %v2228
        %v2278 = vadd.f32 %v2002, %v2152
        %v2279 = vadd.f32 %v2003, %v2154
        %v2280 = vadd.f32 %v2004, %v2153
        %v2281 = vadd.f32 %v2005, %v2157
        %v2282 = vadd.f32 %v2006, %v2159
        %v2283 = vadd.f32 %v2007, %v2158
        %v2284 = vadd.f32 %v2008, %v2162
        %v2285 = vadd.f32 %v2009, %v2164
        %v2286 = vadd.f32 %v2010, %v2163
        %v2287 = vadd.f32 %v2011, %v2167
        %v2288 = vadd.f32 %v2012, %v2169
        %v2289 = vadd.f32 %v2013, %v2168
        %v2290 = vadd.f32 %v2014, %v2172
        %v2291 = vadd.f32 %v2015, %v2174
        %v2292 = vadd.f32 %v2016, %v2173
        %v2293 = vadd.f32 %v2017, %v2177
        %v2294 = vadd.f32 %v2018, %v2179
        %v2295 = vadd.f32 %v2019, %v2178
        %v2296 = vadd.f32 %v2020, %v2182
        %v2297 = vadd.f32 %v2021, %v2184
        %v2298 = vadd.f32 %v2022, %v2183
        %v2299 = vadd.f32 %v2023, %v2187
        %v2300 = vadd.f32 %v2024, %v2189
        %v2301 = vadd.f32 %v2025, %v2188
        %v2302 = vadd.f32 %v2026, %v2192
        %v2303 = vadd.f32 %v2027, %v2194
        %v2304 = vadd.f32 %v2028, %v2193
        %v2305 = vadd.f32 %v2029, %v2197
        %v2306 = vadd.f32 %v2030, %v2199
        %v2307 = vadd.f32 %v2031, %v2198
        %v2308 = vadd.f32 %v2032, %v2202
        %v2309 = vadd.f32 %v2033, %v2204
        %v2310 = vadd.f32 %v2034, %v2203
        %v2311 = vadd.f32 %v2035, %v2207
        %v2312 = vadd.f32 %v2036, %v2209
        %v2313 = vadd.f32 %v2037, %v2208
        %v2314 = vadd.f32 %v2038, %v2212
        %v2315 = vadd.f32 %v2039, %v2214
        %v2316 = vadd.f32 %v2040, %v2213
        %v2317 = vadd.f32 %v2041, %v2217
        %v2318 = vadd.f32 %v2042, %v2219
        %v2319 = vadd.f32 %v2043, %v2218
        %v2320 = vadd.f32 %v2044, %v2222
        %v2321 = vadd.f32 %v2045, %v2224
        %v2322 = vadd.f32 %v2046, %v2223
        %v2323 = vadd.f32 %v2047, %v2227
        %v2324 = vadd.f32 %v2048, %v2229
        %v2325 = vadd.f32 %v2049, %v2228
        %v2326 = vld [vmem:[%s266] sm:$0xff]
        %v2327 = vld [vmem:[%s266 + $0x8] sm:$0xff]
        %v2328 = vld [vmem:[%s266 + $0x10] sm:$0xff]
        %v2329 = vld [vmem:[%s266 + $0x18] sm:$0xff]
        %v2330 = vpack.c.bf16 %v2327, %v2326
        %v2331 = vpack.c.bf16 %v2329, %v2328
        %v2380 = vrot.slane %v2278, 1
        %v2381 = vrot.slane %v2279, 1
        %v2382 = vsel %vm1073, %v2380, %v2381
        %v2383 = vrot.slane %v2280, 1
        %v2384 = vsel %vm1073, %v2381, %v2383
        %v2385 = vrot.slane %v2281, 1
        %v2386 = vrot.slane %v2282, 1
        %v2387 = vsel %vm1073, %v2385, %v2386
        %v2388 = vrot.slane %v2283, 1
        %v2389 = vsel %vm1073, %v2386, %v2388
        %v2390 = vrot.slane %v2284, 1
        %v2391 = vrot.slane %v2285, 1
        %v2392 = vsel %vm1073, %v2390, %v2391
        %v2393 = vrot.slane %v2286, 1
        %v2394 = vsel %vm1073, %v2391, %v2393
        %v2395 = vrot.slane %v2287, 1
        %v2396 = vrot.slane %v2288, 1
        %v2397 = vsel %vm1073, %v2395, %v2396
        %v2398 = vrot.slane %v2289, 1
        %v2399 = vsel %vm1073, %v2396, %v2398
        %v2400 = vrot.slane %v2290, 1
        %v2401 = vrot.slane %v2291, 1
        %v2402 = vsel %vm1073, %v2400, %v2401
        %v2403 = vrot.slane %v2292, 1
        %v2404 = vsel %vm1073, %v2401, %v2403
        %v2405 = vrot.slane %v2293, 1
        %v2406 = vrot.slane %v2294, 1
        %v2407 = vsel %vm1073, %v2405, %v2406
        %v2408 = vrot.slane %v2295, 1
        %v2409 = vsel %vm1073, %v2406, %v2408
        %v2410 = vrot.slane %v2296, 1
        %v2411 = vrot.slane %v2297, 1
        %v2412 = vsel %vm1073, %v2410, %v2411
        %v2413 = vrot.slane %v2298, 1
        %v2414 = vsel %vm1073, %v2411, %v2413
        %v2415 = vrot.slane %v2299, 1
        %v2416 = vrot.slane %v2300, 1
        %v2417 = vsel %vm1073, %v2415, %v2416
        %v2418 = vrot.slane %v2301, 1
        %v2419 = vsel %vm1073, %v2416, %v2418
        %v2420 = vrot.slane %v2302, 1
        %v2421 = vrot.slane %v2303, 1
        %v2422 = vsel %vm1073, %v2420, %v2421
        %v2423 = vrot.slane %v2304, 1
        %v2424 = vsel %vm1073, %v2421, %v2423
        %v2425 = vrot.slane %v2305, 1
        %v2426 = vrot.slane %v2306, 1
        %v2427 = vsel %vm1073, %v2425, %v2426
        %v2428 = vrot.slane %v2307, 1
        %v2429 = vsel %vm1073, %v2426, %v2428
        %v2430 = vrot.slane %v2308, 1
        %v2431 = vrot.slane %v2309, 1
        %v2432 = vsel %vm1073, %v2430, %v2431
        %v2433 = vrot.slane %v2310, 1
        %v2434 = vsel %vm1073, %v2431, %v2433
        %v2435 = vrot.slane %v2311, 1
        %v2436 = vrot.slane %v2312, 1
        %v2437 = vsel %vm1073, %v2435, %v2436
        %v2438 = vrot.slane %v2313, 1
        %v2439 = vsel %vm1073, %v2436, %v2438
        %v2440 = vrot.slane %v2314, 1
        %v2441 = vrot.slane %v2315, 1
        %v2442 = vsel %vm1073, %v2440, %v2441
        %v2443 = vrot.slane %v2316, 1
        %v2444 = vsel %vm1073, %v2441, %v2443
        %v2445 = vrot.slane %v2317, 1
        %v2446 = vrot.slane %v2318, 1
        %v2447 = vsel %vm1073, %v2445, %v2446
        %v2448 = vrot.slane %v2319, 1
        %v2449 = vsel %vm1073, %v2446, %v2448
        %v2450 = vrot.slane %v2320, 1
        %v2451 = vrot.slane %v2321, 1
        %v2452 = vsel %vm1073, %v2450, %v2451
        %v2453 = vrot.slane %v2322, 1
        %v2454 = vsel %vm1073, %v2451, %v2453
        %v2455 = vrot.slane %v2323, 1
        %v2456 = vrot.slane %v2324, 1
        %v2457 = vsel %vm1073, %v2455, %v2456
        %v2458 = vrot.slane %v2325, 1
        %v2459 = vsel %vm1073, %v2456, %v2458
        %v2492 = vpack.c.bf16 %v2384, %v2382
        %v2493 = vpack.c.bf16 %v2389, %v2387
        %v2494 = vpack.c.bf16 %v2394, %v2392
        %v2495 = vpack.c.bf16 %v2399, %v2397
        %v2496 = vpack.c.bf16 %v2404, %v2402
        %v2497 = vpack.c.bf16 %v2409, %v2407
        %v2498 = vpack.c.bf16 %v2414, %v2412
        %v2499 = vpack.c.bf16 %v2419, %v2417
        %v2500 = vpack.c.bf16 %v2424, %v2422
        %v2501 = vpack.c.bf16 %v2429, %v2427
        %v2502 = vpack.c.bf16 %v2434, %v2432
        %v2503 = vpack.c.bf16 %v2439, %v2437
        %v2504 = vpack.c.bf16 %v2444, %v2442
        %v2505 = vpack.c.bf16 %v2449, %v2447
        %v2506 = vpack.c.bf16 %v2454, %v2452
        %v2507 = vpack.c.bf16 %v2459, %v2457
        %v2509 = vsel %vm519, %v2492, 0
        %v2512 = vsel %vm519, %v2493, 0
        %v2515 = vsel %vm519, %v2494, 0
        %v2518 = vsel %vm519, %v2495, 0
        %v2521 = vsel %vm519, %v2496, 0
        %v2524 = vsel %vm519, %v2497, 0
        %v2527 = vsel %vm519, %v2498, 0
        %v2530 = vsel %vm519, %v2499, 0
        %v2533 = vsel %vm519, %v2500, 0
        %v2536 = vsel %vm519, %v2501, 0
        %v2539 = vsel %vm519, %v2502, 0
        %v2542 = vsel %vm519, %v2503, 0
        %v2545 = vsel %vm519, %v2504, 0
        %v2548 = vsel %vm519, %v2505, 0
        %v2551 = vsel %vm519, %v2506, 0
        %v2554 = vsel %vm519, %v2507, 0
        %2556 = vmatprep.subr.bf16.mxu0 0
        %2557 = vmatpush1.bf16.msra.mxu0 %v2330
        %2558 = vmatprep.subr.bf16.mxu0 0
        %2559 = vmatpush1.bf16.msra.mxu0 %v2331
        %2560 = vmatprep.subr.bf16.mxu0 0
        %2561 = vmatpush1.bf16.msra.mxu0 0
        %2562 = vmatprep.subr.bf16.mxu0 0
        %2563 = vmatpush1.bf16.msra.mxu0 0
        %2564 = vmatprep.subr.bf16.mxu0 0
        %2565 = vmatpush1.bf16.msra.mxu0 0
        %2566 = vmatprep.subr.bf16.mxu0 0
        %2567 = vmatpush1.bf16.msra.mxu0 0
        %2568 = vmatprep.subr.bf16.mxu0 0
        %2569 = vmatpush1.bf16.msra.mxu0 0
        %2570 = vmatprep.subr.bf16.mxu0 0
        %2571 = vmatpush1.bf16.msra.mxu0 0
        %2572 = vmatprep.subr.bf16.mxu0 0
        %2573 = vmatpush1.bf16.msra.mxu0 0
        %2574 = vmatprep.subr.bf16.mxu0 0
        %2575 = vmatpush1.bf16.msra.mxu0 0
        %2576 = vmatprep.subr.bf16.mxu0 0
        %2577 = vmatpush1.bf16.msra.mxu0 0
        %2578 = vmatprep.subr.bf16.mxu0 0
        %2579 = vmatpush1.bf16.msra.mxu0 0
        %2580 = vmatprep.subr.bf16.mxu0 0
        %2581 = vmatpush1.bf16.msra.mxu0 0
        %2582 = vmatprep.subr.bf16.mxu0 0
        %2583 = vmatpush1.bf16.msra.mxu0 0
        %2584 = vmatprep.subr.bf16.mxu0 0
        %2585 = vmatpush1.bf16.msra.mxu0 0
        %2586 = vmatprep.subr.bf16.mxu0 0
        %2587 = vmatpush1.bf16.msra.mxu0 0
        %2588 = vmatprep.mubr.bf16.mxu0 0
        %2589 = vmatmul.mubr.bf16.gmra.mrb[0].mxu0 %v2509
        %v2590 = vpop.f32.mrb[0].mxu0
        %v2591 = vadd.f32 0.0, %v2590
        %v2592 = vpop.f32.mrb[0].mxu0
        %v2593 = vpop.f32.mrb[0].mxu0
        %v2594 = vadd.f32 0.0, %v2593
        %v2595 = vpop.f32.mrb[0].mxu0
        %2596 = vmatprep.mubr.bf16.mxu0 0
        %2597 = vmatmul.mubr.bf16.gmra.mrb[0].mxu0 %v2512
        %v2598 = vpop.f32.mrb[0].mxu0
        %v2599 = vadd.f32 0.0, %v2598
        %v2600 = vpop.f32.mrb[0].mxu0
        %v2601 = vpop.f32.mrb[0].mxu0
        %v2602 = vadd.f32 0.0, %v2601
        %v2603 = vpop.f32.mrb[0].mxu0
        %2604 = vmatprep.mubr.bf16.mxu0 0
        %2605 = vmatmul.mubr.bf16.gmra.mrb[0].mxu0 %v2515
        %v2606 = vpop.f32.mrb[0].mxu0
        %v2607 = vadd.f32 0.0, %v2606
        %v2608 = vpop.f32.mrb[0].mxu0
        %v2609 = vpop.f32.mrb[0].mxu0
        %v2610 = vadd.f32 0.0, %v2609
        %v2611 = vpop.f32.mrb[0].mxu0
        %2612 = vmatprep.mubr.bf16.mxu0 0
        %2613 = vmatmul.mubr.bf16.gmra.mrb[0].mxu0 %v2518
        %v2614 = vpop.f32.mrb[0].mxu0
        %v2615 = vadd.f32 0.0, %v2614
        %v2616 = vpop.f32.mrb[0].mxu0
        %v2617 = vpop.f32.mrb[0].mxu0
        %v2618 = vadd.f32 0.0, %v2617
        %v2619 = vpop.f32.mrb[0].mxu0
        %2620 = vmatprep.mubr.bf16.mxu0 0
        %2621 = vmatmul.mubr.bf16.gmra.mrb[0].mxu0 %v2521
        %v2622 = vpop.f32.mrb[0].mxu0
        %v2623 = vadd.f32 0.0, %v2622
        %v2624 = vpop.f32.mrb[0].mxu0
        %v2625 = vpop.f32.mrb[0].mxu0
        %v2626 = vadd.f32 0.0, %v2625
        %v2627 = vpop.f32.mrb[0].mxu0
        %2628 = vmatprep.mubr.bf16.mxu0 0
        %2629 = vmatmul.mubr.bf16.gmra.mrb[0].mxu0 %v2524
        %v2630 = vpop.f32.mrb[0].mxu0
        %v2631 = vadd.f32 0.0, %v2630
        %v2632 = vpop.f32.mrb[0].mxu0
        %v2633 = vpop.f32.mrb[0].mxu0
        %v2634 = vadd.f32 0.0, %v2633
        %v2635 = vpop.f32.mrb[0].mxu0
        %2636 = vmatprep.mubr.bf16.mxu0 0
        %2637 = vmatmul.mubr.bf16.gmra.mrb[0].mxu0 %v2527
        %v2638 = vpop.f32.mrb[0].mxu0
        %v2639 = vadd.f32 0.0, %v2638
        %v2640 = vpop.f32.mrb[0].mxu0
        %v2641 = vpop.f32.mrb[0].mxu0
        %v2642 = vadd.f32 0.0, %v2641
        %v2643 = vpop.f32.mrb[0].mxu0
        %2644 = vmatprep.mubr.bf16.mxu0 0
        %2645 = vmatmul.mubr.bf16.gmra.mrb[0].mxu0 %v2530
        %v2646 = vpop.f32.mrb[0].mxu0
        %v2647 = vadd.f32 0.0, %v2646
        %v2648 = vpop.f32.mrb[0].mxu0
        %v2649 = vpop.f32.mrb[0].mxu0
        %v2650 = vadd.f32 0.0, %v2649
        %v2651 = vpop.f32.mrb[0].mxu0
        %2652 = vmatprep.mubr.bf16.mxu0 0
        %2653 = vmatmul.mubr.bf16.gmra.mrb[0].mxu0 %v2533
        %v2654 = vpop.f32.mrb[0].mxu0
        %v2655 = vadd.f32 0.0, %v2654
        %v2656 = vpop.f32.mrb[0].mxu0
        %v2657 = vpop.f32.mrb[0].mxu0
        %v2658 = vadd.f32 0.0, %v2657
        %v2659 = vpop.f32.mrb[0].mxu0
        %2660 = vmatprep.mubr.bf16.mxu0 0
        %2661 = vmatmul.mubr.bf16.gmra.mrb[0].mxu0 %v2536
        %v2662 = vpop.f32.mrb[0].mxu0
        %v2663 = vadd.f32 0.0, %v2662
        %v2664 = vpop.f32.mrb[0].mxu0
        %v2665 = vpop.f32.mrb[0].mxu0
        %v2666 = vadd.f32 0.0, %v2665
        %v2667 = vpop.f32.mrb[0].mxu0
        %2668 = vmatprep.mubr.bf16.mxu0 0
        %2669 = vmatmul.mubr.bf16.gmra.mrb[0].mxu0 %v2539
        %v2670 = vpop.f32.mrb[0].mxu0
        %v2671 = vadd.f32 0.0, %v2670
        %v2672 = vpop.f32.mrb[0].mxu0
        %v2673 = vpop.f32.mrb[0].mxu0
        %v2674 = vadd.f32 0.0, %v2673
        %v2675 = vpop.f32.mrb[0].mxu0
        %2676 = vmatprep.mubr.bf16.mxu0 0
        %2677 = vmatmul.mubr.bf16.gmra.mrb[0].mxu0 %v2542
        %v2678 = vpop.f32.mrb[0].mxu0
        %v2679 = vadd.f32 0.0, %v2678
        %v2680 = vpop.f32.mrb[0].mxu0
        %v2681 = vpop.f32.mrb[0].mxu0
        %v2682 = vadd.f32 0.0, %v2681
        %v2683 = vpop.f32.mrb[0].mxu0
        %2684 = vmatprep.mubr.bf16.mxu0 0
        %2685 = vmatmul.mubr.bf16.gmra.mrb[0].mxu0 %v2545
        %v2686 = vpop.f32.mrb[0].mxu0
        %v2687 = vadd.f32 0.0, %v2686
        %v2688 = vpop.f32.mrb[0].mxu0
        %v2689 = vpop.f32.mrb[0].mxu0
        %v2690 = vadd.f32 0.0, %v2689
        %v2691 = vpop.f32.mrb[0].mxu0
        %2692 = vmatprep.mubr.bf16.mxu0 0
        %2693 = vmatmul.mubr.bf16.gmra.mrb[0].mxu0 %v2548
        %v2694 = vpop.f32.mrb[0].mxu0
        %v2695 = vadd.f32 0.0, %v2694
        %v2696 = vpop.f32.mrb[0].mxu0
        %v2697 = vpop.f32.mrb[0].mxu0
        %v2698 = vadd.f32 0.0, %v2697
        %v2699 = vpop.f32.mrb[0].mxu0
        %2700 = vmatprep.mubr.bf16.mxu0 0
        %2701 = vmatmul.mubr.bf16.gmra.mrb[0].mxu0 %v2551
        %v2702 = vpop.f32.mrb[0].mxu0
        %v2703 = vadd.f32 0.0, %v2702
        %v2704 = vpop.f32.mrb[0].mxu0
        %v2705 = vpop.f32.mrb[0].mxu0
        %v2706 = vadd.f32 0.0, %v2705
        %v2707 = vpop.f32.mrb[0].mxu0
        %2708 = vmatprep.mubr.bf16.mxu0 0
        %2709 = vmatmul.mubr.bf16.gmra.mrb[0].mxu0 %v2554
        %v2710 = vpop.f32.mrb[0].mxu0
        %v2711 = vadd.f32 0.0, %v2710
        %v2712 = vpop.f32.mrb[0].mxu0
        %v2713 = vpop.f32.mrb[0].mxu0
        %v2714 = vadd.f32 0.0, %v2713
        %v2715 = vpop.f32.mrb[0].mxu0
        %2716 = vdwg.mxu0
        %v2717 = vld [vmem:[%s324] sm:$0x1]
        %v2718 = vlaneseq
        %v2719 = vshrl.u32 %v2718, 7
        %v2720 = vsub.s32 0, %v2719
        %v2721 = vrot.slane %v2717, %v2720
        %v2722 = vmul.f32 %v2591, %v2721
        %v2723 = vmul.f32 %v2594, %v2721
        %v2724 = vmul.f32 %v2599, %v2721
        %v2725 = vmul.f32 %v2602, %v2721
        %v2726 = vmul.f32 %v2607, %v2721
        %v2727 = vmul.f32 %v2610, %v2721
        %v2728 = vmul.f32 %v2615, %v2721
        %v2729 = vmul.f32 %v2618, %v2721
        %v2730 = vmul.f32 %v2623, %v2721
        %v2731 = vmul.f32 %v2626, %v2721
        %v2732 = vmul.f32 %v2631, %v2721
        %v2733 = vmul.f32 %v2634, %v2721
        %v2734 = vmul.f32 %v2639, %v2721
        %v2735 = vmul.f32 %v2642, %v2721
        %v2736 = vmul.f32 %v2647, %v2721
        %v2737 = vmul.f32 %v2650, %v2721
        %v2738 = vmul.f32 %v2655, %v2721
        %v2739 = vmul.f32 %v2658, %v2721
        %v2740 = vmul.f32 %v2663, %v2721
        %v2741 = vmul.f32 %v2666, %v2721
        %v2742 = vmul.f32 %v2671, %v2721
        %v2743 = vmul.f32 %v2674, %v2721
        %v2744 = vmul.f32 %v2679, %v2721
        %v2745 = vmul.f32 %v2682, %v2721
        %v2746 = vmul.f32 %v2687, %v2721
        %v2747 = vmul.f32 %v2690, %v2721
        %v2748 = vmul.f32 %v2695, %v2721
        %v2749 = vmul.f32 %v2698, %v2721
        %v2750 = vmul.f32 %v2703, %v2721
        %v2751 = vmul.f32 %v2706, %v2721
        %v2752 = vmul.f32 %v2711, %v2721
        %v2753 = vmul.f32 %v2714, %v2721
        %v2754 = vld [vmem:[%s328] sm:$0x1]
        %v2755 = vlaneseq
        %v2756 = vshrl.u32 %v2755, 7
        %v2757 = vsub.s32 0, %v2756
        %v2758 = vrot.slane %v2754, %v2757
        %v2759 = vadd.f32 %v2722, %v2758
        %v2760 = vadd.f32 %v2723, %v2758
        %v2761 = vadd.f32 %v2724, %v2758
        %v2762 = vadd.f32 %v2725, %v2758
        %v2763 = vadd.f32 %v2726, %v2758
        %v2764 = vadd.f32 %v2727, %v2758
        %v2765 = vadd.f32 %v2728, %v2758
        %v2766 = vadd.f32 %v2729, %v2758
        %v2767 = vadd.f32 %v2730, %v2758
        %v2768 = vadd.f32 %v2731, %v2758
        %v2769 = vadd.f32 %v2732, %v2758
        %v2770 = vadd.f32 %v2733, %v2758
        %v2771 = vadd.f32 %v2734, %v2758
        %v2772 = vadd.f32 %v2735, %v2758
        %v2773 = vadd.f32 %v2736, %v2758
        %v2774 = vadd.f32 %v2737, %v2758
        %v2775 = vadd.f32 %v2738, %v2758
        %v2776 = vadd.f32 %v2739, %v2758
        %v2777 = vadd.f32 %v2740, %v2758
        %v2778 = vadd.f32 %v2741, %v2758
        %v2779 = vadd.f32 %v2742, %v2758
        %v2780 = vadd.f32 %v2743, %v2758
        %v2781 = vadd.f32 %v2744, %v2758
        %v2782 = vadd.f32 %v2745, %v2758
        %v2783 = vadd.f32 %v2746, %v2758
        %v2784 = vadd.f32 %v2747, %v2758
        %v2785 = vadd.f32 %v2748, %v2758
        %v2786 = vadd.f32 %v2749, %v2758
        %v2787 = vadd.f32 %v2750, %v2758
        %v2788 = vadd.f32 %v2751, %v2758
        %v2789 = vadd.f32 %v2752, %v2758
        %v2790 = vadd.f32 %v2753, %v2758
        %v2791 = vmax.f32 %v2759, 0.0
        %v2792 = vmax.f32 %v2760, 0.0
        %v2793 = vmax.f32 %v2761, 0.0
        %v2794 = vmax.f32 %v2762, 0.0
        %v2795 = vmax.f32 %v2763, 0.0
        %v2796 = vmax.f32 %v2764, 0.0
        %v2797 = vmax.f32 %v2765, 0.0
        %v2798 = vmax.f32 %v2766, 0.0
        %v2799 = vmax.f32 %v2767, 0.0
        %v2800 = vmax.f32 %v2768, 0.0
        %v2801 = vmax.f32 %v2769, 0.0
        %v2802 = vmax.f32 %v2770, 0.0
        %v2803 = vmax.f32 %v2771, 0.0
        %v2804 = vmax.f32 %v2772, 0.0
        %v2805 = vmax.f32 %v2773, 0.0
        %v2806 = vmax.f32 %v2774, 0.0
        %v2807 = vmax.f32 %v2775, 0.0
        %v2808 = vmax.f32 %v2776, 0.0
        %v2809 = vmax.f32 %v2777, 0.0
        %v2810 = vmax.f32 %v2778, 0.0
        %v2811 = vmax.f32 %v2779, 0.0
        %v2812 = vmax.f32 %v2780, 0.0
        %v2813 = vmax.f32 %v2781, 0.0
        %v2814 = vmax.f32 %v2782, 0.0
        %v2815 = vmax.f32 %v2783, 0.0
        %v2816 = vmax.f32 %v2784, 0.0
        %v2817 = vmax.f32 %v2785, 0.0
        %v2818 = vmax.f32 %v2786, 0.0
        %v2819 = vmax.f32 %v2787, 0.0
        %v2820 = vmax.f32 %v2788, 0.0
        %v2821 = vmax.f32 %v2789, 0.0
        %v2822 = vmax.f32 %v2790, 0.0
        %2823 = vst.msk [vmem:[%s518 + $0x1] sm:$0xff] %vm519, %v2791
        %2824 = vst.msk [vmem:[%s518 + $0x9] sm:$0xff] %vm519, %v2792
        %2825 = vst.msk [vmem:[%s518 + $0x19] sm:$0xff] %vm519, %v2793
        %2826 = vst.msk [vmem:[%s518 + $0x21] sm:$0xff] %vm519, %v2794
        %2827 = vst.msk [vmem:[%s518 + $0x31] sm:$0xff] %vm519, %v2795
        %2828 = vst.msk [vmem:[%s518 + $0x39] sm:$0xff] %vm519, %v2796
        %2829 = vst.msk [vmem:[%s518 + $0x49] sm:$0xff] %vm519, %v2797
        %2830 = vst.msk [vmem:[%s518 + $0x51] sm:$0xff] %vm519, %v2798
        %2831 = vst.msk [vmem:[%s518 + $0x61] sm:$0xff] %vm519, %v2799
        %2832 = vst.msk [vmem:[%s518 + $0x69] sm:$0xff] %vm519, %v2800
        %2833 = vst.msk [vmem:[%s518 + $0x79] sm:$0xff] %vm519, %v2801
        %2834 = vst.msk [vmem:[%s518 + $0x81] sm:$0xff] %vm519, %v2802
        %2835 = vst.msk [vmem:[%s518 + $0x91] sm:$0xff] %vm519, %v2803
        %2836 = vst.msk [vmem:[%s518 + $0x99] sm:$0xff] %vm519, %v2804
        %2837 = vst.msk [vmem:[%s518 + $0xa9] sm:$0xff] %vm519, %v2805
        %2838 = vst.msk [vmem:[%s518 + $0xb1] sm:$0xff] %vm519, %v2806
        %2839 = vst.msk [vmem:[%s518 + $0xc1] sm:$0xff] %vm519, %v2807
        %2840 = vst.msk [vmem:[%s518 + $0xc9] sm:$0xff] %vm519, %v2808
        %2841 = vst.msk [vmem:[%s518 + $0xd9] sm:$0xff] %vm519, %v2809
        %2842 = vst.msk [vmem:[%s518 + $0xe1] sm:$0xff] %vm519, %v2810
        %2843 = vst.msk [vmem:[%s518 + $0xf1] sm:$0xff] %vm519, %v2811
        %2844 = vst.msk [vmem:[%s518 + $0xf9] sm:$0xff] %vm519, %v2812
        %2845 = vst.msk [vmem:[%s518 + $0x109] sm:$0xff] %vm519, %v2813
        %2846 = vst.msk [vmem:[%s518 + $0x111] sm:$0xff] %vm519, %v2814
        %2847 = vst.msk [vmem:[%s518 + $0x121] sm:$0xff] %vm519, %v2815
        %2848 = vst.msk [vmem:[%s518 + $0x129] sm:$0xff] %vm519, %v2816
        %2849 = vst.msk [vmem:[%s518 + $0x139] sm:$0xff] %vm519, %v2817
        %2850 = vst.msk [vmem:[%s518 + $0x141] sm:$0xff] %vm519, %v2818
        %2851 = vst.msk [vmem:[%s518 + $0x151] sm:$0xff] %vm519, %v2819
        %2852 = vst.msk [vmem:[%s518 + $0x159] sm:$0xff] %vm519, %v2820
        %2853 = vst.msk [vmem:[%s518 + $0x169] sm:$0xff] %vm519, %v2821
        %2854 = vst.msk [vmem:[%s518 + $0x171] sm:$0xff] %vm519, %v2822
        %v2855 = vld [vmem:[#allocation2] sm:$0xff]
        %v2856 = vld [vmem:[#allocation2 + $0x8] sm:$0xff]
        %v2857 = vld [vmem:[#allocation2 + $0x10] sm:$0x3]
        %v2858 = vld [vmem:[#allocation2 + $0x18] sm:$0xff]
        %v2859 = vld [vmem:[#allocation2 + $0x20] sm:$0xff]
        %v2860 = vld [vmem:[#allocation2 + $0x28] sm:$0x3]
        %v2861 = vld [vmem:[#allocation2 + $0x30] sm:$0xff]
        %v2862 = vld [vmem:[#allocation2 + $0x38] sm:$0xff]
        %v2863 = vld [vmem:[#allocation2 + $0x40] sm:$0x3]
        %v2864 = vld [vmem:[#allocation2 + $0x48] sm:$0xff]
        %v2865 = vld [vmem:[#allocation2 + $0x50] sm:$0xff]
        %v2866 = vld [vmem:[#allocation2 + $0x58] sm:$0x3]
        %v2867 = vld [vmem:[#allocation2 + $0x60] sm:$0xff]
        %v2868 = vld [vmem:[#allocation2 + $0x68] sm:$0xff]
        %v2869 = vld [vmem:[#allocation2 + $0x70] sm:$0x3]
        %v2870 = vld [vmem:[#allocation2 + $0x78] sm:$0xff]
        %v2871 = vld [vmem:[#allocation2 + $0x80] sm:$0xff]
        %v2872 = vld [vmem:[#allocation2 + $0x88] sm:$0x3]
        %v2873 = vld [vmem:[#allocation2 + $0x90] sm:$0xff]
        %v2874 = vld [vmem:[#allocation2 + $0x98] sm:$0xff]
        %v2875 = vld [vmem:[#allocation2 + $0xa0] sm:$0x3]
        %v2876 = vld [vmem:[#allocation2 + $0xa8] sm:$0xff]
        %v2877 = vld [vmem:[#allocation2 + $0xb0] sm:$0xff]
        %v2878 = vld [vmem:[#allocation2 + $0xb8] sm:$0x3]
        %v2879 = vld [vmem:[#allocation2 + $0xc0] sm:$0xff]
        %v2880 = vld [vmem:[#allocation2 + $0xc8] sm:$0xff]
        %v2881 = vld [vmem:[#allocation2 + $0xd0] sm:$0x3]
        %v2882 = vld [vmem:[#allocation2 + $0xd8] sm:$0xff]
        %v2883 = vld [vmem:[#allocation2 + $0xe0] sm:$0xff]
        %v2884 = vld [vmem:[#allocation2 + $0xe8] sm:$0x3]
        %v2885 = vld [vmem:[#allocation2 + $0xf0] sm:$0xff]
        %v2886 = vld [vmem:[#allocation2 + $0xf8] sm:$0xff]
        %v2887 = vld [vmem:[#allocation2 + $0x100] sm:$0x3]
        %v2888 = vld [vmem:[#allocation2 + $0x108] sm:$0xff]
        %v2889 = vld [vmem:[#allocation2 + $0x110] sm:$0xff]
        %v2890 = vld [vmem:[#allocation2 + $0x118] sm:$0x3]
        %v2891 = vld [vmem:[#allocation2 + $0x120] sm:$0xff]
        %v2892 = vld [vmem:[#allocation2 + $0x128] sm:$0xff]
        %v2893 = vld [vmem:[#allocation2 + $0x130] sm:$0x3]
        %v2894 = vld [vmem:[#allocation2 + $0x138] sm:$0xff]
        %v2895 = vld [vmem:[#allocation2 + $0x140] sm:$0xff]
        %v2896 = vld [vmem:[#allocation2 + $0x148] sm:$0x3]
        %v2897 = vld [vmem:[#allocation2 + $0x150] sm:$0xff]
        %v2898 = vld [vmem:[#allocation2 + $0x158] sm:$0xff]
        %v2899 = vld [vmem:[#allocation2 + $0x160] sm:$0x3]
        %v2900 = vld [vmem:[#allocation2 + $0x168] sm:$0xff]
        %v2901 = vld [vmem:[#allocation2 + $0x170] sm:$0xff]
        %v2902 = vld [vmem:[#allocation2 + $0x178] sm:$0x3]
        %v2903 = vld [vmem:[#allocation2 + $0x180] sm:$0xff]
        %v2904 = vld [vmem:[#allocation2 + $0x188] sm:$0xff]
        %v2905 = vld [vmem:[#allocation2 + $0x190] sm:$0x3]
        %v2906 = vld [vmem:[#allocation2 + $0x198] sm:$0xff]
        %v2907 = vld [vmem:[#allocation2 + $0x1a0] sm:$0xff]
        %v2908 = vld [vmem:[#allocation2 + $0x1a8] sm:$0x3]
        %s2909 = scalar_lea.vmem %s320, 16
        %v2910 = vld [vmem:[%s2909] sm:$0xff]
        %v2911 = vld [vmem:[%s2909 + $0x8] sm:$0x1]
        %v2912 = vlaneseq
        %v2913 = vshrl.u32 %v2912, 7
        %v2914 = vsub.s32 4, %v2913
        %v2915 = vrot.slane %v2910, %v2914
        %v2916 = vmul.f32 %v2858, %v2915
        %v2917 = vmul.f32 %v2859, %v2915
        %v2918 = vmul.f32 %v2860, %v2915
        %v2919 = vmul.f32 %v2861, %v2915
        %v2920 = vmul.f32 %v2862, %v2915
        %v2921 = vmul.f32 %v2863, %v2915
        %v2922 = vmul.f32 %v2864, %v2915
        %v2923 = vmul.f32 %v2865, %v2915
        %v2924 = vmul.f32 %v2866, %v2915
        %v2925 = vmul.f32 %v2867, %v2915
        %v2926 = vmul.f32 %v2868, %v2915
        %v2927 = vmul.f32 %v2869, %v2915
        %v2928 = vmul.f32 %v2870, %v2915
        %v2929 = vmul.f32 %v2871, %v2915
        %v2930 = vmul.f32 %v2872, %v2915
        %v2931 = vmul.f32 %v2873, %v2915
        %v2932 = vmul.f32 %v2874, %v2915
        %v2933 = vmul.f32 %v2875, %v2915
        %v2934 = vmul.f32 %v2876, %v2915
        %v2935 = vmul.f32 %v2877, %v2915
        %v2936 = vmul.f32 %v2878, %v2915
        %v2937 = vmul.f32 %v2879, %v2915
        %v2938 = vmul.f32 %v2880, %v2915
        %v2939 = vmul.f32 %v2881, %v2915
        %v2940 = vmul.f32 %v2882, %v2915
        %v2941 = vmul.f32 %v2883, %v2915
        %v2942 = vmul.f32 %v2884, %v2915
        %v2943 = vmul.f32 %v2885, %v2915
        %v2944 = vmul.f32 %v2886, %v2915
        %v2945 = vmul.f32 %v2887, %v2915
        %v2946 = vmul.f32 %v2888, %v2915
        %v2947 = vmul.f32 %v2889, %v2915
        %v2948 = vmul.f32 %v2890, %v2915
        %v2949 = vmul.f32 %v2891, %v2915
        %v2950 = vmul.f32 %v2892, %v2915
        %v2951 = vmul.f32 %v2893, %v2915
        %v2952 = vmul.f32 %v2894, %v2915
        %v2953 = vmul.f32 %v2895, %v2915
        %v2954 = vmul.f32 %v2896, %v2915
        %v2955 = vmul.f32 %v2897, %v2915
        %v2956 = vmul.f32 %v2898, %v2915
        %v2957 = vmul.f32 %v2899, %v2915
        %v2958 = vmul.f32 %v2900, %v2915
        %v2959 = vmul.f32 %v2901, %v2915
        %v2960 = vmul.f32 %v2902, %v2915
        %v2961 = vmul.f32 %v2903, %v2915
        %v2962 = vmul.f32 %v2904, %v2915
        %v2963 = vmul.f32 %v2905, %v2915
        %v2964 = vlaneseq
        %v2965 = vshrl.u32 %v2964, 7
        %v2966 = vsub.s32 0, %v2965
        %v2967 = vrot.slane %v2910, %v2966
        %v2968 = vmul.f32 %v2855, %v2967
        %v2969 = vmul.f32 %v2856, %v2967
        %v2970 = vmul.f32 %v2858, %v2967
        %v2971 = vmul.f32 %v2859, %v2967
        %v2972 = vmul.f32 %v2861, %v2967
        %v2973 = vmul.f32 %v2862, %v2967
        %v2974 = vmul.f32 %v2864, %v2967
        %v2975 = vmul.f32 %v2865, %v2967
        %v2976 = vmul.f32 %v2867, %v2967
        %v2977 = vmul.f32 %v2868, %v2967
        %v2978 = vmul.f32 %v2870, %v2967
        %v2979 = vmul.f32 %v2871, %v2967
        %v2980 = vmul.f32 %v2873, %v2967
        %v2981 = vmul.f32 %v2874, %v2967
        %v2982 = vmul.f32 %v2876, %v2967
        %v2983 = vmul.f32 %v2877, %v2967
        %v2984 = vmul.f32 %v2879, %v2967
        %v2985 = vmul.f32 %v2880, %v2967
        %v2986 = vmul.f32 %v2882, %v2967
        %v2987 = vmul.f32 %v2883, %v2967
        %v2988 = vmul.f32 %v2885, %v2967
        %v2989 = vmul.f32 %v2886, %v2967
        %v2990 = vmul.f32 %v2888, %v2967
        %v2991 = vmul.f32 %v2889, %v2967
        %v2992 = vmul.f32 %v2891, %v2967
        %v2993 = vmul.f32 %v2892, %v2967
        %v2994 = vmul.f32 %v2894, %v2967
        %v2995 = vmul.f32 %v2895, %v2967
        %v2996 = vmul.f32 %v2897, %v2967
        %v2997 = vmul.f32 %v2898, %v2967
        %v2998 = vmul.f32 %v2900, %v2967
        %v2999 = vmul.f32 %v2901, %v2967
        %v3032 = vrot.slane %v2968, 7
        %v3033 = vrot.slane %v2969, 7
        %v3034 = vsel %vm728, %v3032, %v3033
        %v3035 = vrot.slane %v2970, 7
        %v3036 = vrot.slane %v2971, 7
        %v3037 = vsel %vm728, %v3035, %v3036
        %v3038 = vrot.slane %v2972, 7
        %v3039 = vrot.slane %v2973, 7
        %v3040 = vsel %vm728, %v3038, %v3039
        %v3041 = vrot.slane %v2974, 7
        %v3042 = vrot.slane %v2975, 7
        %v3043 = vsel %vm728, %v3041, %v3042
        %v3044 = vrot.slane %v2976, 7
        %v3045 = vrot.slane %v2977, 7
        %v3046 = vsel %vm728, %v3044, %v3045
        %v3047 = vrot.slane %v2978, 7
        %v3048 = vrot.slane %v2979, 7
        %v3049 = vsel %vm728, %v3047, %v3048
        %v3050 = vrot.slane %v2980, 7
        %v3051 = vrot.slane %v2981, 7
        %v3052 = vsel %vm728, %v3050, %v3051
        %v3053 = vrot.slane %v2982, 7
        %v3054 = vrot.slane %v2983, 7
        %v3055 = vsel %vm728, %v3053, %v3054
        %v3056 = vrot.slane %v2984, 7
        %v3057 = vrot.slane %v2985, 7
        %v3058 = vsel %vm728, %v3056, %v3057
        %v3059 = vrot.slane %v2986, 7
        %v3060 = vrot.slane %v2987, 7
        %v3061 = vsel %vm728, %v3059, %v3060
        %v3062 = vrot.slane %v2988, 7
        %v3063 = vrot.slane %v2989, 7
        %v3064 = vsel %vm728, %v3062, %v3063
        %v3065 = vrot.slane %v2990, 7
        %v3066 = vrot.slane %v2991, 7
        %v3067 = vsel %vm728, %v3065, %v3066
        %v3068 = vrot.slane %v2992, 7
        %v3069 = vrot.slane %v2993, 7
        %v3070 = vsel %vm728, %v3068, %v3069
        %v3071 = vrot.slane %v2994, 7
        %v3072 = vrot.slane %v2995, 7
        %v3073 = vsel %vm728, %v3071, %v3072
        %v3074 = vrot.slane %v2996, 7
        %v3075 = vrot.slane %v2997, 7
        %v3076 = vsel %vm728, %v3074, %v3075
        %v3077 = vrot.slane %v2998, 7
        %v3078 = vrot.slane %v2999, 7
        %v3079 = vsel %vm728, %v3077, %v3078
        %v3128 = vadd.f32 %v2916, %v3032
        %v3129 = vadd.f32 %v2917, %v3034
        %v3130 = vadd.f32 %v2918, %v3033
        %v3131 = vadd.f32 %v2919, %v3035
        %v3132 = vadd.f32 %v2920, %v3037
        %v3133 = vadd.f32 %v2921, %v3036
        %v3134 = vadd.f32 %v2922, %v3038
        %v3135 = vadd.f32 %v2923, %v3040
        %v3136 = vadd.f32 %v2924, %v3039
        %v3137 = vadd.f32 %v2925, %v3041
        %v3138 = vadd.f32 %v2926, %v3043
        %v3139 = vadd.f32 %v2927, %v3042
        %v3140 = vadd.f32 %v2928, %v3044
        %v3141 = vadd.f32 %v2929, %v3046
        %v3142 = vadd.f32 %v2930, %v3045
        %v3143 = vadd.f32 %v2931, %v3047
        %v3144 = vadd.f32 %v2932, %v3049
        %v3145 = vadd.f32 %v2933, %v3048
        %v3146 = vadd.f32 %v2934, %v3050
        %v3147 = vadd.f32 %v2935, %v3052
        %v3148 = vadd.f32 %v2936, %v3051
        %v3149 = vadd.f32 %v2937, %v3053
        %v3150 = vadd.f32 %v2938, %v3055
        %v3151 = vadd.f32 %v2939, %v3054
        %v3152 = vadd.f32 %v2940, %v3056
        %v3153 = vadd.f32 %v2941, %v3058
        %v3154 = vadd.f32 %v2942, %v3057
        %v3155 = vadd.f32 %v2943, %v3059
        %v3156 = vadd.f32 %v2944, %v3061
        %v3157 = vadd.f32 %v2945, %v3060
        %v3158 = vadd.f32 %v2946, %v3062
        %v3159 = vadd.f32 %v2947, %v3064
        %v3160 = vadd.f32 %v2948, %v3063
        %v3161 = vadd.f32 %v2949, %v3065
        %v3162 = vadd.f32 %v2950, %v3067
        %v3163 = vadd.f32 %v2951, %v3066
        %v3164 = vadd.f32 %v2952, %v3068
        %v3165 = vadd.f32 %v2953, %v3070
        %v3166 = vadd.f32 %v2954, %v3069
        %v3167 = vadd.f32 %v2955, %v3071
        %v3168 = vadd.f32 %v2956, %v3073
        %v3169 = vadd.f32 %v2957, %v3072
        %v3170 = vadd.f32 %v2958, %v3074
        %v3171 = vadd.f32 %v2959, %v3076
        %v3172 = vadd.f32 %v2960, %v3075
        %v3173 = vadd.f32 %v2961, %v3077
        %v3174 = vadd.f32 %v2962, %v3079
        %v3175 = vadd.f32 %v2963, %v3078
        %v3176 = vlaneseq
        %v3177 = vshrl.u32 %v3176, 7
        %v3178 = vsub.s32 1, %v3177
        %v3179 = vrot.slane %v2910, %v3178
        %v3180 = vmul.f32 %v2855, %v3179
        %v3181 = vmul.f32 %v2856, %v3179
        %v3182 = vmul.f32 %v2857, %v3179
        %v3183 = vmul.f32 %v2858, %v3179
        %v3184 = vmul.f32 %v2859, %v3179
        %v3185 = vmul.f32 %v2860, %v3179
        %v3186 = vmul.f32 %v2861, %v3179
        %v3187 = vmul.f32 %v2862, %v3179
        %v3188 = vmul.f32 %v2863, %v3179
        %v3189 = vmul.f32 %v2864, %v3179
        %v3190 = vmul.f32 %v2865, %v3179
        %v3191 = vmul.f32 %v2866, %v3179
        %v3192 = vmul.f32 %v2867, %v3179
        %v3193 = vmul.f32 %v2868, %v3179
        %v3194 = vmul.f32 %v2869, %v3179
        %v3195 = vmul.f32 %v2870, %v3179
        %v3196 = vmul.f32 %v2871, %v3179
        %v3197 = vmul.f32 %v2872, %v3179
        %v3198 = vmul.f32 %v2873, %v3179
        %v3199 = vmul.f32 %v2874, %v3179
        %v3200 = vmul.f32 %v2875, %v3179
        %v3201 = vmul.f32 %v2876, %v3179
        %v3202 = vmul.f32 %v2877, %v3179
        %v3203 = vmul.f32 %v2878, %v3179
        %v3204 = vmul.f32 %v2879, %v3179
        %v3205 = vmul.f32 %v2880, %v3179
        %v3206 = vmul.f32 %v2881, %v3179
        %v3207 = vmul.f32 %v2882, %v3179
        %v3208 = vmul.f32 %v2883, %v3179
        %v3209 = vmul.f32 %v2884, %v3179
        %v3210 = vmul.f32 %v2885, %v3179
        %v3211 = vmul.f32 %v2886, %v3179
        %v3212 = vmul.f32 %v2887, %v3179
        %v3213 = vmul.f32 %v2888, %v3179
        %v3214 = vmul.f32 %v2889, %v3179
        %v3215 = vmul.f32 %v2890, %v3179
        %v3216 = vmul.f32 %v2891, %v3179
        %v3217 = vmul.f32 %v2892, %v3179
        %v3218 = vmul.f32 %v2893, %v3179
        %v3219 = vmul.f32 %v2894, %v3179
        %v3220 = vmul.f32 %v2895, %v3179
        %v3221 = vmul.f32 %v2896, %v3179
        %v3222 = vmul.f32 %v2897, %v3179
        %v3223 = vmul.f32 %v2898, %v3179
        %v3224 = vmul.f32 %v2899, %v3179
        %v3225 = vmul.f32 %v2900, %v3179
        %v3226 = vmul.f32 %v2901, %v3179
        %v3227 = vmul.f32 %v2902, %v3179
        %v3228 = vadd.f32 %v3128, %v3180
        %v3229 = vadd.f32 %v3129, %v3181
        %v3230 = vadd.f32 %v3130, %v3182
        %v3231 = vadd.f32 %v3131, %v3183
        %v3232 = vadd.f32 %v3132, %v3184
        %v3233 = vadd.f32 %v3133, %v3185
        %v3234 = vadd.f32 %v3134, %v3186
        %v3235 = vadd.f32 %v3135, %v3187
        %v3236 = vadd.f32 %v3136, %v3188
        %v3237 = vadd.f32 %v3137, %v3189
        %v3238 = vadd.f32 %v3138, %v3190
        %v3239 = vadd.f32 %v3139, %v3191
        %v3240 = vadd.f32 %v3140, %v3192
        %v3241 = vadd.f32 %v3141, %v3193
        %v3242 = vadd.f32 %v3142, %v3194
        %v3243 = vadd.f32 %v3143, %v3195
        %v3244 = vadd.f32 %v3144, %v3196
        %v3245 = vadd.f32 %v3145, %v3197
        %v3246 = vadd.f32 %v3146, %v3198
        %v3247 = vadd.f32 %v3147, %v3199
        %v3248 = vadd.f32 %v3148, %v3200
        %v3249 = vadd.f32 %v3149, %v3201
        %v3250 = vadd.f32 %v3150, %v3202
        %v3251 = vadd.f32 %v3151, %v3203
        %v3252 = vadd.f32 %v3152, %v3204
        %v3253 = vadd.f32 %v3153, %v3205
        %v3254 = vadd.f32 %v3154, %v3206
        %v3255 = vadd.f32 %v3155, %v3207
        %v3256 = vadd.f32 %v3156, %v3208
        %v3257 = vadd.f32 %v3157, %v3209
        %v3258 = vadd.f32 %v3158, %v3210
        %v3259 = vadd.f32 %v3159, %v3211
        %v3260 = vadd.f32 %v3160, %v3212
        %v3261 = vadd.f32 %v3161, %v3213
        %v3262 = vadd.f32 %v3162, %v3214
        %v3263 = vadd.f32 %v3163, %v3215
        %v3264 = vadd.f32 %v3164, %v3216
        %v3265 = vadd.f32 %v3165, %v3217
        %v3266 = vadd.f32 %v3166, %v3218
        %v3267 = vadd.f32 %v3167, %v3219
        %v3268 = vadd.f32 %v3168, %v3220
        %v3269 = vadd.f32 %v3169, %v3221
        %v3270 = vadd.f32 %v3170, %v3222
        %v3271 = vadd.f32 %v3171, %v3223
        %v3272 = vadd.f32 %v3172, %v3224
        %v3273 = vadd.f32 %v3173, %v3225
        %v3274 = vadd.f32 %v3174, %v3226
        %v3275 = vadd.f32 %v3175, %v3227
        %v3276 = vlaneseq
        %v3277 = vshrl.u32 %v3276, 7
        %v3278 = vsub.s32 2, %v3277
        %v3279 = vrot.slane %v2910, %v3278
        %v3280 = vmul.f32 %v2855, %v3279
        %v3281 = vmul.f32 %v2856, %v3279
        %v3282 = vmul.f32 %v2857, %v3279
        %v3283 = vmul.f32 %v2858, %v3279
        %v3284 = vmul.f32 %v2859, %v3279
        %v3285 = vmul.f32 %v2860, %v3279
        %v3286 = vmul.f32 %v2861, %v3279
        %v3287 = vmul.f32 %v2862, %v3279
        %v3288 = vmul.f32 %v2863, %v3279
        %v3289 = vmul.f32 %v2864, %v3279
        %v3290 = vmul.f32 %v2865, %v3279
        %v3291 = vmul.f32 %v2866, %v3279
        %v3292 = vmul.f32 %v2867, %v3279
        %v3293 = vmul.f32 %v2868, %v3279
        %v3294 = vmul.f32 %v2869, %v3279
        %v3295 = vmul.f32 %v2870, %v3279
        %v3296 = vmul.f32 %v2871, %v3279
        %v3297 = vmul.f32 %v2872, %v3279
        %v3298 = vmul.f32 %v2873, %v3279
        %v3299 = vmul.f32 %v2874, %v3279
        %v3300 = vmul.f32 %v2875, %v3279
        %v3301 = vmul.f32 %v2876, %v3279
        %v3302 = vmul.f32 %v2877, %v3279
        %v3303 = vmul.f32 %v2878, %v3279
        %v3304 = vmul.f32 %v2879, %v3279
        %v3305 = vmul.f32 %v2880, %v3279
        %v3306 = vmul.f32 %v2881, %v3279
        %v3307 = vmul.f32 %v2882, %v3279
        %v3308 = vmul.f32 %v2883, %v3279
        %v3309 = vmul.f32 %v2884, %v3279
        %v3310 = vmul.f32 %v2885, %v3279
        %v3311 = vmul.f32 %v2886, %v3279
        %v3312 = vmul.f32 %v2887, %v3279
        %v3313 = vmul.f32 %v2888, %v3279
        %v3314 = vmul.f32 %v2889, %v3279
        %v3315 = vmul.f32 %v2890, %v3279
        %v3316 = vmul.f32 %v2891, %v3279
        %v3317 = vmul.f32 %v2892, %v3279
        %v3318 = vmul.f32 %v2893, %v3279
        %v3319 = vmul.f32 %v2894, %v3279
        %v3320 = vmul.f32 %v2895, %v3279
        %v3321 = vmul.f32 %v2896, %v3279
        %v3322 = vmul.f32 %v2897, %v3279
        %v3323 = vmul.f32 %v2898, %v3279
        %v3324 = vmul.f32 %v2899, %v3279
        %v3325 = vmul.f32 %v2900, %v3279
        %v3326 = vmul.f32 %v2901, %v3279
        %v3327 = vmul.f32 %v2902, %v3279
        %v3376 = vrot.slane %v3280, 1
        %v3377 = vrot.slane %v3281, 1
        %v3378 = vsel %vm1073, %v3376, %v3377
        %v3379 = vrot.slane %v3282, 1
        %v3380 = vsel %vm1073, %v3377, %v3379
        %v3381 = vrot.slane %v3283, 1
        %v3382 = vrot.slane %v3284, 1
        %v3383 = vsel %vm1073, %v3381, %v3382
        %v3384 = vrot.slane %v3285, 1
        %v3385 = vsel %vm1073, %v3382, %v3384
        %v3386 = vrot.slane %v3286, 1
        %v3387 = vrot.slane %v3287, 1
        %v3388 = vsel %vm1073, %v3386, %v3387
        %v3389 = vrot.slane %v3288, 1
        %v3390 = vsel %vm1073, %v3387, %v3389
        %v3391 = vrot.slane %v3289, 1
        %v3392 = vrot.slane %v3290, 1
        %v3393 = vsel %vm1073, %v3391, %v3392
        %v3394 = vrot.slane %v3291, 1
        %v3395 = vsel %vm1073, %v3392, %v3394
        %v3396 = vrot.slane %v3292, 1
        %v3397 = vrot.slane %v3293, 1
        %v3398 = vsel %vm1073, %v3396, %v3397
        %v3399 = vrot.slane %v3294, 1
        %v3400 = vsel %vm1073, %v3397, %v3399
        %v3401 = vrot.slane %v3295, 1
        %v3402 = vrot.slane %v3296, 1
        %v3403 = vsel %vm1073, %v3401, %v3402
        %v3404 = vrot.slane %v3297, 1
        %v3405 = vsel %vm1073, %v3402, %v3404
        %v3406 = vrot.slane %v3298, 1
        %v3407 = vrot.slane %v3299, 1
        %v3408 = vsel %vm1073, %v3406, %v3407
        %v3409 = vrot.slane %v3300, 1
        %v3410 = vsel %vm1073, %v3407, %v3409
        %v3411 = vrot.slane %v3301, 1
        %v3412 = vrot.slane %v3302, 1
        %v3413 = vsel %vm1073, %v3411, %v3412
        %v3414 = vrot.slane %v3303, 1
        %v3415 = vsel %vm1073, %v3412, %v3414
        %v3416 = vrot.slane %v3304, 1
        %v3417 = vrot.slane %v3305, 1
        %v3418 = vsel %vm1073, %v3416, %v3417
        %v3419 = vrot.slane %v3306, 1
        %v3420 = vsel %vm1073, %v3417, %v3419
        %v3421 = vrot.slane %v3307, 1
        %v3422 = vrot.slane %v3308, 1
        %v3423 = vsel %vm1073, %v3421, %v3422
        %v3424 = vrot.slane %v3309, 1
        %v3425 = vsel %vm1073, %v3422, %v3424
        %v3426 = vrot.slane %v3310, 1
        %v3427 = vrot.slane %v3311, 1
        %v3428 = vsel %vm1073, %v3426, %v3427
        %v3429 = vrot.slane %v3312, 1
        %v3430 = vsel %vm1073, %v3427, %v3429
        %v3431 = vrot.slane %v3313, 1
        %v3432 = vrot.slane %v3314, 1
        %v3433 = vsel %vm1073, %v3431, %v3432
        %v3434 = vrot.slane %v3315, 1
        %v3435 = vsel %vm1073, %v3432, %v3434
        %v3436 = vrot.slane %v3316, 1
        %v3437 = vrot.slane %v3317, 1
        %v3438 = vsel %vm1073, %v3436, %v3437
        %v3439 = vrot.slane %v3318, 1
        %v3440 = vsel %vm1073, %v3437, %v3439
        %v3441 = vrot.slane %v3319, 1
        %v3442 = vrot.slane %v3320, 1
        %v3443 = vsel %vm1073, %v3441, %v3442
        %v3444 = vrot.slane %v3321, 1
        %v3445 = vsel %vm1073, %v3442, %v3444
        %v3446 = vrot.slane %v3322, 1
        %v3447 = vrot.slane %v3323, 1
        %v3448 = vsel %vm1073, %v3446, %v3447
        %v3449 = vrot.slane %v3324, 1
        %v3450 = vsel %vm1073, %v3447, %v3449
        %v3451 = vrot.slane %v3325, 1
        %v3452 = vrot.slane %v3326, 1
        %v3453 = vsel %vm1073, %v3451, %v3452
        %v3454 = vrot.slane %v3327, 1
        %v3455 = vsel %vm1073, %v3452, %v3454
        %v3504 = vadd.f32 %v3228, %v3378
        %v3505 = vadd.f32 %v3229, %v3380
        %v3506 = vadd.f32 %v3230, %v3379
        %v3507 = vadd.f32 %v3231, %v3383
        %v3508 = vadd.f32 %v3232, %v3385
        %v3509 = vadd.f32 %v3233, %v3384
        %v3510 = vadd.f32 %v3234, %v3388
        %v3511 = vadd.f32 %v3235, %v3390
        %v3512 = vadd.f32 %v3236, %v3389
        %v3513 = vadd.f32 %v3237, %v3393
        %v3514 = vadd.f32 %v3238, %v3395
        %v3515 = vadd.f32 %v3239, %v3394
        %v3516 = vadd.f32 %v3240, %v3398
        %v3517 = vadd.f32 %v3241, %v3400
        %v3518 = vadd.f32 %v3242, %v3399
        %v3519 = vadd.f32 %v3243, %v3403
        %v3520 = vadd.f32 %v3244, %v3405
        %v3521 = vadd.f32 %v3245, %v3404
        %v3522 = vadd.f32 %v3246, %v3408
        %v3523 = vadd.f32 %v3247, %v3410
        %v3524 = vadd.f32 %v3248, %v3409
        %v3525 = vadd.f32 %v3249, %v3413
        %v3526 = vadd.f32 %v3250, %v3415
        %v3527 = vadd.f32 %v3251, %v3414
        %v3528 = vadd.f32 %v3252, %v3418
        %v3529 = vadd.f32 %v3253, %v3420
        %v3530 = vadd.f32 %v3254, %v3419
        %v3531 = vadd.f32 %v3255, %v3423
        %v3532 = vadd.f32 %v3256, %v3425
        %v3533 = vadd.f32 %v3257, %v3424
        %v3534 = vadd.f32 %v3258, %v3428
        %v3535 = vadd.f32 %v3259, %v3430
        %v3536 = vadd.f32 %v3260, %v3429
        %v3537 = vadd.f32 %v3261, %v3433
        %v3538 = vadd.f32 %v3262, %v3435
        %v3539 = vadd.f32 %v3263, %v3434
        %v3540 = vadd.f32 %v3264, %v3438
        %v3541 = vadd.f32 %v3265, %v3440
        %v3542 = vadd.f32 %v3266, %v3439
        %v3543 = vadd.f32 %v3267, %v3443
        %v3544 = vadd.f32 %v3268, %v3445
        %v3545 = vadd.f32 %v3269, %v3444
        %v3546 = vadd.f32 %v3270, %v3448
        %v3547 = vadd.f32 %v3271, %v3450
        %v3548 = vadd.f32 %v3272, %v3449
        %v3549 = vadd.f32 %v3273, %v3453
        %v3550 = vadd.f32 %v3274, %v3455
        %v3551 = vadd.f32 %v3275, %v3454
        %v3552 = vlaneseq
        %v3553 = vshrl.u32 %v3552, 7
        %v3554 = vsub.s32 3, %v3553
        %v3555 = vrot.slane %v2910, %v3554
        %v3556 = vmul.f32 %v2858, %v3555
        %v3557 = vmul.f32 %v2859, %v3555
        %v3558 = vmul.f32 %v2861, %v3555
        %v3559 = vmul.f32 %v2862, %v3555
        %v3560 = vmul.f32 %v2864, %v3555
        %v3561 = vmul.f32 %v2865, %v3555
        %v3562 = vmul.f32 %v2867, %v3555
        %v3563 = vmul.f32 %v2868, %v3555
        %v3564 = vmul.f32 %v2870, %v3555
        %v3565 = vmul.f32 %v2871, %v3555
        %v3566 = vmul.f32 %v2873, %v3555
        %v3567 = vmul.f32 %v2874, %v3555
        %v3568 = vmul.f32 %v2876, %v3555
        %v3569 = vmul.f32 %v2877, %v3555
        %v3570 = vmul.f32 %v2879, %v3555
        %v3571 = vmul.f32 %v2880, %v3555
        %v3572 = vmul.f32 %v2882, %v3555
        %v3573 = vmul.f32 %v2883, %v3555
        %v3574 = vmul.f32 %v2885, %v3555
        %v3575 = vmul.f32 %v2886, %v3555
        %v3576 = vmul.f32 %v2888, %v3555
        %v3577 = vmul.f32 %v2889, %v3555
        %v3578 = vmul.f32 %v2891, %v3555
        %v3579 = vmul.f32 %v2892, %v3555
        %v3580 = vmul.f32 %v2894, %v3555
        %v3581 = vmul.f32 %v2895, %v3555
        %v3582 = vmul.f32 %v2897, %v3555
        %v3583 = vmul.f32 %v2898, %v3555
        %v3584 = vmul.f32 %v2900, %v3555
        %v3585 = vmul.f32 %v2901, %v3555
        %v3586 = vmul.f32 %v2903, %v3555
        %v3587 = vmul.f32 %v2904, %v3555
        %v3620 = vrot.slane %v3556, 7
        %v3621 = vrot.slane %v3557, 7
        %v3622 = vsel %vm728, %v3620, %v3621
        %v3623 = vrot.slane %v3558, 7
        %v3624 = vrot.slane %v3559, 7
        %v3625 = vsel %vm728, %v3623, %v3624
        %v3626 = vrot.slane %v3560, 7
        %v3627 = vrot.slane %v3561, 7
        %v3628 = vsel %vm728, %v3626, %v3627
        %v3629 = vrot.slane %v3562, 7
        %v3630 = vrot.slane %v3563, 7
        %v3631 = vsel %vm728, %v3629, %v3630
        %v3632 = vrot.slane %v3564, 7
        %v3633 = vrot.slane %v3565, 7
        %v3634 = vsel %vm728, %v3632, %v3633
        %v3635 = vrot.slane %v3566, 7
        %v3636 = vrot.slane %v3567, 7
        %v3637 = vsel %vm728, %v3635, %v3636
        %v3638 = vrot.slane %v3568, 7
        %v3639 = vrot.slane %v3569, 7
        %v3640 = vsel %vm728, %v3638, %v3639
        %v3641 = vrot.slane %v3570, 7
        %v3642 = vrot.slane %v3571, 7
        %v3643 = vsel %vm728, %v3641, %v3642
        %v3644 = vrot.slane %v3572, 7
        %v3645 = vrot.slane %v3573, 7
        %v3646 = vsel %vm728, %v3644, %v3645
        %v3647 = vrot.slane %v3574, 7
        %v3648 = vrot.slane %v3575, 7
        %v3649 = vsel %vm728, %v3647, %v3648
        %v3650 = vrot.slane %v3576, 7
        %v3651 = vrot.slane %v3577, 7
        %v3652 = vsel %vm728, %v3650, %v3651
        %v3653 = vrot.slane %v3578, 7
        %v3654 = vrot.slane %v3579, 7
        %v3655 = vsel %vm728, %v3653, %v3654
        %v3656 = vrot.slane %v3580, 7
        %v3657 = vrot.slane %v3581, 7
        %v3658 = vsel %vm728, %v3656, %v3657
        %v3659 = vrot.slane %v3582, 7
        %v3660 = vrot.slane %v3583, 7
        %v3661 = vsel %vm728, %v3659, %v3660
        %v3662 = vrot.slane %v3584, 7
        %v3663 = vrot.slane %v3585, 7
        %v3664 = vsel %vm728, %v3662, %v3663
        %v3665 = vrot.slane %v3586, 7
        %v3666 = vrot.slane %v3587, 7
        %v3667 = vsel %vm728, %v3665, %v3666
        %v3716 = vadd.f32 %v3504, %v3620
        %v3717 = vadd.f32 %v3505, %v3622
        %v3718 = vadd.f32 %v3506, %v3621
        %v3719 = vadd.f32 %v3507, %v3623
        %v3720 = vadd.f32 %v3508, %v3625
        %v3721 = vadd.f32 %v3509, %v3624
        %v3722 = vadd.f32 %v3510, %v3626
        %v3723 = vadd.f32 %v3511, %v3628
        %v3724 = vadd.f32 %v3512, %v3627
        %v3725 = vadd.f32 %v3513, %v3629
        %v3726 = vadd.f32 %v3514, %v3631
        %v3727 = vadd.f32 %v3515, %v3630
        %v3728 = vadd.f32 %v3516, %v3632
        %v3729 = vadd.f32 %v3517, %v3634
        %v3730 = vadd.f32 %v3518, %v3633
        %v3731 = vadd.f32 %v3519, %v3635
        %v3732 = vadd.f32 %v3520, %v3637
        %v3733 = vadd.f32 %v3521, %v3636
        %v3734 = vadd.f32 %v3522, %v3638
        %v3735 = vadd.f32 %v3523, %v3640
        %v3736 = vadd.f32 %v3524, %v3639
        %v3737 = vadd.f32 %v3525, %v3641
        %v3738 = vadd.f32 %v3526, %v3643
        %v3739 = vadd.f32 %v3527, %v3642
        %v3740 = vadd.f32 %v3528, %v3644
        %v3741 = vadd.f32 %v3529, %v3646
        %v3742 = vadd.f32 %v3530, %v3645
        %v3743 = vadd.f32 %v3531, %v3647
        %v3744 = vadd.f32 %v3532, %v3649
        %v3745 = vadd.f32 %v3533, %v3648
        %v3746 = vadd.f32 %v3534, %v3650
        %v3747 = vadd.f32 %v3535, %v3652
        %v3748 = vadd.f32 %v3536, %v3651
        %v3749 = vadd.f32 %v3537, %v3653
        %v3750 = vadd.f32 %v3538, %v3655
        %v3751 = vadd.f32 %v3539, %v3654
        %v3752 = vadd.f32 %v3540, %v3656
        %v3753 = vadd.f32 %v3541, %v3658
        %v3754 = vadd.f32 %v3542, %v3657
        %v3755 = vadd.f32 %v3543, %v3659
        %v3756 = vadd.f32 %v3544, %v3661
        %v3757 = vadd.f32 %v3545, %v3660
        %v3758 = vadd.f32 %v3546, %v3662
        %v3759 = vadd.f32 %v3547, %v3664
        %v3760 = vadd.f32 %v3548, %v3663
        %v3761 = vadd.f32 %v3549, %v3665
        %v3762 = vadd.f32 %v3550, %v3667
        %v3763 = vadd.f32 %v3551, %v3666
        %v3764 = vlaneseq
        %v3765 = vshrl.u32 %v3764, 7
        %v3766 = vsub.s32 5, %v3765
        %v3767 = vrot.slane %v2910, %v3766
        %v3768 = vmul.f32 %v2858, %v3767
        %v3769 = vmul.f32 %v2859, %v3767
        %v3770 = vmul.f32 %v2860, %v3767
        %v3771 = vmul.f32 %v2861, %v3767
        %v3772 = vmul.f32 %v2862, %v3767
        %v3773 = vmul.f32 %v2863, %v3767
        %v3774 = vmul.f32 %v2864, %v3767
        %v3775 = vmul.f32 %v2865, %v3767
        %v3776 = vmul.f32 %v2866, %v3767
        %v3777 = vmul.f32 %v2867, %v3767
        %v3778 = vmul.f32 %v2868, %v3767
        %v3779 = vmul.f32 %v2869, %v3767
        %v3780 = vmul.f32 %v2870, %v3767
        %v3781 = vmul.f32 %v2871, %v3767
        %v3782 = vmul.f32 %v2872, %v3767
        %v3783 = vmul.f32 %v2873, %v3767
        %v3784 = vmul.f32 %v2874, %v3767
        %v3785 = vmul.f32 %v2875, %v3767
        %v3786 = vmul.f32 %v2876, %v3767
        %v3787 = vmul.f32 %v2877, %v3767
        %v3788 = vmul.f32 %v2878, %v3767
        %v3789 = vmul.f32 %v2879, %v3767
        %v3790 = vmul.f32 %v2880, %v3767
        %v3791 = vmul.f32 %v2881, %v3767
        %v3792 = vmul.f32 %v2882, %v3767
        %v3793 = vmul.f32 %v2883, %v3767
        %v3794 = vmul.f32 %v2884, %v3767
        %v3795 = vmul.f32 %v2885, %v3767
        %v3796 = vmul.f32 %v2886, %v3767
        %v3797 = vmul.f32 %v2887, %v3767
        %v3798 = vmul.f32 %v2888, %v3767
        %v3799 = vmul.f32 %v2889, %v3767
        %v3800 = vmul.f32 %v2890, %v3767
        %v3801 = vmul.f32 %v2891, %v3767
        %v3802 = vmul.f32 %v2892, %v3767
        %v3803 = vmul.f32 %v2893, %v3767
        %v3804 = vmul.f32 %v2894, %v3767
        %v3805 = vmul.f32 %v2895, %v3767
        %v3806 = vmul.f32 %v2896, %v3767
        %v3807 = vmul.f32 %v2897, %v3767
        %v3808 = vmul.f32 %v2898, %v3767
        %v3809 = vmul.f32 %v2899, %v3767
        %v3810 = vmul.f32 %v2900, %v3767
        %v3811 = vmul.f32 %v2901, %v3767
        %v3812 = vmul.f32 %v2902, %v3767
        %v3813 = vmul.f32 %v2903, %v3767
        %v3814 = vmul.f32 %v2904, %v3767
        %v3815 = vmul.f32 %v2905, %v3767
        %v3864 = vrot.slane %v3768, 1
        %v3865 = vrot.slane %v3769, 1
        %v3866 = vsel %vm1073, %v3864, %v3865
        %v3867 = vrot.slane %v3770, 1
        %v3868 = vsel %vm1073, %v3865, %v3867
        %v3869 = vrot.slane %v3771, 1
        %v3870 = vrot.slane %v3772, 1
        %v3871 = vsel %vm1073, %v3869, %v3870
        %v3872 = vrot.slane %v3773, 1
        %v3873 = vsel %vm1073, %v3870, %v3872
        %v3874 = vrot.slane %v3774, 1
        %v3875 = vrot.slane %v3775, 1
        %v3876 = vsel %vm1073, %v3874, %v3875
        %v3877 = vrot.slane %v3776, 1
        %v3878 = vsel %vm1073, %v3875, %v3877
        %v3879 = vrot.slane %v3777, 1
        %v3880 = vrot.slane %v3778, 1
        %v3881 = vsel %vm1073, %v3879, %v3880
        %v3882 = vrot.slane %v3779, 1
        %v3883 = vsel %vm1073, %v3880, %v3882
        %v3884 = vrot.slane %v3780, 1
        %v3885 = vrot.slane %v3781, 1
        %v3886 = vsel %vm1073, %v3884, %v3885
        %v3887 = vrot.slane %v3782, 1
        %v3888 = vsel %vm1073, %v3885, %v3887
        %v3889 = vrot.slane %v3783, 1
        %v3890 = vrot.slane %v3784, 1
        %v3891 = vsel %vm1073, %v3889, %v3890
        %v3892 = vrot.slane %v3785, 1
        %v3893 = vsel %vm1073, %v3890, %v3892
        %v3894 = vrot.slane %v3786, 1
        %v3895 = vrot.slane %v3787, 1
        %v3896 = vsel %vm1073, %v3894, %v3895
        %v3897 = vrot.slane %v3788, 1
        %v3898 = vsel %vm1073, %v3895, %v3897
        %v3899 = vrot.slane %v3789, 1
        %v3900 = vrot.slane %v3790, 1
        %v3901 = vsel %vm1073, %v3899, %v3900
        %v3902 = vrot.slane %v3791, 1
        %v3903 = vsel %vm1073, %v3900, %v3902
        %v3904 = vrot.slane %v3792, 1
        %v3905 = vrot.slane %v3793, 1
        %v3906 = vsel %vm1073, %v3904, %v3905
        %v3907 = vrot.slane %v3794, 1
        %v3908 = vsel %vm1073, %v3905, %v3907
        %v3909 = vrot.slane %v3795, 1
        %v3910 = vrot.slane %v3796, 1
        %v3911 = vsel %vm1073, %v3909, %v3910
        %v3912 = vrot.slane %v3797, 1
        %v3913 = vsel %vm1073, %v3910, %v3912
        %v3914 = vrot.slane %v3798, 1
        %v3915 = vrot.slane %v3799, 1
        %v3916 = vsel %vm1073, %v3914, %v3915
        %v3917 = vrot.slane %v3800, 1
        %v3918 = vsel %vm1073, %v3915, %v3917
        %v3919 = vrot.slane %v3801, 1
        %v3920 = vrot.slane %v3802, 1
        %v3921 = vsel %vm1073, %v3919, %v3920
        %v3922 = vrot.slane %v3803, 1
        %v3923 = vsel %vm1073, %v3920, %v3922
        %v3924 = vrot.slane %v3804, 1
        %v3925 = vrot.slane %v3805, 1
        %v3926 = vsel %vm1073, %v3924, %v3925
        %v3927 = vrot.slane %v3806, 1
        %v3928 = vsel %vm1073, %v3925, %v3927
        %v3929 = vrot.slane %v3807, 1
        %v3930 = vrot.slane %v3808, 1
        %v3931 = vsel %vm1073, %v3929, %v3930
        %v3932 = vrot.slane %v3809, 1
        %v3933 = vsel %vm1073, %v3930, %v3932
        %v3934 = vrot.slane %v3810, 1
        %v3935 = vrot.slane %v3811, 1
        %v3936 = vsel %vm1073, %v3934, %v3935
        %v3937 = vrot.slane %v3812, 1
        %v3938 = vsel %vm1073, %v3935, %v3937
        %v3939 = vrot.slane %v3813, 1
        %v3940 = vrot.slane %v3814, 1
        %v3941 = vsel %vm1073, %v3939, %v3940
        %v3942 = vrot.slane %v3815, 1
        %v3943 = vsel %vm1073, %v3940, %v3942
        %v3992 = vadd.f32 %v3716, %v3866
        %v3993 = vadd.f32 %v3717, %v3868
        %v3994 = vadd.f32 %v3718, %v3867
        %v3995 = vadd.f32 %v3719, %v3871
        %v3996 = vadd.f32 %v3720, %v3873
        %v3997 = vadd.f32 %v3721, %v3872
        %v3998 = vadd.f32 %v3722, %v3876
        %v3999 = vadd.f32 %v3723, %v3878
        %v4000 = vadd.f32 %v3724, %v3877
        %v4001 = vadd.f32 %v3725, %v3881
        %v4002 = vadd.f32 %v3726, %v3883
        %v4003 = vadd.f32 %v3727, %v3882
        %v4004 = vadd.f32 %v3728, %v3886
        %v4005 = vadd.f32 %v3729, %v3888
        %v4006 = vadd.f32 %v3730, %v3887
        %v4007 = vadd.f32 %v3731, %v3891
        %v4008 = vadd.f32 %v3732, %v3893
        %v4009 = vadd.f32 %v3733, %v3892
        %v4010 = vadd.f32 %v3734, %v3896
        %v4011 = vadd.f32 %v3735, %v3898
        %v4012 = vadd.f32 %v3736, %v3897
        %v4013 = vadd.f32 %v3737, %v3901
        %v4014 = vadd.f32 %v3738, %v3903
        %v4015 = vadd.f32 %v3739, %v3902
        %v4016 = vadd.f32 %v3740, %v3906
        %v4017 = vadd.f32 %v3741, %v3908
        %v4018 = vadd.f32 %v3742, %v3907
        %v4019 = vadd.f32 %v3743, %v3911
        %v4020 = vadd.f32 %v3744, %v3913
        %v4021 = vadd.f32 %v3745, %v3912
        %v4022 = vadd.f32 %v3746, %v3916
        %v4023 = vadd.f32 %v3747, %v3918
        %v4024 = vadd.f32 %v3748, %v3917
        %v4025 = vadd.f32 %v3749, %v3921
        %v4026 = vadd.f32 %v3750, %v3923
        %v4027 = vadd.f32 %v3751, %v3922
        %v4028 = vadd.f32 %v3752, %v3926
        %v4029 = vadd.f32 %v3753, %v3928
        %v4030 = vadd.f32 %v3754, %v3927
        %v4031 = vadd.f32 %v3755, %v3931
        %v4032 = vadd.f32 %v3756, %v3933
        %v4033 = vadd.f32 %v3757, %v3932
        %v4034 = vadd.f32 %v3758, %v3936
        %v4035 = vadd.f32 %v3759, %v3938
        %v4036 = vadd.f32 %v3760, %v3937
        %v4037 = vadd.f32 %v3761, %v3941
        %v4038 = vadd.f32 %v3762, %v3943
        %v4039 = vadd.f32 %v3763, %v3942
        %v4040 = vlaneseq
        %v4041 = vshrl.u32 %v4040, 7
        %v4042 = vsub.s32 6, %v4041
        %v4043 = vrot.slane %v2910, %v4042
        %v4044 = vmul.f32 %v2861, %v4043
        %v4045 = vmul.f32 %v2862, %v4043
        %v4046 = vmul.f32 %v2864, %v4043
        %v4047 = vmul.f32 %v2865, %v4043
        %v4048 = vmul.f32 %v2867, %v4043
        %v4049 = vmul.f32 %v2868, %v4043
        %v4050 = vmul.f32 %v2870, %v4043
        %v4051 = vmul.f32 %v2871, %v4043
        %v4052 = vmul.f32 %v2873, %v4043
        %v4053 = vmul.f32 %v2874, %v4043
        %v4054 = vmul.f32 %v2876, %v4043
        %v4055 = vmul.f32 %v2877, %v4043
        %v4056 = vmul.f32 %v2879, %v4043
        %v4057 = vmul.f32 %v2880, %v4043
        %v4058 = vmul.f32 %v2882, %v4043
        %v4059 = vmul.f32 %v2883, %v4043
        %v4060 = vmul.f32 %v2885, %v4043
        %v4061 = vmul.f32 %v2886, %v4043
        %v4062 = vmul.f32 %v2888, %v4043
        %v4063 = vmul.f32 %v2889, %v4043
        %v4064 = vmul.f32 %v2891, %v4043
        %v4065 = vmul.f32 %v2892, %v4043
        %v4066 = vmul.f32 %v2894, %v4043
        %v4067 = vmul.f32 %v2895, %v4043
        %v4068 = vmul.f32 %v2897, %v4043
        %v4069 = vmul.f32 %v2898, %v4043
        %v4070 = vmul.f32 %v2900, %v4043
        %v4071 = vmul.f32 %v2901, %v4043
        %v4072 = vmul.f32 %v2903, %v4043
        %v4073 = vmul.f32 %v2904, %v4043
        %v4074 = vmul.f32 %v2906, %v4043
        %v4075 = vmul.f32 %v2907, %v4043
        %v4108 = vrot.slane %v4044, 7
        %v4109 = vrot.slane %v4045, 7
        %v4110 = vsel %vm728, %v4108, %v4109
        %v4111 = vrot.slane %v4046, 7
        %v4112 = vrot.slane %v4047, 7
        %v4113 = vsel %vm728, %v4111, %v4112
        %v4114 = vrot.slane %v4048, 7
        %v4115 = vrot.slane %v4049, 7
        %v4116 = vsel %vm728, %v4114, %v4115
        %v4117 = vrot.slane %v4050, 7
        %v4118 = vrot.slane %v4051, 7
        %v4119 = vsel %vm728, %v4117, %v4118
        %v4120 = vrot.slane %v4052, 7
        %v4121 = vrot.slane %v4053, 7
        %v4122 = vsel %vm728, %v4120, %v4121
        %v4123 = vrot.slane %v4054, 7
        %v4124 = vrot.slane %v4055, 7
        %v4125 = vsel %vm728, %v4123, %v4124
        %v4126 = vrot.slane %v4056, 7
        %v4127 = vrot.slane %v4057, 7
        %v4128 = vsel %vm728, %v4126, %v4127
        %v4129 = vrot.slane %v4058, 7
        %v4130 = vrot.slane %v4059, 7
        %v4131 = vsel %vm728, %v4129, %v4130
        %v4132 = vrot.slane %v4060, 7
        %v4133 = vrot.slane %v4061, 7
        %v4134 = vsel %vm728, %v4132, %v4133
        %v4135 = vrot.slane %v4062, 7
        %v4136 = vrot.slane %v4063, 7
        %v4137 = vsel %vm728, %v4135, %v4136
        %v4138 = vrot.slane %v4064, 7
        %v4139 = vrot.slane %v4065, 7
        %v4140 = vsel %vm728, %v4138, %v4139
        %v4141 = vrot.slane %v4066, 7
        %v4142 = vrot.slane %v4067, 7
        %v4143 = vsel %vm728, %v4141, %v4142
        %v4144 = vrot.slane %v4068, 7
        %v4145 = vrot.slane %v4069, 7
        %v4146 = vsel %vm728, %v4144, %v4145
        %v4147 = vrot.slane %v4070, 7
        %v4148 = vrot.slane %v4071, 7
        %v4149 = vsel %vm728, %v4147, %v4148
        %v4150 = vrot.slane %v4072, 7
        %v4151 = vrot.slane %v4073, 7
        %v4152 = vsel %vm728, %v4150, %v4151
        %v4153 = vrot.slane %v4074, 7
        %v4154 = vrot.slane %v4075, 7
        %v4155 = vsel %vm728, %v4153, %v4154
        %v4204 = vadd.f32 %v3992, %v4108
        %v4205 = vadd.f32 %v3993, %v4110
        %v4206 = vadd.f32 %v3994, %v4109
        %v4207 = vadd.f32 %v3995, %v4111
        %v4208 = vadd.f32 %v3996, %v4113
        %v4209 = vadd.f32 %v3997, %v4112
        %v4210 = vadd.f32 %v3998, %v4114
        %v4211 = vadd.f32 %v3999, %v4116
        %v4212 = vadd.f32 %v4000, %v4115
        %v4213 = vadd.f32 %v4001, %v4117
        %v4214 = vadd.f32 %v4002, %v4119
        %v4215 = vadd.f32 %v4003, %v4118
        %v4216 = vadd.f32 %v4004, %v4120
        %v4217 = vadd.f32 %v4005, %v4122
        %v4218 = vadd.f32 %v4006, %v4121
        %v4219 = vadd.f32 %v4007, %v4123
        %v4220 = vadd.f32 %v4008, %v4125
        %v4221 = vadd.f32 %v4009, %v4124
        %v4222 = vadd.f32 %v4010, %v4126
        %v4223 = vadd.f32 %v4011, %v4128
        %v4224 = vadd.f32 %v4012, %v4127
        %v4225 = vadd.f32 %v4013, %v4129
        %v4226 = vadd.f32 %v4014, %v4131
        %v4227 = vadd.f32 %v4015, %v4130
        %v4228 = vadd.f32 %v4016, %v4132
        %v4229 = vadd.f32 %v4017, %v4134
        %v4230 = vadd.f32 %v4018, %v4133
        %v4231 = vadd.f32 %v4019, %v4135
        %v4232 = vadd.f32 %v4020, %v4137
        %v4233 = vadd.f32 %v4021, %v4136
        %v4234 = vadd.f32 %v4022, %v4138
        %v4235 = vadd.f32 %v4023, %v4140
        %v4236 = vadd.f32 %v4024, %v4139
        %v4237 = vadd.f32 %v4025, %v4141
        %v4238 = vadd.f32 %v4026, %v4143
        %v4239 = vadd.f32 %v4027, %v4142
        %v4240 = vadd.f32 %v4028, %v4144
        %v4241 = vadd.f32 %v4029, %v4146
        %v4242 = vadd.f32 %v4030, %v4145
        %v4243 = vadd.f32 %v4031, %v4147
        %v4244 = vadd.f32 %v4032, %v4149
        %v4245 = vadd.f32 %v4033, %v4148
        %v4246 = vadd.f32 %v4034, %v4150
        %v4247 = vadd.f32 %v4035, %v4152
        %v4248 = vadd.f32 %v4036, %v4151
        %v4249 = vadd.f32 %v4037, %v4153
        %v4250 = vadd.f32 %v4038, %v4155
        %v4251 = vadd.f32 %v4039, %v4154
        %v4252 = vlaneseq
        %v4253 = vshrl.u32 %v4252, 7
        %v4254 = vsub.s32 7, %v4253
        %v4255 = vrot.slane %v2910, %v4254
        %v4256 = vmul.f32 %v2861, %v4255
        %v4257 = vmul.f32 %v2862, %v4255
        %v4258 = vmul.f32 %v2863, %v4255
        %v4259 = vmul.f32 %v2864, %v4255
        %v4260 = vmul.f32 %v2865, %v4255
        %v4261 = vmul.f32 %v2866, %v4255
        %v4262 = vmul.f32 %v2867, %v4255
        %v4263 = vmul.f32 %v2868, %v4255
        %v4264 = vmul.f32 %v2869, %v4255
        %v4265 = vmul.f32 %v2870, %v4255
        %v4266 = vmul.f32 %v2871, %v4255
        %v4267 = vmul.f32 %v2872, %v4255
        %v4268 = vmul.f32 %v2873, %v4255
        %v4269 = vmul.f32 %v2874, %v4255
        %v4270 = vmul.f32 %v2875, %v4255
        %v4271 = vmul.f32 %v2876, %v4255
        %v4272 = vmul.f32 %v2877, %v4255
        %v4273 = vmul.f32 %v2878, %v4255
        %v4274 = vmul.f32 %v2879, %v4255
        %v4275 = vmul.f32 %v2880, %v4255
        %v4276 = vmul.f32 %v2881, %v4255
        %v4277 = vmul.f32 %v2882, %v4255
        %v4278 = vmul.f32 %v2883, %v4255
        %v4279 = vmul.f32 %v2884, %v4255
        %v4280 = vmul.f32 %v2885, %v4255
        %v4281 = vmul.f32 %v2886, %v4255
        %v4282 = vmul.f32 %v2887, %v4255
        %v4283 = vmul.f32 %v2888, %v4255
        %v4284 = vmul.f32 %v2889, %v4255
        %v4285 = vmul.f32 %v2890, %v4255
        %v4286 = vmul.f32 %v2891, %v4255
        %v4287 = vmul.f32 %v2892, %v4255
        %v4288 = vmul.f32 %v2893, %v4255
        %v4289 = vmul.f32 %v2894, %v4255
        %v4290 = vmul.f32 %v2895, %v4255
        %v4291 = vmul.f32 %v2896, %v4255
        %v4292 = vmul.f32 %v2897, %v4255
        %v4293 = vmul.f32 %v2898, %v4255
        %v4294 = vmul.f32 %v2899, %v4255
        %v4295 = vmul.f32 %v2900, %v4255
        %v4296 = vmul.f32 %v2901, %v4255
        %v4297 = vmul.f32 %v2902, %v4255
        %v4298 = vmul.f32 %v2903, %v4255
        %v4299 = vmul.f32 %v2904, %v4255
        %v4300 = vmul.f32 %v2905, %v4255
        %v4301 = vmul.f32 %v2906, %v4255
        %v4302 = vmul.f32 %v2907, %v4255
        %v4303 = vmul.f32 %v2908, %v4255
        %v4304 = vadd.f32 %v4204, %v4256
        %v4305 = vadd.f32 %v4205, %v4257
        %v4306 = vadd.f32 %v4206, %v4258
        %v4307 = vadd.f32 %v4207, %v4259
        %v4308 = vadd.f32 %v4208, %v4260
        %v4309 = vadd.f32 %v4209, %v4261
        %v4310 = vadd.f32 %v4210, %v4262
        %v4311 = vadd.f32 %v4211, %v4263
        %v4312 = vadd.f32 %v4212, %v4264
        %v4313 = vadd.f32 %v4213, %v4265
        %v4314 = vadd.f32 %v4214, %v4266
        %v4315 = vadd.f32 %v4215, %v4267
        %v4316 = vadd.f32 %v4216, %v4268
        %v4317 = vadd.f32 %v4217, %v4269
        %v4318 = vadd.f32 %v4218, %v4270
        %v4319 = vadd.f32 %v4219, %v4271
        %v4320 = vadd.f32 %v4220, %v4272
        %v4321 = vadd.f32 %v4221, %v4273
        %v4322 = vadd.f32 %v4222, %v4274
        %v4323 = vadd.f32 %v4223, %v4275
        %v4324 = vadd.f32 %v4224, %v4276
        %v4325 = vadd.f32 %v4225, %v4277
        %v4326 = vadd.f32 %v4226, %v4278
        %v4327 = vadd.f32 %v4227, %v4279
        %v4328 = vadd.f32 %v4228, %v4280
        %v4329 = vadd.f32 %v4229, %v4281
        %v4330 = vadd.f32 %v4230, %v4282
        %v4331 = vadd.f32 %v4231, %v4283
        %v4332 = vadd.f32 %v4232, %v4284
        %v4333 = vadd.f32 %v4233, %v4285
        %v4334 = vadd.f32 %v4234, %v4286
        %v4335 = vadd.f32 %v4235, %v4287
        %v4336 = vadd.f32 %v4236, %v4288
        %v4337 = vadd.f32 %v4237, %v4289
        %v4338 = vadd.f32 %v4238, %v4290
        %v4339 = vadd.f32 %v4239, %v4291
        %v4340 = vadd.f32 %v4240, %v4292
        %v4341 = vadd.f32 %v4241, %v4293
        %v4342 = vadd.f32 %v4242, %v4294
        %v4343 = vadd.f32 %v4243, %v4295
        %v4344 = vadd.f32 %v4244, %v4296
        %v4345 = vadd.f32 %v4245, %v4297
        %v4346 = vadd.f32 %v4246, %v4298
        %v4347 = vadd.f32 %v4247, %v4299
        %v4348 = vadd.f32 %v4248, %v4300
        %v4349 = vadd.f32 %v4249, %v4301
        %v4350 = vadd.f32 %v4250, %v4302
        %v4351 = vadd.f32 %v4251, %v4303
        %v4352 = vlaneseq
        %v4353 = vshrl.u32 %v4352, 7
        %v4354 = vsub.s32 0, %v4353
        %v4355 = vrot.slane %v2911, %v4354
        %v4356 = vmul.f32 %v2861, %v4355
        %v4357 = vmul.f32 %v2862, %v4355
        %v4358 = vmul.f32 %v2863, %v4355
        %v4359 = vmul.f32 %v2864, %v4355
        %v4360 = vmul.f32 %v2865, %v4355
        %v4361 = vmul.f32 %v2866, %v4355
        %v4362 = vmul.f32 %v2867, %v4355
        %v4363 = vmul.f32 %v2868, %v4355
        %v4364 = vmul.f32 %v2869, %v4355
        %v4365 = vmul.f32 %v2870, %v4355
        %v4366 = vmul.f32 %v2871, %v4355
        %v4367 = vmul.f32 %v2872, %v4355
        %v4368 = vmul.f32 %v2873, %v4355
        %v4369 = vmul.f32 %v2874, %v4355
        %v4370 = vmul.f32 %v2875, %v4355
        %v4371 = vmul.f32 %v2876, %v4355
        %v4372 = vmul.f32 %v2877, %v4355
        %v4373 = vmul.f32 %v2878, %v4355
        %v4374 = vmul.f32 %v2879, %v4355
        %v4375 = vmul.f32 %v2880, %v4355
        %v4376 = vmul.f32 %v2881, %v4355
        %v4377 = vmul.f32 %v2882, %v4355
        %v4378 = vmul.f32 %v2883, %v4355
        %v4379 = vmul.f32 %v2884, %v4355
        %v4380 = vmul.f32 %v2885, %v4355
        %v4381 = vmul.f32 %v2886, %v4355
        %v4382 = vmul.f32 %v2887, %v4355
        %v4383 = vmul.f32 %v2888, %v4355
        %v4384 = vmul.f32 %v2889, %v4355
        %v4385 = vmul.f32 %v2890, %v4355
        %v4386 = vmul.f32 %v2891, %v4355
        %v4387 = vmul.f32 %v2892, %v4355
        %v4388 = vmul.f32 %v2893, %v4355
        %v4389 = vmul.f32 %v2894, %v4355
        %v4390 = vmul.f32 %v2895, %v4355
        %v4391 = vmul.f32 %v2896, %v4355
        %v4392 = vmul.f32 %v2897, %v4355
        %v4393 = vmul.f32 %v2898, %v4355
        %v4394 = vmul.f32 %v2899, %v4355
        %v4395 = vmul.f32 %v2900, %v4355
        %v4396 = vmul.f32 %v2901, %v4355
        %v4397 = vmul.f32 %v2902, %v4355
        %v4398 = vmul.f32 %v2903, %v4355
        %v4399 = vmul.f32 %v2904, %v4355
        %v4400 = vmul.f32 %v2905, %v4355
        %v4401 = vmul.f32 %v2906, %v4355
        %v4402 = vmul.f32 %v2907, %v4355
        %v4403 = vmul.f32 %v2908, %v4355
        %v4452 = vrot.slane %v4356, 1
        %v4453 = vrot.slane %v4357, 1
        %v4454 = vsel %vm1073, %v4452, %v4453
        %v4455 = vrot.slane %v4358, 1
        %v4456 = vsel %vm1073, %v4453, %v4455
        %v4457 = vrot.slane %v4359, 1
        %v4458 = vrot.slane %v4360, 1
        %v4459 = vsel %vm1073, %v4457, %v4458
        %v4460 = vrot.slane %v4361, 1
        %v4461 = vsel %vm1073, %v4458, %v4460
        %v4462 = vrot.slane %v4362, 1
        %v4463 = vrot.slane %v4363, 1
        %v4464 = vsel %vm1073, %v4462, %v4463
        %v4465 = vrot.slane %v4364, 1
        %v4466 = vsel %vm1073, %v4463, %v4465
        %v4467 = vrot.slane %v4365, 1
        %v4468 = vrot.slane %v4366, 1
        %v4469 = vsel %vm1073, %v4467, %v4468
        %v4470 = vrot.slane %v4367, 1
        %v4471 = vsel %vm1073, %v4468, %v4470
        %v4472 = vrot.slane %v4368, 1
        %v4473 = vrot.slane %v4369, 1
        %v4474 = vsel %vm1073, %v4472, %v4473
        %v4475 = vrot.slane %v4370, 1
        %v4476 = vsel %vm1073, %v4473, %v4475
        %v4477 = vrot.slane %v4371, 1
        %v4478 = vrot.slane %v4372, 1
        %v4479 = vsel %vm1073, %v4477, %v4478
        %v4480 = vrot.slane %v4373, 1
        %v4481 = vsel %vm1073, %v4478, %v4480
        %v4482 = vrot.slane %v4374, 1
        %v4483 = vrot.slane %v4375, 1
        %v4484 = vsel %vm1073, %v4482, %v4483
        %v4485 = vrot.slane %v4376, 1
        %v4486 = vsel %vm1073, %v4483, %v4485
        %v4487 = vrot.slane %v4377, 1
        %v4488 = vrot.slane %v4378, 1
        %v4489 = vsel %vm1073, %v4487, %v4488
        %v4490 = vrot.slane %v4379, 1
        %v4491 = vsel %vm1073, %v4488, %v4490
        %v4492 = vrot.slane %v4380, 1
        %v4493 = vrot.slane %v4381, 1
        %v4494 = vsel %vm1073, %v4492, %v4493
        %v4495 = vrot.slane %v4382, 1
        %v4496 = vsel %vm1073, %v4493, %v4495
        %v4497 = vrot.slane %v4383, 1
        %v4498 = vrot.slane %v4384, 1
        %v4499 = vsel %vm1073, %v4497, %v4498
        %v4500 = vrot.slane %v4385, 1
        %v4501 = vsel %vm1073, %v4498, %v4500
        %v4502 = vrot.slane %v4386, 1
        %v4503 = vrot.slane %v4387, 1
        %v4504 = vsel %vm1073, %v4502, %v4503
        %v4505 = vrot.slane %v4388, 1
        %v4506 = vsel %vm1073, %v4503, %v4505
        %v4507 = vrot.slane %v4389, 1
        %v4508 = vrot.slane %v4390, 1
        %v4509 = vsel %vm1073, %v4507, %v4508
        %v4510 = vrot.slane %v4391, 1
        %v4511 = vsel %vm1073, %v4508, %v4510
        %v4512 = vrot.slane %v4392, 1
        %v4513 = vrot.slane %v4393, 1
        %v4514 = vsel %vm1073, %v4512, %v4513
        %v4515 = vrot.slane %v4394, 1
        %v4516 = vsel %vm1073, %v4513, %v4515
        %v4517 = vrot.slane %v4395, 1
        %v4518 = vrot.slane %v4396, 1
        %v4519 = vsel %vm1073, %v4517, %v4518
        %v4520 = vrot.slane %v4397, 1
        %v4521 = vsel %vm1073, %v4518, %v4520
        %v4522 = vrot.slane %v4398, 1
        %v4523 = vrot.slane %v4399, 1
        %v4524 = vsel %vm1073, %v4522, %v4523
        %v4525 = vrot.slane %v4400, 1
        %v4526 = vsel %vm1073, %v4523, %v4525
        %v4527 = vrot.slane %v4401, 1
        %v4528 = vrot.slane %v4402, 1
        %v4529 = vsel %vm1073, %v4527, %v4528
        %v4530 = vrot.slane %v4403, 1
        %v4531 = vsel %vm1073, %v4528, %v4530
        %v4580 = vadd.f32 %v4304, %v4454
        %v4581 = vadd.f32 %v4305, %v4456
        %v4582 = vadd.f32 %v4306, %v4455
        %v4583 = vadd.f32 %v4307, %v4459
        %v4584 = vadd.f32 %v4308, %v4461
        %v4585 = vadd.f32 %v4309, %v4460
        %v4586 = vadd.f32 %v4310, %v4464
        %v4587 = vadd.f32 %v4311, %v4466
        %v4588 = vadd.f32 %v4312, %v4465
        %v4589 = vadd.f32 %v4313, %v4469
        %v4590 = vadd.f32 %v4314, %v4471
        %v4591 = vadd.f32 %v4315, %v4470
        %v4592 = vadd.f32 %v4316, %v4474
        %v4593 = vadd.f32 %v4317, %v4476
        %v4594 = vadd.f32 %v4318, %v4475
        %v4595 = vadd.f32 %v4319, %v4479
        %v4596 = vadd.f32 %v4320, %v4481
        %v4597 = vadd.f32 %v4321, %v4480
        %v4598 = vadd.f32 %v4322, %v4484
        %v4599 = vadd.f32 %v4323, %v4486
        %v4600 = vadd.f32 %v4324, %v4485
        %v4601 = vadd.f32 %v4325, %v4489
        %v4602 = vadd.f32 %v4326, %v4491
        %v4603 = vadd.f32 %v4327, %v4490
        %v4604 = vadd.f32 %v4328, %v4494
        %v4605 = vadd.f32 %v4329, %v4496
        %v4606 = vadd.f32 %v4330, %v4495
        %v4607 = vadd.f32 %v4331, %v4499
        %v4608 = vadd.f32 %v4332, %v4501
        %v4609 = vadd.f32 %v4333, %v4500
        %v4610 = vadd.f32 %v4334, %v4504
        %v4611 = vadd.f32 %v4335, %v4506
        %v4612 = vadd.f32 %v4336, %v4505
        %v4613 = vadd.f32 %v4337, %v4509
        %v4614 = vadd.f32 %v4338, %v4511
        %v4615 = vadd.f32 %v4339, %v4510
        %v4616 = vadd.f32 %v4340, %v4514
        %v4617 = vadd.f32 %v4341, %v4516
        %v4618 = vadd.f32 %v4342, %v4515
        %v4619 = vadd.f32 %v4343, %v4519
        %v4620 = vadd.f32 %v4344, %v4521
        %v4621 = vadd.f32 %v4345, %v4520
        %v4622 = vadd.f32 %v4346, %v4524
        %v4623 = vadd.f32 %v4347, %v4526
        %v4624 = vadd.f32 %v4348, %v4525
        %v4625 = vadd.f32 %v4349, %v4529
        %v4626 = vadd.f32 %v4350, %v4531
        %v4627 = vadd.f32 %v4351, %v4530
        %s4628 = scalar_lea.vmem %s266, 32 [#allocation3]
        %v4629 = vld [vmem:[%s4628] sm:$0xff]
        %v4630 = vld [vmem:[%s4628 + $0x8] sm:$0xff]
        %v4631 = vld [vmem:[%s4628 + $0x10] sm:$0xff]
        %v4632 = vld [vmem:[%s4628 + $0x18] sm:$0xff]
        %v4633 = vpack.c.bf16 %v4630, %v4629
        %v4634 = vpack.c.bf16 %v4632, %v4631
        %v4683 = vrot.slane %v4580, 1
        %v4684 = vrot.slane %v4581, 1
        %v4685 = vsel %vm1073, %v4683, %v4684
        %v4686 = vrot.slane %v4582, 1
        %v4687 = vsel %vm1073, %v4684, %v4686
        %v4688 = vrot.slane %v4583, 1
        %v4689 = vrot.slane %v4584, 1
        %v4690 = vsel %vm1073, %v4688, %v4689
        %v4691 = vrot.slane %v4585, 1
        %v4692 = vsel %vm1073, %v4689, %v4691
        %v4693 = vrot.slane %v4586, 1
        %v4694 = vrot.slane %v4587, 1
        %v4695 = vsel %vm1073, %v4693, %v4694
        %v4696 = vrot.slane %v4588, 1
        %v4697 = vsel %vm1073, %v4694, %v4696
        %v4698 = vrot.slane %v4589, 1
        %v4699 = vrot.slane %v4590, 1
        %v4700 = vsel %vm1073, %v4698, %v4699
        %v4701 = vrot.slane %v4591, 1
        %v4702 = vsel %vm1073, %v4699, %v4701
        %v4703 = vrot.slane %v4592, 1
        %v4704 = vrot.slane %v4593, 1
        %v4705 = vsel %vm1073, %v4703, %v4704
        %v4706 = vrot.slane %v4594, 1
        %v4707 = vsel %vm1073, %v4704, %v4706
        %v4708 = vrot.slane %v4595, 1
        %v4709 = vrot.slane %v4596, 1
        %v4710 = vsel %vm1073, %v4708, %v4709
        %v4711 = vrot.slane %v4597, 1
        %v4712 = vsel %vm1073, %v4709, %v4711
        %v4713 = vrot.slane %v4598, 1
        %v4714 = vrot.slane %v4599, 1
        %v4715 = vsel %vm1073, %v4713, %v4714
        %v4716 = vrot.slane %v4600, 1
        %v4717 = vsel %vm1073, %v4714, %v4716
        %v4718 = vrot.slane %v4601, 1
        %v4719 = vrot.slane %v4602, 1
        %v4720 = vsel %vm1073, %v4718, %v4719
        %v4721 = vrot.slane %v4603, 1
        %v4722 = vsel %vm1073, %v4719, %v4721
        %v4723 = vrot.slane %v4604, 1
        %v4724 = vrot.slane %v4605, 1
        %v4725 = vsel %vm1073, %v4723, %v4724
        %v4726 = vrot.slane %v4606, 1
        %v4727 = vsel %vm1073, %v4724, %v4726
        %v4728 = vrot.slane %v4607, 1
        %v4729 = vrot.slane %v4608, 1
        %v4730 = vsel %vm1073, %v4728, %v4729
        %v4731 = vrot.slane %v4609, 1
        %v4732 = vsel %vm1073, %v4729, %v4731
        %v4733 = vrot.slane %v4610, 1
        %v4734 = vrot.slane %v4611, 1
        %v4735 = vsel %vm1073, %v4733, %v4734
        %v4736 = vrot.slane %v4612, 1
        %v4737 = vsel %vm1073, %v4734, %v4736
        %v4738 = vrot.slane %v4613, 1
        %v4739 = vrot.slane %v4614, 1
        %v4740 = vsel %vm1073, %v4738, %v4739
        %v4741 = vrot.slane %v4615, 1
        %v4742 = vsel %vm1073, %v4739, %v4741
        %v4743 = vrot.slane %v4616, 1
        %v4744 = vrot.slane %v4617, 1
        %v4745 = vsel %vm1073, %v4743, %v4744
        %v4746 = vrot.slane %v4618, 1
        %v4747 = vsel %vm1073, %v4744, %v4746
        %v4748 = vrot.slane %v4619, 1
        %v4749 = vrot.slane %v4620, 1
        %v4750 = vsel %vm1073, %v4748, %v4749
        %v4751 = vrot.slane %v4621, 1
        %v4752 = vsel %vm1073, %v4749, %v4751
        %v4753 = vrot.slane %v4622, 1
        %v4754 = vrot.slane %v4623, 1
        %v4755 = vsel %vm1073, %v4753, %v4754
        %v4756 = vrot.slane %v4624, 1
        %v4757 = vsel %vm1073, %v4754, %v4756
        %v4758 = vrot.slane %v4625, 1
        %v4759 = vrot.slane %v4626, 1
        %v4760 = vsel %vm1073, %v4758, %v4759
        %v4761 = vrot.slane %v4627, 1
        %v4762 = vsel %vm1073, %v4759, %v4761
        %v4795 = vpack.c.bf16 %v4687, %v4685
        %v4796 = vpack.c.bf16 %v4692, %v4690
        %v4797 = vpack.c.bf16 %v4697, %v4695
        %v4798 = vpack.c.bf16 %v4702, %v4700
        %v4799 = vpack.c.bf16 %v4707, %v4705
        %v4800 = vpack.c.bf16 %v4712, %v4710
        %v4801 = vpack.c.bf16 %v4717, %v4715
        %v4802 = vpack.c.bf16 %v4722, %v4720
        %v4803 = vpack.c.bf16 %v4727, %v4725
        %v4804 = vpack.c.bf16 %v4732, %v4730
        %v4805 = vpack.c.bf16 %v4737, %v4735
        %v4806 = vpack.c.bf16 %v4742, %v4740
        %v4807 = vpack.c.bf16 %v4747, %v4745
        %v4808 = vpack.c.bf16 %v4752, %v4750
        %v4809 = vpack.c.bf16 %v4757, %v4755
        %v4810 = vpack.c.bf16 %v4762, %v4760
        %v4812 = vsel %vm519, %v4795, 0
        %v4815 = vsel %vm519, %v4796, 0
        %v4818 = vsel %vm519, %v4797, 0
        %v4821 = vsel %vm519, %v4798, 0
        %v4824 = vsel %vm519, %v4799, 0
        %v4827 = vsel %vm519, %v4800, 0
        %v4830 = vsel %vm519, %v4801, 0
        %v4833 = vsel %vm519, %v4802, 0
        %v4836 = vsel %vm519, %v4803, 0
        %v4839 = vsel %vm519, %v4804, 0
        %v4842 = vsel %vm519, %v4805, 0
        %v4845 = vsel %vm519, %v4806, 0
        %v4848 = vsel %vm519, %v4807, 0
        %v4851 = vsel %vm519, %v4808, 0
        %v4854 = vsel %vm519, %v4809, 0
        %v4857 = vsel %vm519, %v4810, 0
        %4859 = vmatprep.subr.bf16.mxu0 0
        %4860 = vmatpush1.bf16.msra.mxu0 %v4633
        %4861 = vmatprep.subr.bf16.mxu0 0
        %4862 = vmatpush1.bf16.msra.mxu0 %v4634
        %4863 = vmatprep.subr.bf16.mxu0 0
        %4864 = vmatpush1.bf16.msra.mxu0 0
        %4865 = vmatprep.subr.bf16.mxu0 0
        %4866 = vmatpush1.bf16.msra.mxu0 0
        %4867 = vmatprep.subr.bf16.mxu0 0
        %4868 = vmatpush1.bf16.msra.mxu0 0
        %4869 = vmatprep.subr.bf16.mxu0 0
        %4870 = vmatpush1.bf16.msra.mxu0 0
        %4871 = vmatprep.subr.bf16.mxu0 0
        %4872 = vmatpush1.bf16.msra.mxu0 0
        %4873 = vmatprep.subr.bf16.mxu0 0
        %4874 = vmatpush1.bf16.msra.mxu0 0
        %4875 = vmatprep.subr.bf16.mxu0 0
        %4876 = vmatpush1.bf16.msra.mxu0 0
        %4877 = vmatprep.subr.bf16.mxu0 0
        %4878 = vmatpush1.bf16.msra.mxu0 0
        %4879 = vmatprep.subr.bf16.mxu0 0
        %4880 = vmatpush1.bf16.msra.mxu0 0
        %4881 = vmatprep.subr.bf16.mxu0 0
        %4882 = vmatpush1.bf16.msra.mxu0 0
        %4883 = vmatprep.subr.bf16.mxu0 0
        %4884 = vmatpush1.bf16.msra.mxu0 0
        %4885 = vmatprep.subr.bf16.mxu0 0
        %4886 = vmatpush1.bf16.msra.mxu0 0
        %4887 = vmatprep.subr.bf16.mxu0 0
        %4888 = vmatpush1.bf16.msra.mxu0 0
        %4889 = vmatprep.subr.bf16.mxu0 0
        %4890 = vmatpush1.bf16.msra.mxu0 0
        %4891 = vmatprep.mubr.bf16.mxu0 0
        %4892 = vmatmul.mubr.bf16.gmra.mrb[0].mxu0 %v4812
        %v4893 = vpop.f32.mrb[0].mxu0
        %v4894 = vadd.f32 0.0, %v4893
        %v4895 = vpop.f32.mrb[0].mxu0
        %v4896 = vpop.f32.mrb[0].mxu0
        %v4897 = vadd.f32 0.0, %v4896
        %v4898 = vpop.f32.mrb[0].mxu0
        %4899 = vmatprep.mubr.bf16.mxu0 0
        %4900 = vmatmul.mubr.bf16.gmra.mrb[0].mxu0 %v4815
        %v4901 = vpop.f32.mrb[0].mxu0
        %v4902 = vadd.f32 0.0, %v4901
        %v4903 = vpop.f32.mrb[0].mxu0
        %v4904 = vpop.f32.mrb[0].mxu0
        %v4905 = vadd.f32 0.0, %v4904
        %v4906 = vpop.f32.mrb[0].mxu0
        %4907 = vmatprep.mubr.bf16.mxu0 0
        %4908 = vmatmul.mubr.bf16.gmra.mrb[0].mxu0 %v4818
        %v4909 = vpop.f32.mrb[0].mxu0
        %v4910 = vadd.f32 0.0, %v4909
        %v4911 = vpop.f32.mrb[0].mxu0
        %v4912 = vpop.f32.mrb[0].mxu0
        %v4913 = vadd.f32 0.0, %v4912
        %v4914 = vpop.f32.mrb[0].mxu0
        %4915 = vmatprep.mubr.bf16.mxu0 0
        %4916 = vmatmul.mubr.bf16.gmra.mrb[0].mxu0 %v4821
        %v4917 = vpop.f32.mrb[0].mxu0
        %v4918 = vadd.f32 0.0, %v4917
        %v4919 = vpop.f32.mrb[0].mxu0
        %v4920 = vpop.f32.mrb[0].mxu0
        %v4921 = vadd.f32 0.0, %v4920
        %v4922 = vpop.f32.mrb[0].mxu0
        %4923 = vmatprep.mubr.bf16.mxu0 0
        %4924 = vmatmul.mubr.bf16.gmra.mrb[0].mxu0 %v4824
        %v4925 = vpop.f32.mrb[0].mxu0
        %v4926 = vadd.f32 0.0, %v4925
        %v4927 = vpop.f32.mrb[0].mxu0
        %v4928 = vpop.f32.mrb[0].mxu0
        %v4929 = vadd.f32 0.0, %v4928
        %v4930 = vpop.f32.mrb[0].mxu0
        %4931 = vmatprep.mubr.bf16.mxu0 0
        %4932 = vmatmul.mubr.bf16.gmra.mrb[0].mxu0 %v4827
        %v4933 = vpop.f32.mrb[0].mxu0
        %v4934 = vadd.f32 0.0, %v4933
        %v4935 = vpop.f32.mrb[0].mxu0
        %v4936 = vpop.f32.mrb[0].mxu0
        %v4937 = vadd.f32 0.0, %v4936
        %v4938 = vpop.f32.mrb[0].mxu0
        %4939 = vmatprep.mubr.bf16.mxu0 0
        %4940 = vmatmul.mubr.bf16.gmra.mrb[0].mxu0 %v4830
        %v4941 = vpop.f32.mrb[0].mxu0
        %v4942 = vadd.f32 0.0, %v4941
        %v4943 = vpop.f32.mrb[0].mxu0
        %v4944 = vpop.f32.mrb[0].mxu0
        %v4945 = vadd.f32 0.0, %v4944
        %v4946 = vpop.f32.mrb[0].mxu0
        %4947 = vmatprep.mubr.bf16.mxu0 0
        %4948 = vmatmul.mubr.bf16.gmra.mrb[0].mxu0 %v4833
        %v4949 = vpop.f32.mrb[0].mxu0
        %v4950 = vadd.f32 0.0, %v4949
        %v4951 = vpop.f32.mrb[0].mxu0
        %v4952 = vpop.f32.mrb[0].mxu0
        %v4953 = vadd.f32 0.0, %v4952
        %v4954 = vpop.f32.mrb[0].mxu0
        %4955 = vmatprep.mubr.bf16.mxu0 0
        %4956 = vmatmul.mubr.bf16.gmra.mrb[0].mxu0 %v4836
        %v4957 = vpop.f32.mrb[0].mxu0
        %v4958 = vadd.f32 0.0, %v4957
        %v4959 = vpop.f32.mrb[0].mxu0
        %v4960 = vpop.f32.mrb[0].mxu0
        %v4961 = vadd.f32 0.0, %v4960
        %v4962 = vpop.f32.mrb[0].mxu0
        %4963 = vmatprep.mubr.bf16.mxu0 0
        %4964 = vmatmul.mubr.bf16.gmra.mrb[0].mxu0 %v4839
        %v4965 = vpop.f32.mrb[0].mxu0
        %v4966 = vadd.f32 0.0, %v4965
        %v4967 = vpop.f32.mrb[0].mxu0
        %v4968 = vpop.f32.mrb[0].mxu0
        %v4969 = vadd.f32 0.0, %v4968
        %v4970 = vpop.f32.mrb[0].mxu0
        %4971 = vmatprep.mubr.bf16.mxu0 0
        %4972 = vmatmul.mubr.bf16.gmra.mrb[0].mxu0 %v4842
        %v4973 = vpop.f32.mrb[0].mxu0
        %v4974 = vadd.f32 0.0, %v4973
        %v4975 = vpop.f32.mrb[0].mxu0
        %v4976 = vpop.f32.mrb[0].mxu0
        %v4977 = vadd.f32 0.0, %v4976
        %v4978 = vpop.f32.mrb[0].mxu0
        %4979 = vmatprep.mubr.bf16.mxu0 0
        %4980 = vmatmul.mubr.bf16.gmra.mrb[0].mxu0 %v4845
        %v4981 = vpop.f32.mrb[0].mxu0
        %v4982 = vadd.f32 0.0, %v4981
        %v4983 = vpop.f32.mrb[0].mxu0
        %v4984 = vpop.f32.mrb[0].mxu0
        %v4985 = vadd.f32 0.0, %v4984
        %v4986 = vpop.f32.mrb[0].mxu0
        %4987 = vmatprep.mubr.bf16.mxu0 0
        %4988 = vmatmul.mubr.bf16.gmra.mrb[0].mxu0 %v4848
        %v4989 = vpop.f32.mrb[0].mxu0
        %v4990 = vadd.f32 0.0, %v4989
        %v4991 = vpop.f32.mrb[0].mxu0
        %v4992 = vpop.f32.mrb[0].mxu0
        %v4993 = vadd.f32 0.0, %v4992
        %v4994 = vpop.f32.mrb[0].mxu0
        %4995 = vmatprep.mubr.bf16.mxu0 0
        %4996 = vmatmul.mubr.bf16.gmra.mrb[0].mxu0 %v4851
        %v4997 = vpop.f32.mrb[0].mxu0
        %v4998 = vadd.f32 0.0, %v4997
        %v4999 = vpop.f32.mrb[0].mxu0
        %v5000 = vpop.f32.mrb[0].mxu0
        %v5001 = vadd.f32 0.0, %v5000
        %v5002 = vpop.f32.mrb[0].mxu0
        %5003 = vmatprep.mubr.bf16.mxu0 0
        %5004 = vmatmul.mubr.bf16.gmra.mrb[0].mxu0 %v4854
        %v5005 = vpop.f32.mrb[0].mxu0
        %v5006 = vadd.f32 0.0, %v5005
        %v5007 = vpop.f32.mrb[0].mxu0
        %v5008 = vpop.f32.mrb[0].mxu0
        %v5009 = vadd.f32 0.0, %v5008
        %v5010 = vpop.f32.mrb[0].mxu0
        %5011 = vmatprep.mubr.bf16.mxu0 0
        %5012 = vmatmul.mubr.bf16.gmra.mrb[0].mxu0 %v4857
        %v5013 = vpop.f32.mrb[0].mxu0
        %v5014 = vadd.f32 0.0, %v5013
        %v5015 = vpop.f32.mrb[0].mxu0
        %v5016 = vpop.f32.mrb[0].mxu0
        %v5017 = vadd.f32 0.0, %v5016
        %v5018 = vpop.f32.mrb[0].mxu0
        %5019 = vdwg.mxu0
        %v5020 = vld [vmem:[%s324 + $0x1] sm:$0x1]
        %v5021 = vlaneseq
        %v5022 = vshrl.u32 %v5021, 7
        %v5023 = vsub.s32 0, %v5022
        %v5024 = vrot.slane %v5020, %v5023
        %v5025 = vmul.f32 %v4894, %v5024
        %v5026 = vmul.f32 %v4897, %v5024
        %v5027 = vmul.f32 %v4902, %v5024
        %v5028 = vmul.f32 %v4905, %v5024
        %v5029 = vmul.f32 %v4910, %v5024
        %v5030 = vmul.f32 %v4913, %v5024
        %v5031 = vmul.f32 %v4918, %v5024
        %v5032 = vmul.f32 %v4921, %v5024
        %v5033 = vmul.f32 %v4926, %v5024
        %v5034 = vmul.f32 %v4929, %v5024
        %v5035 = vmul.f32 %v4934, %v5024
        %v5036 = vmul.f32 %v4937, %v5024
        %v5037 = vmul.f32 %v4942, %v5024
        %v5038 = vmul.f32 %v4945, %v5024
        %v5039 = vmul.f32 %v4950, %v5024
        %v5040 = vmul.f32 %v4953, %v5024
        %v5041 = vmul.f32 %v4958, %v5024
        %v5042 = vmul.f32 %v4961, %v5024
        %v5043 = vmul.f32 %v4966, %v5024
        %v5044 = vmul.f32 %v4969, %v5024
        %v5045 = vmul.f32 %v4974, %v5024
        %v5046 = vmul.f32 %v4977, %v5024
        %v5047 = vmul.f32 %v4982, %v5024
        %v5048 = vmul.f32 %v4985, %v5024
        %v5049 = vmul.f32 %v4990, %v5024
        %v5050 = vmul.f32 %v4993, %v5024
        %v5051 = vmul.f32 %v4998, %v5024
        %v5052 = vmul.f32 %v5001, %v5024
        %v5053 = vmul.f32 %v5006, %v5024
        %v5054 = vmul.f32 %v5009, %v5024
        %v5055 = vmul.f32 %v5014, %v5024
        %v5056 = vmul.f32 %v5017, %v5024
        %v5057 = vld [vmem:[%s328 + $0x1] sm:$0x1]
        %v5058 = vlaneseq
        %v5059 = vshrl.u32 %v5058, 7
        %v5060 = vsub.s32 0, %v5059
        %v5061 = vrot.slane %v5057, %v5060
        %v5062 = vadd.f32 %v5025, %v5061
        %v5063 = vadd.f32 %v5026, %v5061
        %v5064 = vadd.f32 %v5027, %v5061
        %v5065 = vadd.f32 %v5028, %v5061
        %v5066 = vadd.f32 %v5029, %v5061
        %v5067 = vadd.f32 %v5030, %v5061
        %v5068 = vadd.f32 %v5031, %v5061
        %v5069 = vadd.f32 %v5032, %v5061
        %v5070 = vadd.f32 %v5033, %v5061
        %v5071 = vadd.f32 %v5034, %v5061
        %v5072 = vadd.f32 %v5035, %v5061
        %v5073 = vadd.f32 %v5036, %v5061
        %v5074 = vadd.f32 %v5037, %v5061
        %v5075 = vadd.f32 %v5038, %v5061
        %v5076 = vadd.f32 %v5039, %v5061
        %v5077 = vadd.f32 %v5040, %v5061
        %v5078 = vadd.f32 %v5041, %v5061
        %v5079 = vadd.f32 %v5042, %v5061
        %v5080 = vadd.f32 %v5043, %v5061
        %v5081 = vadd.f32 %v5044, %v5061
        %v5082 = vadd.f32 %v5045, %v5061
        %v5083 = vadd.f32 %v5046, %v5061
        %v5084 = vadd.f32 %v5047, %v5061
        %v5085 = vadd.f32 %v5048, %v5061
        %v5086 = vadd.f32 %v5049, %v5061
        %v5087 = vadd.f32 %v5050, %v5061
        %v5088 = vadd.f32 %v5051, %v5061
        %v5089 = vadd.f32 %v5052, %v5061
        %v5090 = vadd.f32 %v5053, %v5061
        %v5091 = vadd.f32 %v5054, %v5061
        %v5092 = vadd.f32 %v5055, %v5061
        %v5093 = vadd.f32 %v5056, %v5061
        %v5094 = vmax.f32 %v5062, 0.0
        %v5095 = vmax.f32 %v5063, 0.0
        %v5096 = vmax.f32 %v5064, 0.0
        %v5097 = vmax.f32 %v5065, 0.0
        %v5098 = vmax.f32 %v5066, 0.0
        %v5099 = vmax.f32 %v5067, 0.0
        %v5100 = vmax.f32 %v5068, 0.0
        %v5101 = vmax.f32 %v5069, 0.0
        %v5102 = vmax.f32 %v5070, 0.0
        %v5103 = vmax.f32 %v5071, 0.0
        %v5104 = vmax.f32 %v5072, 0.0
        %v5105 = vmax.f32 %v5073, 0.0
        %v5106 = vmax.f32 %v5074, 0.0
        %v5107 = vmax.f32 %v5075, 0.0
        %v5108 = vmax.f32 %v5076, 0.0
        %v5109 = vmax.f32 %v5077, 0.0
        %v5110 = vmax.f32 %v5078, 0.0
        %v5111 = vmax.f32 %v5079, 0.0
        %v5112 = vmax.f32 %v5080, 0.0
        %v5113 = vmax.f32 %v5081, 0.0
        %v5114 = vmax.f32 %v5082, 0.0
        %v5115 = vmax.f32 %v5083, 0.0
        %v5116 = vmax.f32 %v5084, 0.0
        %v5117 = vmax.f32 %v5085, 0.0
        %v5118 = vmax.f32 %v5086, 0.0
        %v5119 = vmax.f32 %v5087, 0.0
        %v5120 = vmax.f32 %v5088, 0.0
        %v5121 = vmax.f32 %v5089, 0.0
        %v5122 = vmax.f32 %v5090, 0.0
        %v5123 = vmax.f32 %v5091, 0.0
        %v5124 = vmax.f32 %v5092, 0.0
        %v5125 = vmax.f32 %v5093, 0.0
        %5126 = vst.msk [vmem:[%s518 + $0x1] sm:$0xff] %vm519, %v5094
        %5127 = vst.msk [vmem:[%s518 + $0x9] sm:$0xff] %vm519, %v5095
        %5128 = vst.msk [vmem:[%s518 + $0x19] sm:$0xff] %vm519, %v5096
        %5129 = vst.msk [vmem:[%s518 + $0x21] sm:$0xff] %vm519, %v5097
        %5130 = vst.msk [vmem:[%s518 + $0x31] sm:$0xff] %vm519, %v5098
        %5131 = vst.msk [vmem:[%s518 + $0x39] sm:$0xff] %vm519, %v5099
        %5132 = vst.msk [vmem:[%s518 + $0x49] sm:$0xff] %vm519, %v5100
        %5133 = vst.msk [vmem:[%s518 + $0x51] sm:$0xff] %vm519, %v5101
        %5134 = vst.msk [vmem:[%s518 + $0x61] sm:$0xff] %vm519, %v5102
        %5135 = vst.msk [vmem:[%s518 + $0x69] sm:$0xff] %vm519, %v5103
        %5136 = vst.msk [vmem:[%s518 + $0x79] sm:$0xff] %vm519, %v5104
        %5137 = vst.msk [vmem:[%s518 + $0x81] sm:$0xff] %vm519, %v5105
        %5138 = vst.msk [vmem:[%s518 + $0x91] sm:$0xff] %vm519, %v5106
        %5139 = vst.msk [vmem:[%s518 + $0x99] sm:$0xff] %vm519, %v5107
        %5140 = vst.msk [vmem:[%s518 + $0xa9] sm:$0xff] %vm519, %v5108
        %5141 = vst.msk [vmem:[%s518 + $0xb1] sm:$0xff] %vm519, %v5109
        %5142 = vst.msk [vmem:[%s518 + $0xc1] sm:$0xff] %vm519, %v5110
        %5143 = vst.msk [vmem:[%s518 + $0xc9] sm:$0xff] %vm519, %v5111
        %5144 = vst.msk [vmem:[%s518 + $0xd9] sm:$0xff] %vm519, %v5112
        %5145 = vst.msk [vmem:[%s518 + $0xe1] sm:$0xff] %vm519, %v5113
        %5146 = vst.msk [vmem:[%s518 + $0xf1] sm:$0xff] %vm519, %v5114
        %5147 = vst.msk [vmem:[%s518 + $0xf9] sm:$0xff] %vm519, %v5115
        %5148 = vst.msk [vmem:[%s518 + $0x109] sm:$0xff] %vm519, %v5116
        %5149 = vst.msk [vmem:[%s518 + $0x111] sm:$0xff] %vm519, %v5117
        %5150 = vst.msk [vmem:[%s518 + $0x121] sm:$0xff] %vm519, %v5118
        %5151 = vst.msk [vmem:[%s518 + $0x129] sm:$0xff] %vm519, %v5119
        %5152 = vst.msk [vmem:[%s518 + $0x139] sm:$0xff] %vm519, %v5120
        %5153 = vst.msk [vmem:[%s518 + $0x141] sm:$0xff] %vm519, %v5121
        %5154 = vst.msk [vmem:[%s518 + $0x151] sm:$0xff] %vm519, %v5122
        %5155 = vst.msk [vmem:[%s518 + $0x159] sm:$0xff] %vm519, %v5123
        %5156 = vst.msk [vmem:[%s518 + $0x169] sm:$0xff] %vm519, %v5124
        %5157 = vst.msk [vmem:[%s518 + $0x171] sm:$0xff] %vm519, %v5125
        %v5158 = vld [vmem:[#allocation2] sm:$0xff]
        %v5159 = vld [vmem:[#allocation2 + $0x8] sm:$0xff]
        %v5160 = vld [vmem:[#allocation2 + $0x10] sm:$0x3]
        %v5161 = vld [vmem:[#allocation2 + $0x18] sm:$0xff]
        %v5162 = vld [vmem:[#allocation2 + $0x20] sm:$0xff]
        %v5163 = vld [vmem:[#allocation2 + $0x28] sm:$0x3]
        %v5164 = vld [vmem:[#allocation2 + $0x30] sm:$0xff]
        %v5165 = vld [vmem:[#allocation2 + $0x38] sm:$0xff]
        %v5166 = vld [vmem:[#allocation2 + $0x40] sm:$0x3]
        %v5167 = vld [vmem:[#allocation2 + $0x48] sm:$0xff]
        %v5168 = vld [vmem:[#allocation2 + $0x50] sm:$0xff]
        %v5169 = vld [vmem:[#allocation2 + $0x58] sm:$0x3]
        %v5170 = vld [vmem:[#allocation2 + $0x60] sm:$0xff]
        %v5171 = vld [vmem:[#allocation2 + $0x68] sm:$0xff]
        %v5172 = vld [vmem:[#allocation2 + $0x70] sm:$0x3]
        %v5173 = vld [vmem:[#allocation2 + $0x78] sm:$0xff]
        %v5174 = vld [vmem:[#allocation2 + $0x80] sm:$0xff]
        %v5175 = vld [vmem:[#allocation2 + $0x88] sm:$0x3]
        %v5176 = vld [vmem:[#allocation2 + $0x90] sm:$0xff]
        %v5177 = vld [vmem:[#allocation2 + $0x98] sm:$0xff]
        %v5178 = vld [vmem:[#allocation2 + $0xa0] sm:$0x3]
        %v5179 = vld [vmem:[#allocation2 + $0xa8] sm:$0xff]
        %v5180 = vld [vmem:[#allocation2 + $0xb0] sm:$0xff]
        %v5181 = vld [vmem:[#allocation2 + $0xb8] sm:$0x3]
        %v5182 = vld [vmem:[#allocation2 + $0xc0] sm:$0xff]
        %v5183 = vld [vmem:[#allocation2 + $0xc8] sm:$0xff]
        %v5184 = vld [vmem:[#allocation2 + $0xd0] sm:$0x3]
        %v5185 = vld [vmem:[#allocation2 + $0xd8] sm:$0xff]
        %v5186 = vld [vmem:[#allocation2 + $0xe0] sm:$0xff]
        %v5187 = vld [vmem:[#allocation2 + $0xe8] sm:$0x3]
        %v5188 = vld [vmem:[#allocation2 + $0xf0] sm:$0xff]
        %v5189 = vld [vmem:[#allocation2 + $0xf8] sm:$0xff]
        %v5190 = vld [vmem:[#allocation2 + $0x100] sm:$0x3]
        %v5191 = vld [vmem:[#allocation2 + $0x108] sm:$0xff]
        %v5192 = vld [vmem:[#allocation2 + $0x110] sm:$0xff]
        %v5193 = vld [vmem:[#allocation2 + $0x118] sm:$0x3]
        %v5194 = vld [vmem:[#allocation2 + $0x120] sm:$0xff]
        %v5195 = vld [vmem:[#allocation2 + $0x128] sm:$0xff]
        %v5196 = vld [vmem:[#allocation2 + $0x130] sm:$0x3]
        %v5197 = vld [vmem:[#allocation2 + $0x138] sm:$0xff]
        %v5198 = vld [vmem:[#allocation2 + $0x140] sm:$0xff]
        %v5199 = vld [vmem:[#allocation2 + $0x148] sm:$0x3]
        %v5200 = vld [vmem:[#allocation2 + $0x150] sm:$0xff]
        %v5201 = vld [vmem:[#allocation2 + $0x158] sm:$0xff]
        %v5202 = vld [vmem:[#allocation2 + $0x160] sm:$0x3]
        %v5203 = vld [vmem:[#allocation2 + $0x168] sm:$0xff]
        %v5204 = vld [vmem:[#allocation2 + $0x170] sm:$0xff]
        %v5205 = vld [vmem:[#allocation2 + $0x178] sm:$0x3]
        %v5206 = vld [vmem:[#allocation2 + $0x180] sm:$0xff]
        %v5207 = vld [vmem:[#allocation2 + $0x188] sm:$0xff]
        %v5208 = vld [vmem:[#allocation2 + $0x190] sm:$0x3]
        %v5209 = vld [vmem:[#allocation2 + $0x198] sm:$0xff]
        %v5210 = vld [vmem:[#allocation2 + $0x1a0] sm:$0xff]
        %v5211 = vld [vmem:[#allocation2 + $0x1a8] sm:$0x3]
        %s5212 = scalar_lea.vmem %s320, 32
        %v5213 = vld [vmem:[%s5212] sm:$0xff]
        %v5214 = vld [vmem:[%s5212 + $0x8] sm:$0x1]
        %v5215 = vlaneseq
        %v5216 = vshrl.u32 %v5215, 7
        %v5217 = vsub.s32 4, %v5216
        %v5218 = vrot.slane %v5213, %v5217
        %v5219 = vmul.f32 %v5161, %v5218
        %v5220 = vmul.f32 %v5162, %v5218
        %v5221 = vmul.f32 %v5163, %v5218
        %v5222 = vmul.f32 %v5164, %v5218
        %v5223 = vmul.f32 %v5165, %v5218
        %v5224 = vmul.f32 %v5166, %v5218
        %v5225 = vmul.f32 %v5167, %v5218
        %v5226 = vmul.f32 %v5168, %v5218
        %v5227 = vmul.f32 %v5169, %v5218
        %v5228 = vmul.f32 %v5170, %v5218
        %v5229 = vmul.f32 %v5171, %v5218
        %v5230 = vmul.f32 %v5172, %v5218
        %v5231 = vmul.f32 %v5173, %v5218
        %v5232 = vmul.f32 %v5174, %v5218
        %v5233 = vmul.f32 %v5175, %v5218
        %v5234 = vmul.f32 %v5176, %v5218
        %v5235 = vmul.f32 %v5177, %v5218
        %v5236 = vmul.f32 %v5178, %v5218
        %v5237 = vmul.f32 %v5179, %v5218
        %v5238 = vmul.f32 %v5180, %v5218
        %v5239 = vmul.f32 %v5181, %v5218
        %v5240 = vmul.f32 %v5182, %v5218
        %v5241 = vmul.f32 %v5183, %v5218
        %v5242 = vmul.f32 %v5184, %v5218
        %v5243 = vmul.f32 %v5185, %v5218
        %v5244 = vmul.f32 %v5186, %v5218
        %v5245 = vmul.f32 %v5187, %v5218
        %v5246 = vmul.f32 %v5188, %v5218
        %v5247 = vmul.f32 %v5189, %v5218
        %v5248 = vmul.f32 %v5190, %v5218
        %v5249 = vmul.f32 %v5191, %v5218
        %v5250 = vmul.f32 %v5192, %v5218
        %v5251 = vmul.f32 %v5193, %v5218
        %v5252 = vmul.f32 %v5194, %v5218
        %v5253 = vmul.f32 %v5195, %v5218
        %v5254 = vmul.f32 %v5196, %v5218
        %v5255 = vmul.f32 %v5197, %v5218
        %v5256 = vmul.f32 %v5198, %v5218
        %v5257 = vmul.f32 %v5199, %v5218
        %v5258 = vmul.f32 %v5200, %v5218
        %v5259 = vmul.f32 %v5201, %v5218
        %v5260 = vmul.f32 %v5202, %v5218
        %v5261 = vmul.f32 %v5203, %v5218
        %v5262 = vmul.f32 %v5204, %v5218
        %v5263 = vmul.f32 %v5205, %v5218
        %v5264 = vmul.f32 %v5206, %v5218
        %v5265 = vmul.f32 %v5207, %v5218
        %v5266 = vmul.f32 %v5208, %v5218
        %v5267 = vlaneseq
        %v5268 = vshrl.u32 %v5267, 7
        %v5269 = vsub.s32 0, %v5268
        %v5270 = vrot.slane %v5213, %v5269
        %v5271 = vmul.f32 %v5158, %v5270
        %v5272 = vmul.f32 %v5159, %v5270
        %v5273 = vmul.f32 %v5161, %v5270
        %v5274 = vmul.f32 %v5162, %v5270
        %v5275 = vmul.f32 %v5164, %v5270
        %v5276 = vmul.f32 %v5165, %v5270
        %v5277 = vmul.f32 %v5167, %v5270
        %v5278 = vmul.f32 %v5168, %v5270
        %v5279 = vmul.f32 %v5170, %v5270
        %v5280 = vmul.f32 %v5171, %v5270
        %v5281 = vmul.f32 %v5173, %v5270
        %v5282 = vmul.f32 %v5174, %v5270
        %v5283 = vmul.f32 %v5176, %v5270
        %v5284 = vmul.f32 %v5177, %v5270
        %v5285 = vmul.f32 %v5179, %v5270
        %v5286 = vmul.f32 %v5180, %v5270
        %v5287 = vmul.f32 %v5182, %v5270
        %v5288 = vmul.f32 %v5183, %v5270
        %v5289 = vmul.f32 %v5185, %v5270
        %v5290 = vmul.f32 %v5186, %v5270
        %v5291 = vmul.f32 %v5188, %v5270
        %v5292 = vmul.f32 %v5189, %v5270
        %v5293 = vmul.f32 %v5191, %v5270
        %v5294 = vmul.f32 %v5192, %v5270
        %v5295 = vmul.f32 %v5194, %v5270
        %v5296 = vmul.f32 %v5195, %v5270
        %v5297 = vmul.f32 %v5197, %v5270
        %v5298 = vmul.f32 %v5198, %v5270
        %v5299 = vmul.f32 %v5200, %v5270
        %v5300 = vmul.f32 %v5201, %v5270
        %v5301 = vmul.f32 %v5203, %v5270
        %v5302 = vmul.f32 %v5204, %v5270
        %v5335 = vrot.slane %v5271, 7
        %v5336 = vrot.slane %v5272, 7
        %v5337 = vsel %vm728, %v5335, %v5336
        %v5338 = vrot.slane %v5273, 7
        %v5339 = vrot.slane %v5274, 7
        %v5340 = vsel %vm728, %v5338, %v5339
        %v5341 = vrot.slane %v5275, 7
        %v5342 = vrot.slane %v5276, 7
        %v5343 = vsel %vm728, %v5341, %v5342
        %v5344 = vrot.slane %v5277, 7
        %v5345 = vrot.slane %v5278, 7
        %v5346 = vsel %vm728, %v5344, %v5345
        %v5347 = vrot.slane %v5279, 7
        %v5348 = vrot.slane %v5280, 7
        %v5349 = vsel %vm728, %v5347, %v5348
        %v5350 = vrot.slane %v5281, 7
        %v5351 = vrot.slane %v5282, 7
        %v5352 = vsel %vm728, %v5350, %v5351
        %v5353 = vrot.slane %v5283, 7
        %v5354 = vrot.slane %v5284, 7
        %v5355 = vsel %vm728, %v5353, %v5354
        %v5356 = vrot.slane %v5285, 7
        %v5357 = vrot.slane %v5286, 7
        %v5358 = vsel %vm728, %v5356, %v5357
        %v5359 = vrot.slane %v5287, 7
        %v5360 = vrot.slane %v5288, 7
        %v5361 = vsel %vm728, %v5359, %v5360
        %v5362 = vrot.slane %v5289, 7
        %v5363 = vrot.slane %v5290, 7
        %v5364 = vsel %vm728, %v5362, %v5363
        %v5365 = vrot.slane %v5291, 7
        %v5366 = vrot.slane %v5292, 7
        %v5367 = vsel %vm728, %v5365, %v5366
        %v5368 = vrot.slane %v5293, 7
        %v5369 = vrot.slane %v5294, 7
        %v5370 = vsel %vm728, %v5368, %v5369
        %v5371 = vrot.slane %v5295, 7
        %v5372 = vrot.slane %v5296, 7
        %v5373 = vsel %vm728, %v5371, %v5372
        %v5374 = vrot.slane %v5297, 7
        %v5375 = vrot.slane %v5298, 7
        %v5376 = vsel %vm728, %v5374, %v5375
        %v5377 = vrot.slane %v5299, 7
        %v5378 = vrot.slane %v5300, 7
        %v5379 = vsel %vm728, %v5377, %v5378
        %v5380 = vrot.slane %v5301, 7
        %v5381 = vrot.slane %v5302, 7
        %v5382 = vsel %vm728, %v5380, %v5381
        %v5431 = vadd.f32 %v5219, %v5335
        %v5432 = vadd.f32 %v5220, %v5337
        %v5433 = vadd.f32 %v5221, %v5336
        %v5434 = vadd.f32 %v5222, %v5338
        %v5435 = vadd.f32 %v5223, %v5340
        %v5436 = vadd.f32 %v5224, %v5339
        %v5437 = vadd.f32 %v5225, %v5341
        %v5438 = vadd.f32 %v5226, %v5343
        %v5439 = vadd.f32 %v5227, %v5342
        %v5440 = vadd.f32 %v5228, %v5344
        %v5441 = vadd.f32 %v5229, %v5346
        %v5442 = vadd.f32 %v5230, %v5345
        %v5443 = vadd.f32 %v5231, %v5347
        %v5444 = vadd.f32 %v5232, %v5349
        %v5445 = vadd.f32 %v5233, %v5348
        %v5446 = vadd.f32 %v5234, %v5350
        %v5447 = vadd.f32 %v5235, %v5352
        %v5448 = vadd.f32 %v5236, %v5351
        %v5449 = vadd.f32 %v5237, %v5353
        %v5450 = vadd.f32 %v5238, %v5355
        %v5451 = vadd.f32 %v5239, %v5354
        %v5452 = vadd.f32 %v5240, %v5356
        %v5453 = vadd.f32 %v5241, %v5358
        %v5454 = vadd.f32 %v5242, %v5357
        %v5455 = vadd.f32 %v5243, %v5359
        %v5456 = vadd.f32 %v5244, %v5361
        %v5457 = vadd.f32 %v5245, %v5360
        %v5458 = vadd.f32 %v5246, %v5362
        %v5459 = vadd.f32 %v5247, %v5364
        %v5460 = vadd.f32 %v5248, %v5363
        %v5461 = vadd.f32 %v5249, %v5365
        %v5462 = vadd.f32 %v5250, %v5367
        %v5463 = vadd.f32 %v5251, %v5366
        %v5464 = vadd.f32 %v5252, %v5368
        %v5465 = vadd.f32 %v5253, %v5370
        %v5466 = vadd.f32 %v5254, %v5369
        %v5467 = vadd.f32 %v5255, %v5371
        %v5468 = vadd.f32 %v5256, %v5373
        %v5469 = vadd.f32 %v5257, %v5372
        %v5470 = vadd.f32 %v5258, %v5374
        %v5471 = vadd.f32 %v5259, %v5376
        %v5472 = vadd.f32 %v5260, %v5375
        %v5473 = vadd.f32 %v5261, %v5377
        %v5474 = vadd.f32 %v5262, %v5379
        %v5475 = vadd.f32 %v5263, %v5378
        %v5476 = vadd.f32 %v5264, %v5380
        %v5477 = vadd.f32 %v5265, %v5382
        %v5478 = vadd.f32 %v5266, %v5381
        %v5479 = vlaneseq
        %v5480 = vshrl.u32 %v5479, 7
        %v5481 = vsub.s32 1, %v5480
        %v5482 = vrot.slane %v5213, %v5481
        %v5483 = vmul.f32 %v5158, %v5482
        %v5484 = vmul.f32 %v5159, %v5482
        %v5485 = vmul.f32 %v5160, %v5482
        %v5486 = vmul.f32 %v5161, %v5482
        %v5487 = vmul.f32 %v5162, %v5482
        %v5488 = vmul.f32 %v5163, %v5482
        %v5489 = vmul.f32 %v5164, %v5482
        %v5490 = vmul.f32 %v5165, %v5482
        %v5491 = vmul.f32 %v5166, %v5482
        %v5492 = vmul.f32 %v5167, %v5482
        %v5493 = vmul.f32 %v5168, %v5482
        %v5494 = vmul.f32 %v5169, %v5482
        %v5495 = vmul.f32 %v5170, %v5482
        %v5496 = vmul.f32 %v5171, %v5482
        %v5497 = vmul.f32 %v5172, %v5482
        %v5498 = vmul.f32 %v5173, %v5482
        %v5499 = vmul.f32 %v5174, %v5482
        %v5500 = vmul.f32 %v5175, %v5482
        %v5501 = vmul.f32 %v5176, %v5482
        %v5502 = vmul.f32 %v5177, %v5482
        %v5503 = vmul.f32 %v5178, %v5482
        %v5504 = vmul.f32 %v5179, %v5482
        %v5505 = vmul.f32 %v5180, %v5482
        %v5506 = vmul.f32 %v5181, %v5482
        %v5507 = vmul.f32 %v5182, %v5482
        %v5508 = vmul.f32 %v5183, %v5482
        %v5509 = vmul.f32 %v5184, %v5482
        %v5510 = vmul.f32 %v5185, %v5482
        %v5511 = vmul.f32 %v5186, %v5482
        %v5512 = vmul.f32 %v5187, %v5482
        %v5513 = vmul.f32 %v5188, %v5482
        %v5514 = vmul.f32 %v5189, %v5482
        %v5515 = vmul.f32 %v5190, %v5482
        %v5516 = vmul.f32 %v5191, %v5482
        %v5517 = vmul.f32 %v5192, %v5482
        %v5518 = vmul.f32 %v5193, %v5482
        %v5519 = vmul.f32 %v5194, %v5482
        %v5520 = vmul.f32 %v5195, %v5482
        %v5521 = vmul.f32 %v5196, %v5482
        %v5522 = vmul.f32 %v5197, %v5482
        %v5523 = vmul.f32 %v5198, %v5482
        %v5524 = vmul.f32 %v5199, %v5482
        %v5525 = vmul.f32 %v5200, %v5482
        %v5526 = vmul.f32 %v5201, %v5482
        %v5527 = vmul.f32 %v5202, %v5482
        %v5528 = vmul.f32 %v5203, %v5482
        %v5529 = vmul.f32 %v5204, %v5482
        %v5530 = vmul.f32 %v5205, %v5482
        %v5531 = vadd.f32 %v5431, %v5483
        %v5532 = vadd.f32 %v5432, %v5484
        %v5533 = vadd.f32 %v5433, %v5485
        %v5534 = vadd.f32 %v5434, %v5486
        %v5535 = vadd.f32 %v5435, %v5487
        %v5536 = vadd.f32 %v5436, %v5488
        %v5537 = vadd.f32 %v5437, %v5489
        %v5538 = vadd.f32 %v5438, %v5490
        %v5539 = vadd.f32 %v5439, %v5491
        %v5540 = vadd.f32 %v5440, %v5492
        %v5541 = vadd.f32 %v5441, %v5493
        %v5542 = vadd.f32 %v5442, %v5494
        %v5543 = vadd.f32 %v5443, %v5495
        %v5544 = vadd.f32 %v5444, %v5496
        %v5545 = vadd.f32 %v5445, %v5497
        %v5546 = vadd.f32 %v5446, %v5498
        %v5547 = vadd.f32 %v5447, %v5499
        %v5548 = vadd.f32 %v5448, %v5500
        %v5549 = vadd.f32 %v5449, %v5501
        %v5550 = vadd.f32 %v5450, %v5502
        %v5551 = vadd.f32 %v5451, %v5503
        %v5552 = vadd.f32 %v5452, %v5504
        %v5553 = vadd.f32 %v5453, %v5505
        %v5554 = vadd.f32 %v5454, %v5506
        %v5555 = vadd.f32 %v5455, %v5507
        %v5556 = vadd.f32 %v5456, %v5508
        %v5557 = vadd.f32 %v5457, %v5509
        %v5558 = vadd.f32 %v5458, %v5510
        %v5559 = vadd.f32 %v5459, %v5511
        %v5560 = vadd.f32 %v5460, %v5512
        %v5561 = vadd.f32 %v5461, %v5513
        %v5562 = vadd.f32 %v5462, %v5514
        %v5563 = vadd.f32 %v5463, %v5515
        %v5564 = vadd.f32 %v5464, %v5516
        %v5565 = vadd.f32 %v5465, %v5517
        %v5566 = vadd.f32 %v5466, %v5518
        %v5567 = vadd.f32 %v5467, %v5519
        %v5568 = vadd.f32 %v5468, %v5520
        %v5569 = vadd.f32 %v5469, %v5521
        %v5570 = vadd.f32 %v5470, %v5522
        %v5571 = vadd.f32 %v5471, %v5523
        %v5572 = vadd.f32 %v5472, %v5524
        %v5573 = vadd.f32 %v5473, %v5525
        %v5574 = vadd.f32 %v5474, %v5526
        %v5575 = vadd.f32 %v5475, %v5527
        %v5576 = vadd.f32 %v5476, %v5528
        %v5577 = vadd.f32 %v5477, %v5529
        %v5578 = vadd.f32 %v5478, %v5530
        %v5579 = vlaneseq
        %v5580 = vshrl.u32 %v5579, 7
        %v5581 = vsub.s32 2, %v5580
        %v5582 = vrot.slane %v5213, %v5581
        %v5583 = vmul.f32 %v5158, %v5582
        %v5584 = vmul.f32 %v5159, %v5582
        %v5585 = vmul.f32 %v5160, %v5582
        %v5586 = vmul.f32 %v5161, %v5582
        %v5587 = vmul.f32 %v5162, %v5582
        %v5588 = vmul.f32 %v5163, %v5582
        %v5589 = vmul.f32 %v5164, %v5582
        %v5590 = vmul.f32 %v5165, %v5582
        %v5591 = vmul.f32 %v5166, %v5582
        %v5592 = vmul.f32 %v5167, %v5582
        %v5593 = vmul.f32 %v5168, %v5582
        %v5594 = vmul.f32 %v5169, %v5582
        %v5595 = vmul.f32 %v5170, %v5582
        %v5596 = vmul.f32 %v5171, %v5582
        %v5597 = vmul.f32 %v5172, %v5582
        %v5598 = vmul.f32 %v5173, %v5582
        %v5599 = vmul.f32 %v5174, %v5582
        %v5600 = vmul.f32 %v5175, %v5582
        %v5601 = vmul.f32 %v5176, %v5582
        %v5602 = vmul.f32 %v5177, %v5582
        %v5603 = vmul.f32 %v5178, %v5582
        %v5604 = vmul.f32 %v5179, %v5582
        %v5605 = vmul.f32 %v5180, %v5582
        %v5606 = vmul.f32 %v5181, %v5582
        %v5607 = vmul.f32 %v5182, %v5582
        %v5608 = vmul.f32 %v5183, %v5582
        %v5609 = vmul.f32 %v5184, %v5582
        %v5610 = vmul.f32 %v5185, %v5582
        %v5611 = vmul.f32 %v5186, %v5582
        %v5612 = vmul.f32 %v5187, %v5582
        %v5613 = vmul.f32 %v5188, %v5582
        %v5614 = vmul.f32 %v5189, %v5582
        %v5615 = vmul.f32 %v5190, %v5582
        %v5616 = vmul.f32 %v5191, %v5582
        %v5617 = vmul.f32 %v5192, %v5582
        %v5618 = vmul.f32 %v5193, %v5582
        %v5619 = vmul.f32 %v5194, %v5582
        %v5620 = vmul.f32 %v5195, %v5582
        %v5621 = vmul.f32 %v5196, %v5582
        %v5622 = vmul.f32 %v5197, %v5582
        %v5623 = vmul.f32 %v5198, %v5582
        %v5624 = vmul.f32 %v5199, %v5582
        %v5625 = vmul.f32 %v5200, %v5582
        %v5626 = vmul.f32 %v5201, %v5582
        %v5627 = vmul.f32 %v5202, %v5582
        %v5628 = vmul.f32 %v5203, %v5582
        %v5629 = vmul.f32 %v5204, %v5582
        %v5630 = vmul.f32 %v5205, %v5582
        %v5679 = vrot.slane %v5583, 1
        %v5680 = vrot.slane %v5584, 1
        %v5681 = vsel %vm1073, %v5679, %v5680
        %v5682 = vrot.slane %v5585, 1
        %v5683 = vsel %vm1073, %v5680, %v5682
        %v5684 = vrot.slane %v5586, 1
        %v5685 = vrot.slane %v5587, 1
        %v5686 = vsel %vm1073, %v5684, %v5685
        %v5687 = vrot.slane %v5588, 1
        %v5688 = vsel %vm1073, %v5685, %v5687
        %v5689 = vrot.slane %v5589, 1
        %v5690 = vrot.slane %v5590, 1
        %v5691 = vsel %vm1073, %v5689, %v5690
        %v5692 = vrot.slane %v5591, 1
        %v5693 = vsel %vm1073, %v5690, %v5692
        %v5694 = vrot.slane %v5592, 1
        %v5695 = vrot.slane %v5593, 1
        %v5696 = vsel %vm1073, %v5694, %v5695
        %v5697 = vrot.slane %v5594, 1
        %v5698 = vsel %vm1073, %v5695, %v5697
        %v5699 = vrot.slane %v5595, 1
        %v5700 = vrot.slane %v5596, 1
        %v5701 = vsel %vm1073, %v5699, %v5700
        %v5702 = vrot.slane %v5597, 1
        %v5703 = vsel %vm1073, %v5700, %v5702
        %v5704 = vrot.slane %v5598, 1
        %v5705 = vrot.slane %v5599, 1
        %v5706 = vsel %vm1073, %v5704, %v5705
        %v5707 = vrot.slane %v5600, 1
        %v5708 = vsel %vm1073, %v5705, %v5707
        %v5709 = vrot.slane %v5601, 1
        %v5710 = vrot.slane %v5602, 1
        %v5711 = vsel %vm1073, %v5709, %v5710
        %v5712 = vrot.slane %v5603, 1
        %v5713 = vsel %vm1073, %v5710, %v5712
        %v5714 = vrot.slane %v5604, 1
        %v5715 = vrot.slane %v5605, 1
        %v5716 = vsel %vm1073, %v5714, %v5715
        %v5717 = vrot.slane %v5606, 1
        %v5718 = vsel %vm1073, %v5715, %v5717
        %v5719 = vrot.slane %v5607, 1
        %v5720 = vrot.slane %v5608, 1
        %v5721 = vsel %vm1073, %v5719, %v5720
        %v5722 = vrot.slane %v5609, 1
        %v5723 = vsel %vm1073, %v5720, %v5722
        %v5724 = vrot.slane %v5610, 1
        %v5725 = vrot.slane %v5611, 1
        %v5726 = vsel %vm1073, %v5724, %v5725
        %v5727 = vrot.slane %v5612, 1
        %v5728 = vsel %vm1073, %v5725, %v5727
        %v5729 = vrot.slane %v5613, 1
        %v5730 = vrot.slane %v5614, 1
        %v5731 = vsel %vm1073, %v5729, %v5730
        %v5732 = vrot.slane %v5615, 1
        %v5733 = vsel %vm1073, %v5730, %v5732
        %v5734 = vrot.slane %v5616, 1
        %v5735 = vrot.slane %v5617, 1
        %v5736 = vsel %vm1073, %v5734, %v5735
        %v5737 = vrot.slane %v5618, 1
        %v5738 = vsel %vm1073, %v5735, %v5737
        %v5739 = vrot.slane %v5619, 1
        %v5740 = vrot.slane %v5620, 1
        %v5741 = vsel %vm1073, %v5739, %v5740
        %v5742 = vrot.slane %v5621, 1
        %v5743 = vsel %vm1073, %v5740, %v5742
        %v5744 = vrot.slane %v5622, 1
        %v5745 = vrot.slane %v5623, 1
        %v5746 = vsel %vm1073, %v5744, %v5745
        %v5747 = vrot.slane %v5624, 1
        %v5748 = vsel %vm1073, %v5745, %v5747
        %v5749 = vrot.slane %v5625, 1
        %v5750 = vrot.slane %v5626, 1
        %v5751 = vsel %vm1073, %v5749, %v5750
        %v5752 = vrot.slane %v5627, 1
        %v5753 = vsel %vm1073, %v5750, %v5752
        %v5754 = vrot.slane %v5628, 1
        %v5755 = vrot.slane %v5629, 1
        %v5756 = vsel %vm1073, %v5754, %v5755
        %v5757 = vrot.slane %v5630, 1
        %v5758 = vsel %vm1073, %v5755, %v5757
        %v5807 = vadd.f32 %v5531, %v5681
        %v5808 = vadd.f32 %v5532, %v5683
        %v5809 = vadd.f32 %v5533, %v5682
        %v5810 = vadd.f32 %v5534, %v5686
        %v5811 = vadd.f32 %v5535, %v5688
        %v5812 = vadd.f32 %v5536, %v5687
        %v5813 = vadd.f32 %v5537, %v5691
        %v5814 = vadd.f32 %v5538, %v5693
        %v5815 = vadd.f32 %v5539, %v5692
        %v5816 = vadd.f32 %v5540, %v5696
        %v5817 = vadd.f32 %v5541, %v5698
        %v5818 = vadd.f32 %v5542, %v5697
        %v5819 = vadd.f32 %v5543, %v5701
        %v5820 = vadd.f32 %v5544, %v5703
        %v5821 = vadd.f32 %v5545, %v5702
        %v5822 = vadd.f32 %v5546, %v5706
        %v5823 = vadd.f32 %v5547, %v5708
        %v5824 = vadd.f32 %v5548, %v5707
        %v5825 = vadd.f32 %v5549, %v5711
        %v5826 = vadd.f32 %v5550, %v5713
        %v5827 = vadd.f32 %v5551, %v5712
        %v5828 = vadd.f32 %v5552, %v5716
        %v5829 = vadd.f32 %v5553, %v5718
        %v5830 = vadd.f32 %v5554, %v5717
        %v5831 = vadd.f32 %v5555, %v5721
        %v5832 = vadd.f32 %v5556, %v5723
        %v5833 = vadd.f32 %v5557, %v5722
        %v5834 = vadd.f32 %v5558, %v5726
        %v5835 = vadd.f32 %v5559, %v5728
        %v5836 = vadd.f32 %v5560, %v5727
        %v5837 = vadd.f32 %v5561, %v5731
        %v5838 = vadd.f32 %v5562, %v5733
        %v5839 = vadd.f32 %v5563, %v5732
        %v5840 = vadd.f32 %v5564, %v5736
        %v5841 = vadd.f32 %v5565, %v5738
        %v5842 = vadd.f32 %v5566, %v5737
        %v5843 = vadd.f32 %v5567, %v5741
        %v5844 = vadd.f32 %v5568, %v5743
        %v5845 = vadd.f32 %v5569, %v5742
        %v5846 = vadd.f32 %v5570, %v5746
        %v5847 = vadd.f32 %v5571, %v5748
        %v5848 = vadd.f32 %v5572, %v5747
        %v5849 = vadd.f32 %v5573, %v5751
        %v5850 = vadd.f32 %v5574, %v5753
        %v5851 = vadd.f32 %v5575, %v5752
        %v5852 = vadd.f32 %v5576, %v5756
        %v5853 = vadd.f32 %v5577, %v5758
        %v5854 = vadd.f32 %v5578, %v5757
        %v5855 = vlaneseq
        %v5856 = vshrl.u32 %v5855, 7
        %v5857 = vsub.s32 3, %v5856
        %v5858 = vrot.slane %v5213, %v5857
        %v5859 = vmul.f32 %v5161, %v5858
        %v5860 = vmul.f32 %v5162, %v5858
        %v5861 = vmul.f32 %v5164, %v5858
        %v5862 = vmul.f32 %v5165, %v5858
        %v5863 = vmul.f32 %v5167, %v5858
        %v5864 = vmul.f32 %v5168, %v5858
        %v5865 = vmul.f32 %v5170, %v5858
        %v5866 = vmul.f32 %v5171, %v5858
        %v5867 = vmul.f32 %v5173, %v5858
        %v5868 = vmul.f32 %v5174, %v5858
        %v5869 = vmul.f32 %v5176, %v5858
        %v5870 = vmul.f32 %v5177, %v5858
        %v5871 = vmul.f32 %v5179, %v5858
        %v5872 = vmul.f32 %v5180, %v5858
        %v5873 = vmul.f32 %v5182, %v5858
        %v5874 = vmul.f32 %v5183, %v5858
        %v5875 = vmul.f32 %v5185, %v5858
        %v5876 = vmul.f32 %v5186, %v5858
        %v5877 = vmul.f32 %v5188, %v5858
        %v5878 = vmul.f32 %v5189, %v5858
        %v5879 = vmul.f32 %v5191, %v5858
        %v5880 = vmul.f32 %v5192, %v5858
        %v5881 = vmul.f32 %v5194, %v5858
        %v5882 = vmul.f32 %v5195, %v5858
        %v5883 = vmul.f32 %v5197, %v5858
        %v5884 = vmul.f32 %v5198, %v5858
        %v5885 = vmul.f32 %v5200, %v5858
        %v5886 = vmul.f32 %v5201, %v5858
        %v5887 = vmul.f32 %v5203, %v5858
        %v5888 = vmul.f32 %v5204, %v5858
        %v5889 = vmul.f32 %v5206, %v5858
        %v5890 = vmul.f32 %v5207, %v5858
        %v5923 = vrot.slane %v5859, 7
        %v5924 = vrot.slane %v5860, 7
        %v5925 = vsel %vm728, %v5923, %v5924
        %v5926 = vrot.slane %v5861, 7
        %v5927 = vrot.slane %v5862, 7
        %v5928 = vsel %vm728, %v5926, %v5927
        %v5929 = vrot.slane %v5863, 7
        %v5930 = vrot.slane %v5864, 7
        %v5931 = vsel %vm728, %v5929, %v5930
        %v5932 = vrot.slane %v5865, 7
        %v5933 = vrot.slane %v5866, 7
        %v5934 = vsel %vm728, %v5932, %v5933
        %v5935 = vrot.slane %v5867, 7
        %v5936 = vrot.slane %v5868, 7
        %v5937 = vsel %vm728, %v5935, %v5936
        %v5938 = vrot.slane %v5869, 7
        %v5939 = vrot.slane %v5870, 7
        %v5940 = vsel %vm728, %v5938, %v5939
        %v5941 = vrot.slane %v5871, 7
        %v5942 = vrot.slane %v5872, 7
        %v5943 = vsel %vm728, %v5941, %v5942
        %v5944 = vrot.slane %v5873, 7
        %v5945 = vrot.slane %v5874, 7
        %v5946 = vsel %vm728, %v5944, %v5945
        %v5947 = vrot.slane %v5875, 7
        %v5948 = vrot.slane %v5876, 7
        %v5949 = vsel %vm728, %v5947, %v5948
        %v5950 = vrot.slane %v5877, 7
        %v5951 = vrot.slane %v5878, 7
        %v5952 = vsel %vm728, %v5950, %v5951
        %v5953 = vrot.slane %v5879, 7
        %v5954 = vrot.slane %v5880, 7
        %v5955 = vsel %vm728, %v5953, %v5954
        %v5956 = vrot.slane %v5881, 7
        %v5957 = vrot.slane %v5882, 7
        %v5958 = vsel %vm728, %v5956, %v5957
        %v5959 = vrot.slane %v5883, 7
        %v5960 = vrot.slane %v5884, 7
        %v5961 = vsel %vm728, %v5959, %v5960
        %v5962 = vrot.slane %v5885, 7
        %v5963 = vrot.slane %v5886, 7
        %v5964 = vsel %vm728, %v5962, %v5963
        %v5965 = vrot.slane %v5887, 7
        %v5966 = vrot.slane %v5888, 7
        %v5967 = vsel %vm728, %v5965, %v5966
        %v5968 = vrot.slane %v5889, 7
        %v5969 = vrot.slane %v5890, 7
        %v5970 = vsel %vm728, %v5968, %v5969
        %v6019 = vadd.f32 %v5807, %v5923
        %v6020 = vadd.f32 %v5808, %v5925
        %v6021 = vadd.f32 %v5809, %v5924
        %v6022 = vadd.f32 %v5810, %v5926
        %v6023 = vadd.f32 %v5811, %v5928
        %v6024 = vadd.f32 %v5812, %v5927
        %v6025 = vadd.f32 %v5813, %v5929
        %v6026 = vadd.f32 %v5814, %v5931
        %v6027 = vadd.f32 %v5815, %v5930
        %v6028 = vadd.f32 %v5816, %v5932
        %v6029 = vadd.f32 %v5817, %v5934
        %v6030 = vadd.f32 %v5818, %v5933
        %v6031 = vadd.f32 %v5819, %v5935
        %v6032 = vadd.f32 %v5820, %v5937
        %v6033 = vadd.f32 %v5821, %v5936
        %v6034 = vadd.f32 %v5822, %v5938
        %v6035 = vadd.f32 %v5823, %v5940
        %v6036 = vadd.f32 %v5824, %v5939
        %v6037 = vadd.f32 %v5825, %v5941
        %v6038 = vadd.f32 %v5826, %v5943
        %v6039 = vadd.f32 %v5827, %v5942
        %v6040 = vadd.f32 %v5828, %v5944
        %v6041 = vadd.f32 %v5829, %v5946
        %v6042 = vadd.f32 %v5830, %v5945
        %v6043 = vadd.f32 %v5831, %v5947
        %v6044 = vadd.f32 %v5832, %v5949
        %v6045 = vadd.f32 %v5833, %v5948
        %v6046 = vadd.f32 %v5834, %v5950
        %v6047 = vadd.f32 %v5835, %v5952
        %v6048 = vadd.f32 %v5836, %v5951
        %v6049 = vadd.f32 %v5837, %v5953
        %v6050 = vadd.f32 %v5838, %v5955
        %v6051 = vadd.f32 %v5839, %v5954
        %v6052 = vadd.f32 %v5840, %v5956
        %v6053 = vadd.f32 %v5841, %v5958
        %v6054 = vadd.f32 %v5842, %v5957
        %v6055 = vadd.f32 %v5843, %v5959
        %v6056 = vadd.f32 %v5844, %v5961
        %v6057 = vadd.f32 %v5845, %v5960
        %v6058 = vadd.f32 %v5846, %v5962
        %v6059 = vadd.f32 %v5847, %v5964
        %v6060 = vadd.f32 %v5848, %v5963
        %v6061 = vadd.f32 %v5849, %v5965
        %v6062 = vadd.f32 %v5850, %v5967
        %v6063 = vadd.f32 %v5851, %v5966
        %v6064 = vadd.f32 %v5852, %v5968
        %v6065 = vadd.f32 %v5853, %v5970
        %v6066 = vadd.f32 %v5854, %v5969
        %v6067 = vlaneseq
        %v6068 = vshrl.u32 %v6067, 7
        %v6069 = vsub.s32 5, %v6068
        %v6070 = vrot.slane %v5213, %v6069
        %v6071 = vmul.f32 %v5161, %v6070
        %v6072 = vmul.f32 %v5162, %v6070
        %v6073 = vmul.f32 %v5163, %v6070
        %v6074 = vmul.f32 %v5164, %v6070
        %v6075 = vmul.f32 %v5165, %v6070
        %v6076 = vmul.f32 %v5166, %v6070
        %v6077 = vmul.f32 %v5167, %v6070
        %v6078 = vmul.f32 %v5168, %v6070
        %v6079 = vmul.f32 %v5169, %v6070
        %v6080 = vmul.f32 %v5170, %v6070
        %v6081 = vmul.f32 %v5171, %v6070
        %v6082 = vmul.f32 %v5172, %v6070
        %v6083 = vmul.f32 %v5173, %v6070
        %v6084 = vmul.f32 %v5174, %v6070
        %v6085 = vmul.f32 %v5175, %v6070
        %v6086 = vmul.f32 %v5176, %v6070
        %v6087 = vmul.f32 %v5177, %v6070
        %v6088 = vmul.f32 %v5178, %v6070
        %v6089 = vmul.f32 %v5179, %v6070
        %v6090 = vmul.f32 %v5180, %v6070
        %v6091 = vmul.f32 %v5181, %v6070
        %v6092 = vmul.f32 %v5182, %v6070
        %v6093 = vmul.f32 %v5183, %v6070
        %v6094 = vmul.f32 %v5184, %v6070
        %v6095 = vmul.f32 %v5185, %v6070
        %v6096 = vmul.f32 %v5186, %v6070
        %v6097 = vmul.f32 %v5187, %v6070
        %v6098 = vmul.f32 %v5188, %v6070
        %v6099 = vmul.f32 %v5189, %v6070
        %v6100 = vmul.f32 %v5190, %v6070
        %v6101 = vmul.f32 %v5191, %v6070
        %v6102 = vmul.f32 %v5192, %v6070
        %v6103 = vmul.f32 %v5193, %v6070
        %v6104 = vmul.f32 %v5194, %v6070
        %v6105 = vmul.f32 %v5195, %v6070
        %v6106 = vmul.f32 %v5196, %v6070
        %v6107 = vmul.f32 %v5197, %v6070
        %v6108 = vmul.f32 %v5198, %v6070
        %v6109 = vmul.f32 %v5199, %v6070
        %v6110 = vmul.f32 %v5200, %v6070
        %v6111 = vmul.f32 %v5201, %v6070
        %v6112 = vmul.f32 %v5202, %v6070
        %v6113 = vmul.f32 %v5203, %v6070
        %v6114 = vmul.f32 %v5204, %v6070
        %v6115 = vmul.f32 %v5205, %v6070
        %v6116 = vmul.f32 %v5206, %v6070
        %v6117 = vmul.f32 %v5207, %v6070
        %v6118 = vmul.f32 %v5208, %v6070
        %v6167 = vrot.slane %v6071, 1
        %v6168 = vrot.slane %v6072, 1
        %v6169 = vsel %vm1073, %v6167, %v6168
        %v6170 = vrot.slane %v6073, 1
        %v6171 = vsel %vm1073, %v6168, %v6170
        %v6172 = vrot.slane %v6074, 1
        %v6173 = vrot.slane %v6075, 1
        %v6174 = vsel %vm1073, %v6172, %v6173
        %v6175 = vrot.slane %v6076, 1
        %v6176 = vsel %vm1073, %v6173, %v6175
        %v6177 = vrot.slane %v6077, 1
        %v6178 = vrot.slane %v6078, 1
        %v6179 = vsel %vm1073, %v6177, %v6178
        %v6180 = vrot.slane %v6079, 1
        %v6181 = vsel %vm1073, %v6178, %v6180
        %v6182 = vrot.slane %v6080, 1
        %v6183 = vrot.slane %v6081, 1
        %v6184 = vsel %vm1073, %v6182, %v6183
        %v6185 = vrot.slane %v6082, 1
        %v6186 = vsel %vm1073, %v6183, %v6185
        %v6187 = vrot.slane %v6083, 1
        %v6188 = vrot.slane %v6084, 1
        %v6189 = vsel %vm1073, %v6187, %v6188
        %v6190 = vrot.slane %v6085, 1
        %v6191 = vsel %vm1073, %v6188, %v6190
        %v6192 = vrot.slane %v6086, 1
        %v6193 = vrot.slane %v6087, 1
        %v6194 = vsel %vm1073, %v6192, %v6193
        %v6195 = vrot.slane %v6088, 1
        %v6196 = vsel %vm1073, %v6193, %v6195
        %v6197 = vrot.slane %v6089, 1
        %v6198 = vrot.slane %v6090, 1
        %v6199 = vsel %vm1073, %v6197, %v6198
        %v6200 = vrot.slane %v6091, 1
        %v6201 = vsel %vm1073, %v6198, %v6200
        %v6202 = vrot.slane %v6092, 1
        %v6203 = vrot.slane %v6093, 1
        %v6204 = vsel %vm1073, %v6202, %v6203
        %v6205 = vrot.slane %v6094, 1
        %v6206 = vsel %vm1073, %v6203, %v6205
        %v6207 = vrot.slane %v6095, 1
        %v6208 = vrot.slane %v6096, 1
        %v6209 = vsel %vm1073, %v6207, %v6208
        %v6210 = vrot.slane %v6097, 1
        %v6211 = vsel %vm1073, %v6208, %v6210
        %v6212 = vrot.slane %v6098, 1
        %v6213 = vrot.slane %v6099, 1
        %v6214 = vsel %vm1073, %v6212, %v6213
        %v6215 = vrot.slane %v6100, 1
        %v6216 = vsel %vm1073, %v6213, %v6215
        %v6217 = vrot.slane %v6101, 1
        %v6218 = vrot.slane %v6102, 1
        %v6219 = vsel %vm1073, %v6217, %v6218
        %v6220 = vrot.slane %v6103, 1
        %v6221 = vsel %vm1073, %v6218, %v6220
        %v6222 = vrot.slane %v6104, 1
        %v6223 = vrot.slane %v6105, 1
        %v6224 = vsel %vm1073, %v6222, %v6223
        %v6225 = vrot.slane %v6106, 1
        %v6226 = vsel %vm1073, %v6223, %v6225
        %v6227 = vrot.slane %v6107, 1
        %v6228 = vrot.slane %v6108, 1
        %v6229 = vsel %vm1073, %v6227, %v6228
        %v6230 = vrot.slane %v6109, 1
        %v6231 = vsel %vm1073, %v6228, %v6230
        %v6232 = vrot.slane %v6110, 1
        %v6233 = vrot.slane %v6111, 1
        %v6234 = vsel %vm1073, %v6232, %v6233
        %v6235 = vrot.slane %v6112, 1
        %v6236 = vsel %vm1073, %v6233, %v6235
        %v6237 = vrot.slane %v6113, 1
        %v6238 = vrot.slane %v6114, 1
        %v6239 = vsel %vm1073, %v6237, %v6238
        %v6240 = vrot.slane %v6115, 1
        %v6241 = vsel %vm1073, %v6238, %v6240
        %v6242 = vrot.slane %v6116, 1
        %v6243 = vrot.slane %v6117, 1
        %v6244 = vsel %vm1073, %v6242, %v6243
        %v6245 = vrot.slane %v6118, 1
        %v6246 = vsel %vm1073, %v6243, %v6245
        %v6295 = vadd.f32 %v6019, %v6169
        %v6296 = vadd.f32 %v6020, %v6171
        %v6297 = vadd.f32 %v6021, %v6170
        %v6298 = vadd.f32 %v6022, %v6174
        %v6299 = vadd.f32 %v6023, %v6176
        %v6300 = vadd.f32 %v6024, %v6175
        %v6301 = vadd.f32 %v6025, %v6179
        %v6302 = vadd.f32 %v6026, %v6181
        %v6303 = vadd.f32 %v6027, %v6180
        %v6304 = vadd.f32 %v6028, %v6184
        %v6305 = vadd.f32 %v6029, %v6186
        %v6306 = vadd.f32 %v6030, %v6185
        %v6307 = vadd.f32 %v6031, %v6189
        %v6308 = vadd.f32 %v6032, %v6191
        %v6309 = vadd.f32 %v6033, %v6190
        %v6310 = vadd.f32 %v6034, %v6194
        %v6311 = vadd.f32 %v6035, %v6196
        %v6312 = vadd.f32 %v6036, %v6195
        %v6313 = vadd.f32 %v6037, %v6199
        %v6314 = vadd.f32 %v6038, %v6201
        %v6315 = vadd.f32 %v6039, %v6200
        %v6316 = vadd.f32 %v6040, %v6204
        %v6317 = vadd.f32 %v6041, %v6206
        %v6318 = vadd.f32 %v6042, %v6205
        %v6319 = vadd.f32 %v6043, %v6209
        %v6320 = vadd.f32 %v6044, %v6211
        %v6321 = vadd.f32 %v6045, %v6210
        %v6322 = vadd.f32 %v6046, %v6214
        %v6323 = vadd.f32 %v6047, %v6216
        %v6324 = vadd.f32 %v6048, %v6215
        %v6325 = vadd.f32 %v6049, %v6219
        %v6326 = vadd.f32 %v6050, %v6221
        %v6327 = vadd.f32 %v6051, %v6220
        %v6328 = vadd.f32 %v6052, %v6224
        %v6329 = vadd.f32 %v6053, %v6226
        %v6330 = vadd.f32 %v6054, %v6225
        %v6331 = vadd.f32 %v6055, %v6229
        %v6332 = vadd.f32 %v6056, %v6231
        %v6333 = vadd.f32 %v6057, %v6230
        %v6334 = vadd.f32 %v6058, %v6234
        %v6335 = vadd.f32 %v6059, %v6236
        %v6336 = vadd.f32 %v6060, %v6235
        %v6337 = vadd.f32 %v6061, %v6239
        %v6338 = vadd.f32 %v6062, %v6241
        %v6339 = vadd.f32 %v6063, %v6240
        %v6340 = vadd.f32 %v6064, %v6244
        %v6341 = vadd.f32 %v6065, %v6246
        %v6342 = vadd.f32 %v6066, %v6245
        %v6343 = vlaneseq
        %v6344 = vshrl.u32 %v6343, 7
        %v6345 = vsub.s32 6, %v6344
        %v6346 = vrot.slane %v5213, %v6345
        %v6347 = vmul.f32 %v5164, %v6346
        %v6348 = vmul.f32 %v5165, %v6346
        %v6349 = vmul.f32 %v5167, %v6346
        %v6350 = vmul.f32 %v5168, %v6346
        %v6351 = vmul.f32 %v5170, %v6346
        %v6352 = vmul.f32 %v5171, %v6346
        %v6353 = vmul.f32 %v5173, %v6346
        %v6354 = vmul.f32 %v5174, %v6346
        %v6355 = vmul.f32 %v5176, %v6346
        %v6356 = vmul.f32 %v5177, %v6346
        %v6357 = vmul.f32 %v5179, %v6346
        %v6358 = vmul.f32 %v5180, %v6346
        %v6359 = vmul.f32 %v5182, %v6346
        %v6360 = vmul.f32 %v5183, %v6346
        %v6361 = vmul.f32 %v5185, %v6346
        %v6362 = vmul.f32 %v5186, %v6346
        %v6363 = vmul.f32 %v5188, %v6346
        %v6364 = vmul.f32 %v5189, %v6346
        %v6365 = vmul.f32 %v5191, %v6346
        %v6366 = vmul.f32 %v5192, %v6346
        %v6367 = vmul.f32 %v5194, %v6346
        %v6368 = vmul.f32 %v5195, %v6346
        %v6369 = vmul.f32 %v5197, %v6346
        %v6370 = vmul.f32 %v5198, %v6346
        %v6371 = vmul.f32 %v5200, %v6346
        %v6372 = vmul.f32 %v5201, %v6346
        %v6373 = vmul.f32 %v5203, %v6346
        %v6374 = vmul.f32 %v5204, %v6346
        %v6375 = vmul.f32 %v5206, %v6346
        %v6376 = vmul.f32 %v5207, %v6346
        %v6377 = vmul.f32 %v5209, %v6346
        %v6378 = vmul.f32 %v5210, %v6346
        %v6411 = vrot.slane %v6347, 7
        %v6412 = vrot.slane %v6348, 7
        %v6413 = vsel %vm728, %v6411, %v6412
        %v6414 = vrot.slane %v6349, 7
        %v6415 = vrot.slane %v6350, 7
        %v6416 = vsel %vm728, %v6414, %v6415
        %v6417 = vrot.slane %v6351, 7
        %v6418 = vrot.slane %v6352, 7
        %v6419 = vsel %vm728, %v6417, %v6418
        %v6420 = vrot.slane %v6353, 7
        %v6421 = vrot.slane %v6354, 7
        %v6422 = vsel %vm728, %v6420, %v6421
        %v6423 = vrot.slane %v6355, 7
        %v6424 = vrot.slane %v6356, 7
        %v6425 = vsel %vm728, %v6423, %v6424
        %v6426 = vrot.slane %v6357, 7
        %v6427 = vrot.slane %v6358, 7
        %v6428 = vsel %vm728, %v6426, %v6427
        %v6429 = vrot.slane %v6359, 7
        %v6430 = vrot.slane %v6360, 7
        %v6431 = vsel %vm728, %v6429, %v6430
        %v6432 = vrot.slane %v6361, 7
        %v6433 = vrot.slane %v6362, 7
        %v6434 = vsel %vm728, %v6432, %v6433
        %v6435 = vrot.slane %v6363, 7
        %v6436 = vrot.slane %v6364, 7
        %v6437 = vsel %vm728, %v6435, %v6436
        %v6438 = vrot.slane %v6365, 7
        %v6439 = vrot.slane %v6366, 7
        %v6440 = vsel %vm728, %v6438, %v6439
        %v6441 = vrot.slane %v6367, 7
        %v6442 = vrot.slane %v6368, 7
        %v6443 = vsel %vm728, %v6441, %v6442
        %v6444 = vrot.slane %v6369, 7
        %v6445 = vrot.slane %v6370, 7
        %v6446 = vsel %vm728, %v6444, %v6445
        %v6447 = vrot.slane %v6371, 7
        %v6448 = vrot.slane %v6372, 7
        %v6449 = vsel %vm728, %v6447, %v6448
        %v6450 = vrot.slane %v6373, 7
        %v6451 = vrot.slane %v6374, 7
        %v6452 = vsel %vm728, %v6450, %v6451
        %v6453 = vrot.slane %v6375, 7
        %v6454 = vrot.slane %v6376, 7
        %v6455 = vsel %vm728, %v6453, %v6454
        %v6456 = vrot.slane %v6377, 7
        %v6457 = vrot.slane %v6378, 7
        %v6458 = vsel %vm728, %v6456, %v6457
        %v6507 = vadd.f32 %v6295, %v6411
        %v6508 = vadd.f32 %v6296, %v6413
        %v6509 = vadd.f32 %v6297, %v6412
        %v6510 = vadd.f32 %v6298, %v6414
        %v6511 = vadd.f32 %v6299, %v6416
        %v6512 = vadd.f32 %v6300, %v6415
        %v6513 = vadd.f32 %v6301, %v6417
        %v6514 = vadd.f32 %v6302, %v6419
        %v6515 = vadd.f32 %v6303, %v6418
        %v6516 = vadd.f32 %v6304, %v6420
        %v6517 = vadd.f32 %v6305, %v6422
        %v6518 = vadd.f32 %v6306, %v6421
        %v6519 = vadd.f32 %v6307, %v6423
        %v6520 = vadd.f32 %v6308, %v6425
        %v6521 = vadd.f32 %v6309, %v6424
        %v6522 = vadd.f32 %v6310, %v6426
        %v6523 = vadd.f32 %v6311, %v6428
        %v6524 = vadd.f32 %v6312, %v6427
        %v6525 = vadd.f32 %v6313, %v6429
        %v6526 = vadd.f32 %v6314, %v6431
        %v6527 = vadd.f32 %v6315, %v6430
        %v6528 = vadd.f32 %v6316, %v6432
        %v6529 = vadd.f32 %v6317, %v6434
        %v6530 = vadd.f32 %v6318, %v6433
        %v6531 = vadd.f32 %v6319, %v6435
        %v6532 = vadd.f32 %v6320, %v6437
        %v6533 = vadd.f32 %v6321, %v6436
        %v6534 = vadd.f32 %v6322, %v6438
        %v6535 = vadd.f32 %v6323, %v6440
        %v6536 = vadd.f32 %v6324, %v6439
        %v6537 = vadd.f32 %v6325, %v6441
        %v6538 = vadd.f32 %v6326, %v6443
        %v6539 = vadd.f32 %v6327, %v6442
        %v6540 = vadd.f32 %v6328, %v6444
        %v6541 = vadd.f32 %v6329, %v6446
        %v6542 = vadd.f32 %v6330, %v6445
        %v6543 = vadd.f32 %v6331, %v6447
        %v6544 = vadd.f32 %v6332, %v6449
        %v6545 = vadd.f32 %v6333, %v6448
        %v6546 = vadd.f32 %v6334, %v6450
        %v6547 = vadd.f32 %v6335, %v6452
        %v6548 = vadd.f32 %v6336, %v6451
        %v6549 = vadd.f32 %v6337, %v6453
        %v6550 = vadd.f32 %v6338, %v6455
        %v6551 = vadd.f32 %v6339, %v6454
        %v6552 = vadd.f32 %v6340, %v6456
        %v6553 = vadd.f32 %v6341, %v6458
        %v6554 = vadd.f32 %v6342, %v6457
        %v6555 = vlaneseq
        %v6556 = vshrl.u32 %v6555, 7
        %v6557 = vsub.s32 7, %v6556
        %v6558 = vrot.slane %v5213, %v6557
        %v6559 = vmul.f32 %v5164, %v6558
        %v6560 = vmul.f32 %v5165, %v6558
        %v6561 = vmul.f32 %v5166, %v6558
        %v6562 = vmul.f32 %v5167, %v6558
        %v6563 = vmul.f32 %v5168, %v6558
        %v6564 = vmul.f32 %v5169, %v6558
        %v6565 = vmul.f32 %v5170, %v6558
        %v6566 = vmul.f32 %v5171, %v6558
        %v6567 = vmul.f32 %v5172, %v6558
        %v6568 = vmul.f32 %v5173, %v6558
        %v6569 = vmul.f32 %v5174, %v6558
        %v6570 = vmul.f32 %v5175, %v6558
        %v6571 = vmul.f32 %v5176, %v6558
        %v6572 = vmul.f32 %v5177, %v6558
        %v6573 = vmul.f32 %v5178, %v6558
        %v6574 = vmul.f32 %v5179, %v6558
        %v6575 = vmul.f32 %v5180, %v6558
        %v6576 = vmul.f32 %v5181, %v6558
        %v6577 = vmul.f32 %v5182, %v6558
        %v6578 = vmul.f32 %v5183, %v6558
        %v6579 = vmul.f32 %v5184, %v6558
        %v6580 = vmul.f32 %v5185, %v6558
        %v6581 = vmul.f32 %v5186, %v6558
        %v6582 = vmul.f32 %v5187, %v6558
        %v6583 = vmul.f32 %v5188, %v6558
        %v6584 = vmul.f32 %v5189, %v6558
        %v6585 = vmul.f32 %v5190, %v6558
        %v6586 = vmul.f32 %v5191, %v6558
        %v6587 = vmul.f32 %v5192, %v6558
        %v6588 = vmul.f32 %v5193, %v6558
        %v6589 = vmul.f32 %v5194, %v6558
        %v6590 = vmul.f32 %v5195, %v6558
        %v6591 = vmul.f32 %v5196, %v6558
        %v6592 = vmul.f32 %v5197, %v6558
        %v6593 = vmul.f32 %v5198, %v6558
        %v6594 = vmul.f32 %v5199, %v6558
        %v6595 = vmul.f32 %v5200, %v6558
        %v6596 = vmul.f32 %v5201, %v6558
        %v6597 = vmul.f32 %v5202, %v6558
        %v6598 = vmul.f32 %v5203, %v6558
        %v6599 = vmul.f32 %v5204, %v6558
        %v6600 = vmul.f32 %v5205, %v6558
        %v6601 = vmul.f32 %v5206, %v6558
        %v6602 = vmul.f32 %v5207, %v6558
        %v6603 = vmul.f32 %v5208, %v6558
        %v6604 = vmul.f32 %v5209, %v6558
        %v6605 = vmul.f32 %v5210, %v6558
        %v6606 = vmul.f32 %v5211, %v6558
        %v6607 = vadd.f32 %v6507, %v6559
        %v6608 = vadd.f32 %v6508, %v6560
        %v6609 = vadd.f32 %v6509, %v6561
        %v6610 = vadd.f32 %v6510, %v6562
        %v6611 = vadd.f32 %v6511, %v6563
        %v6612 = vadd.f32 %v6512, %v6564
        %v6613 = vadd.f32 %v6513, %v6565
        %v6614 = vadd.f32 %v6514, %v6566
        %v6615 = vadd.f32 %v6515, %v6567
        %v6616 = vadd.f32 %v6516, %v6568
        %v6617 = vadd.f32 %v6517, %v6569
        %v6618 = vadd.f32 %v6518, %v6570
        %v6619 = vadd.f32 %v6519, %v6571
        %v6620 = vadd.f32 %v6520, %v6572
        %v6621 = vadd.f32 %v6521, %v6573
        %v6622 = vadd.f32 %v6522, %v6574
        %v6623 = vadd.f32 %v6523, %v6575
        %v6624 = vadd.f32 %v6524, %v6576
        %v6625 = vadd.f32 %v6525, %v6577
        %v6626 = vadd.f32 %v6526, %v6578
        %v6627 = vadd.f32 %v6527, %v6579
        %v6628 = vadd.f32 %v6528, %v6580
        %v6629 = vadd.f32 %v6529, %v6581
        %v6630 = vadd.f32 %v6530, %v6582
        %v6631 = vadd.f32 %v6531, %v6583
        %v6632 = vadd.f32 %v6532, %v6584
        %v6633 = vadd.f32 %v6533, %v6585
        %v6634 = vadd.f32 %v6534, %v6586
        %v6635 = vadd.f32 %v6535, %v6587
        %v6636 = vadd.f32 %v6536, %v6588
        %v6637 = vadd.f32 %v6537, %v6589
        %v6638 = vadd.f32 %v6538, %v6590
        %v6639 = vadd.f32 %v6539, %v6591
        %v6640 = vadd.f32 %v6540, %v6592
        %v6641 = vadd.f32 %v6541, %v6593
        %v6642 = vadd.f32 %v6542, %v6594
        %v6643 = vadd.f32 %v6543, %v6595
        %v6644 = vadd.f32 %v6544, %v6596
        %v6645 = vadd.f32 %v6545, %v6597
        %v6646 = vadd.f32 %v6546, %v6598
        %v6647 = vadd.f32 %v6547, %v6599
        %v6648 = vadd.f32 %v6548, %v6600
        %v6649 = vadd.f32 %v6549, %v6601
        %v6650 = vadd.f32 %v6550, %v6602
        %v6651 = vadd.f32 %v6551, %v6603
        %v6652 = vadd.f32 %v6552, %v6604
        %v6653 = vadd.f32 %v6553, %v6605
        %v6654 = vadd.f32 %v6554, %v6606
        %v6655 = vlaneseq
        %v6656 = vshrl.u32 %v6655, 7
        %v6657 = vsub.s32 0, %v6656
        %v6658 = vrot.slane %v5214, %v6657
        %v6659 = vmul.f32 %v5164, %v6658
        %v6660 = vmul.f32 %v5165, %v6658
        %v6661 = vmul.f32 %v5166, %v6658
        %v6662 = vmul.f32 %v5167, %v6658
        %v6663 = vmul.f32 %v5168, %v6658
        %v6664 = vmul.f32 %v5169, %v6658
        %v6665 = vmul.f32 %v5170, %v6658
        %v6666 = vmul.f32 %v5171, %v6658
        %v6667 = vmul.f32 %v5172, %v6658
        %v6668 = vmul.f32 %v5173, %v6658
        %v6669 = vmul.f32 %v5174, %v6658
        %v6670 = vmul.f32 %v5175, %v6658
        %v6671 = vmul.f32 %v5176, %v6658
        %v6672 = vmul.f32 %v5177, %v6658
        %v6673 = vmul.f32 %v5178, %v6658
        %v6674 = vmul.f32 %v5179, %v6658
        %v6675 = vmul.f32 %v5180, %v6658
        %v6676 = vmul.f32 %v5181, %v6658
        %v6677 = vmul.f32 %v5182, %v6658
        %v6678 = vmul.f32 %v5183, %v6658
        %v6679 = vmul.f32 %v5184, %v6658
        %v6680 = vmul.f32 %v5185, %v6658
        %v6681 = vmul.f32 %v5186, %v6658
        %v6682 = vmul.f32 %v5187, %v6658
        %v6683 = vmul.f32 %v5188, %v6658
        %v6684 = vmul.f32 %v5189, %v6658
        %v6685 = vmul.f32 %v5190, %v6658
        %v6686 = vmul.f32 %v5191, %v6658
        %v6687 = vmul.f32 %v5192, %v6658
        %v6688 = vmul.f32 %v5193, %v6658
        %v6689 = vmul.f32 %v5194, %v6658
        %v6690 = vmul.f32 %v5195, %v6658
        %v6691 = vmul.f32 %v5196, %v6658
        %v6692 = vmul.f32 %v5197, %v6658
        %v6693 = vmul.f32 %v5198, %v6658
        %v6694 = vmul.f32 %v5199, %v6658
        %v6695 = vmul.f32 %v5200, %v6658
        %v6696 = vmul.f32 %v5201, %v6658
        %v6697 = vmul.f32 %v5202, %v6658
        %v6698 = vmul.f32 %v5203, %v6658
        %v6699 = vmul.f32 %v5204, %v6658
        %v6700 = vmul.f32 %v5205, %v6658
        %v6701 = vmul.f32 %v5206, %v6658
        %v6702 = vmul.f32 %v5207, %v6658
        %v6703 = vmul.f32 %v5208, %v6658
        %v6704 = vmul.f32 %v5209, %v6658
        %v6705 = vmul.f32 %v5210, %v6658
        %v6706 = vmul.f32 %v5211, %v6658
        %v6755 = vrot.slane %v6659, 1
        %v6756 = vrot.slane %v6660, 1
        %v6757 = vsel %vm1073, %v6755, %v6756
        %v6758 = vrot.slane %v6661, 1
        %v6759 = vsel %vm1073, %v6756, %v6758
        %v6760 = vrot.slane %v6662, 1
        %v6761 = vrot.slane %v6663, 1
        %v6762 = vsel %vm1073, %v6760, %v6761
        %v6763 = vrot.slane %v6664, 1
        %v6764 = vsel %vm1073, %v6761, %v6763
        %v6765 = vrot.slane %v6665, 1
        %v6766 = vrot.slane %v6666, 1
        %v6767 = vsel %vm1073, %v6765, %v6766
        %v6768 = vrot.slane %v6667, 1
        %v6769 = vsel %vm1073, %v6766, %v6768
        %v6770 = vrot.slane %v6668, 1
        %v6771 = vrot.slane %v6669, 1
        %v6772 = vsel %vm1073, %v6770, %v6771
        %v6773 = vrot.slane %v6670, 1
        %v6774 = vsel %vm1073, %v6771, %v6773
        %v6775 = vrot.slane %v6671, 1
        %v6776 = vrot.slane %v6672, 1
        %v6777 = vsel %vm1073, %v6775, %v6776
        %v6778 = vrot.slane %v6673, 1
        %v6779 = vsel %vm1073, %v6776, %v6778
        %v6780 = vrot.slane %v6674, 1
        %v6781 = vrot.slane %v6675, 1
        %v6782 = vsel %vm1073, %v6780, %v6781
        %v6783 = vrot.slane %v6676, 1
        %v6784 = vsel %vm1073, %v6781, %v6783
        %v6785 = vrot.slane %v6677, 1
        %v6786 = vrot.slane %v6678, 1
        %v6787 = vsel %vm1073, %v6785, %v6786
        %v6788 = vrot.slane %v6679, 1
        %v6789 = vsel %vm1073, %v6786, %v6788
        %v6790 = vrot.slane %v6680, 1
        %v6791 = vrot.slane %v6681, 1
        %v6792 = vsel %vm1073, %v6790, %v6791
        %v6793 = vrot.slane %v6682, 1
        %v6794 = vsel %vm1073, %v6791, %v6793
        %v6795 = vrot.slane %v6683, 1
        %v6796 = vrot.slane %v6684, 1
        %v6797 = vsel %vm1073, %v6795, %v6796
        %v6798 = vrot.slane %v6685, 1
        %v6799 = vsel %vm1073, %v6796, %v6798
        %v6800 = vrot.slane %v6686, 1
        %v6801 = vrot.slane %v6687, 1
        %v6802 = vsel %vm1073, %v6800, %v6801
        %v6803 = vrot.slane %v6688, 1
        %v6804 = vsel %vm1073, %v6801, %v6803
        %v6805 = vrot.slane %v6689, 1
        %v6806 = vrot.slane %v6690, 1
        %v6807 = vsel %vm1073, %v6805, %v6806
        %v6808 = vrot.slane %v6691, 1
        %v6809 = vsel %vm1073, %v6806, %v6808
        %v6810 = vrot.slane %v6692, 1
        %v6811 = vrot.slane %v6693, 1
        %v6812 = vsel %vm1073, %v6810, %v6811
        %v6813 = vrot.slane %v6694, 1
        %v6814 = vsel %vm1073, %v6811, %v6813
        %v6815 = vrot.slane %v6695, 1
        %v6816 = vrot.slane %v6696, 1
        %v6817 = vsel %vm1073, %v6815, %v6816
        %v6818 = vrot.slane %v6697, 1
        %v6819 = vsel %vm1073, %v6816, %v6818
        %v6820 = vrot.slane %v6698, 1
        %v6821 = vrot.slane %v6699, 1
        %v6822 = vsel %vm1073, %v6820, %v6821
        %v6823 = vrot.slane %v6700, 1
        %v6824 = vsel %vm1073, %v6821, %v6823
        %v6825 = vrot.slane %v6701, 1
        %v6826 = vrot.slane %v6702, 1
        %v6827 = vsel %vm1073, %v6825, %v6826
        %v6828 = vrot.slane %v6703, 1
        %v6829 = vsel %vm1073, %v6826, %v6828
        %v6830 = vrot.slane %v6704, 1
        %v6831 = vrot.slane %v6705, 1
        %v6832 = vsel %vm1073, %v6830, %v6831
        %v6833 = vrot.slane %v6706, 1
        %v6834 = vsel %vm1073, %v6831, %v6833
        %v6883 = vadd.f32 %v6607, %v6757
        %v6884 = vadd.f32 %v6608, %v6759
        %v6885 = vadd.f32 %v6609, %v6758
        %v6886 = vadd.f32 %v6610, %v6762
        %v6887 = vadd.f32 %v6611, %v6764
        %v6888 = vadd.f32 %v6612, %v6763
        %v6889 = vadd.f32 %v6613, %v6767
        %v6890 = vadd.f32 %v6614, %v6769
        %v6891 = vadd.f32 %v6615, %v6768
        %v6892 = vadd.f32 %v6616, %v6772
        %v6893 = vadd.f32 %v6617, %v6774
        %v6894 = vadd.f32 %v6618, %v6773
        %v6895 = vadd.f32 %v6619, %v6777
        %v6896 = vadd.f32 %v6620, %v6779
        %v6897 = vadd.f32 %v6621, %v6778
        %v6898 = vadd.f32 %v6622, %v6782
        %v6899 = vadd.f32 %v6623, %v6784
        %v6900 = vadd.f32 %v6624, %v6783
        %v6901 = vadd.f32 %v6625, %v6787
        %v6902 = vadd.f32 %v6626, %v6789
        %v6903 = vadd.f32 %v6627, %v6788
        %v6904 = vadd.f32 %v6628, %v6792
        %v6905 = vadd.f32 %v6629, %v6794
        %v6906 = vadd.f32 %v6630, %v6793
        %v6907 = vadd.f32 %v6631, %v6797
        %v6908 = vadd.f32 %v6632, %v6799
        %v6909 = vadd.f32 %v6633, %v6798
        %v6910 = vadd.f32 %v6634, %v6802
        %v6911 = vadd.f32 %v6635, %v6804
        %v6912 = vadd.f32 %v6636, %v6803
        %v6913 = vadd.f32 %v6637, %v6807
        %v6914 = vadd.f32 %v6638, %v6809
        %v6915 = vadd.f32 %v6639, %v6808
        %v6916 = vadd.f32 %v6640, %v6812
        %v6917 = vadd.f32 %v6641, %v6814
        %v6918 = vadd.f32 %v6642, %v6813
        %v6919 = vadd.f32 %v6643, %v6817
        %v6920 = vadd.f32 %v6644, %v6819
        %v6921 = vadd.f32 %v6645, %v6818
        %v6922 = vadd.f32 %v6646, %v6822
        %v6923 = vadd.f32 %v6647, %v6824
        %v6924 = vadd.f32 %v6648, %v6823
        %v6925 = vadd.f32 %v6649, %v6827
        %v6926 = vadd.f32 %v6650, %v6829
        %v6927 = vadd.f32 %v6651, %v6828
        %v6928 = vadd.f32 %v6652, %v6832
        %v6929 = vadd.f32 %v6653, %v6834
        %v6930 = vadd.f32 %v6654, %v6833
        %s6931 = scalar_lea.vmem %s266, 64 [#allocation3]
        %v6932 = vld [vmem:[%s6931] sm:$0xff]
        %v6933 = vld [vmem:[%s6931 + $0x8] sm:$0xff]
        %v6934 = vld [vmem:[%s6931 + $0x10] sm:$0xff]
        %v6935 = vld [vmem:[%s6931 + $0x18] sm:$0xff]
        %v6936 = vpack.c.bf16 %v6933, %v6932
        %v6937 = vpack.c.bf16 %v6935, %v6934
        %v6986 = vrot.slane %v6883, 1
        %v6987 = vrot.slane %v6884, 1
        %v6988 = vsel %vm1073, %v6986, %v6987
        %v6989 = vrot.slane %v6885, 1
        %v6990 = vsel %vm1073, %v6987, %v6989
        %v6991 = vrot.slane %v6886, 1
        %v6992 = vrot.slane %v6887, 1
        %v6993 = vsel %vm1073, %v6991, %v6992
        %v6994 = vrot.slane %v6888, 1
        %v6995 = vsel %vm1073, %v6992, %v6994
        %v6996 = vrot.slane %v6889, 1
        %v6997 = vrot.slane %v6890, 1
        %v6998 = vsel %vm1073, %v6996, %v6997
        %v6999 = vrot.slane %v6891, 1
        %v7000 = vsel %vm1073, %v6997, %v6999
        %v7001 = vrot.slane %v6892, 1
        %v7002 = vrot.slane %v6893, 1
        %v7003 = vsel %vm1073, %v7001, %v7002
        %v7004 = vrot.slane %v6894, 1
        %v7005 = vsel %vm1073, %v7002, %v7004
        %v7006 = vrot.slane %v6895, 1
        %v7007 = vrot.slane %v6896, 1
        %v7008 = vsel %vm1073, %v7006, %v7007
        %v7009 = vrot.slane %v6897, 1
        %v7010 = vsel %vm1073, %v7007, %v7009
        %v7011 = vrot.slane %v6898, 1
        %v7012 = vrot.slane %v6899, 1
        %v7013 = vsel %vm1073, %v7011, %v7012
        %v7014 = vrot.slane %v6900, 1
        %v7015 = vsel %vm1073, %v7012, %v7014
        %v7016 = vrot.slane %v6901, 1
        %v7017 = vrot.slane %v6902, 1
        %v7018 = vsel %vm1073, %v7016, %v7017
        %v7019 = vrot.slane %v6903, 1
        %v7020 = vsel %vm1073, %v7017, %v7019
        %v7021 = vrot.slane %v6904, 1
        %v7022 = vrot.slane %v6905, 1
        %v7023 = vsel %vm1073, %v7021, %v7022
        %v7024 = vrot.slane %v6906, 1
        %v7025 = vsel %vm1073, %v7022, %v7024
        %v7026 = vrot.slane %v6907, 1
        %v7027 = vrot.slane %v6908, 1
        %v7028 = vsel %vm1073, %v7026, %v7027
        %v7029 = vrot.slane %v6909, 1
        %v7030 = vsel %vm1073, %v7027, %v7029
        %v7031 = vrot.slane %v6910, 1
        %v7032 = vrot.slane %v6911, 1
        %v7033 = vsel %vm1073, %v7031, %v7032
        %v7034 = vrot.slane %v6912, 1
        %v7035 = vsel %vm1073, %v7032, %v7034
        %v7036 = vrot.slane %v6913, 1
        %v7037 = vrot.slane %v6914, 1
        %v7038 = vsel %vm1073, %v7036, %v7037
        %v7039 = vrot.slane %v6915, 1
        %v7040 = vsel %vm1073, %v7037, %v7039
        %v7041 = vrot.slane %v6916, 1
        %v7042 = vrot.slane %v6917, 1
        %v7043 = vsel %vm1073, %v7041, %v7042
        %v7044 = vrot.slane %v6918, 1
        %v7045 = vsel %vm1073, %v7042, %v7044
        %v7046 = vrot.slane %v6919, 1
        %v7047 = vrot.slane %v6920, 1
        %v7048 = vsel %vm1073, %v7046, %v7047
        %v7049 = vrot.slane %v6921, 1
        %v7050 = vsel %vm1073, %v7047, %v7049
        %v7051 = vrot.slane %v6922, 1
        %v7052 = vrot.slane %v6923, 1
        %v7053 = vsel %vm1073, %v7051, %v7052
        %v7054 = vrot.slane %v6924, 1
        %v7055 = vsel %vm1073, %v7052, %v7054
        %v7056 = vrot.slane %v6925, 1
        %v7057 = vrot.slane %v6926, 1
        %v7058 = vsel %vm1073, %v7056, %v7057
        %v7059 = vrot.slane %v6927, 1
        %v7060 = vsel %vm1073, %v7057, %v7059
        %v7061 = vrot.slane %v6928, 1
        %v7062 = vrot.slane %v6929, 1
        %v7063 = vsel %vm1073, %v7061, %v7062
        %v7064 = vrot.slane %v6930, 1
        %v7065 = vsel %vm1073, %v7062, %v7064
        %v7098 = vpack.c.bf16 %v6990, %v6988
        %v7099 = vpack.c.bf16 %v6995, %v6993
        %v7100 = vpack.c.bf16 %v7000, %v6998
        %v7101 = vpack.c.bf16 %v7005, %v7003
        %v7102 = vpack.c.bf16 %v7010, %v7008
        %v7103 = vpack.c.bf16 %v7015, %v7013
        %v7104 = vpack.c.bf16 %v7020, %v7018
        %v7105 = vpack.c.bf16 %v7025, %v7023
        %v7106 = vpack.c.bf16 %v7030, %v7028
        %v7107 = vpack.c.bf16 %v7035, %v7033
        %v7108 = vpack.c.bf16 %v7040, %v7038
        %v7109 = vpack.c.bf16 %v7045, %v7043
        %v7110 = vpack.c.bf16 %v7050, %v7048
        %v7111 = vpack.c.bf16 %v7055, %v7053
        %v7112 = vpack.c.bf16 %v7060, %v7058
        %v7113 = vpack.c.bf16 %v7065, %v7063
        %v7115 = vsel %vm519, %v7098, 0
        %v7118 = vsel %vm519, %v7099, 0
        %v7121 = vsel %vm519, %v7100, 0
        %v7124 = vsel %vm519, %v7101, 0
        %v7127 = vsel %vm519, %v7102, 0
        %v7130 = vsel %vm519, %v7103, 0
        %v7133 = vsel %vm519, %v7104, 0
        %v7136 = vsel %vm519, %v7105, 0
        %v7139 = vsel %vm519, %v7106, 0
        %v7142 = vsel %vm519, %v7107, 0
        %v7145 = vsel %vm519, %v7108, 0
        %v7148 = vsel %vm519, %v7109, 0
        %v7151 = vsel %vm519, %v7110, 0
        %v7154 = vsel %vm519, %v7111, 0
        %v7157 = vsel %vm519, %v7112, 0
        %v7160 = vsel %vm519, %v7113, 0
        %7162 = vmatprep.subr.bf16.mxu0 0
        %7163 = vmatpush1.bf16.msra.mxu0 %v6936
        %7164 = vmatprep.subr.bf16.mxu0 0
        %7165 = vmatpush1.bf16.msra.mxu0 %v6937
        %7166 = vmatprep.subr.bf16.mxu0 0
        %7167 = vmatpush1.bf16.msra.mxu0 0
        %7168 = vmatprep.subr.bf16.mxu0 0
        %7169 = vmatpush1.bf16.msra.mxu0 0
        %7170 = vmatprep.subr.bf16.mxu0 0
        %7171 = vmatpush1.bf16.msra.mxu0 0
        %7172 = vmatprep.subr.bf16.mxu0 0
        %7173 = vmatpush1.bf16.msra.mxu0 0
        %7174 = vmatprep.subr.bf16.mxu0 0
        %7175 = vmatpush1.bf16.msra.mxu0 0
        %7176 = vmatprep.subr.bf16.mxu0 0
        %7177 = vmatpush1.bf16.msra.mxu0 0
        %7178 = vmatprep.subr.bf16.mxu0 0
        %7179 = vmatpush1.bf16.msra.mxu0 0
        %7180 = vmatprep.subr.bf16.mxu0 0
        %7181 = vmatpush1.bf16.msra.mxu0 0
        %7182 = vmatprep.subr.bf16.mxu0 0
        %7183 = vmatpush1.bf16.msra.mxu0 0
        %7184 = vmatprep.subr.bf16.mxu0 0
        %7185 = vmatpush1.bf16.msra.mxu0 0
        %7186 = vmatprep.subr.bf16.mxu0 0
        %7187 = vmatpush1.bf16.msra.mxu0 0
        %7188 = vmatprep.subr.bf16.mxu0 0
        %7189 = vmatpush1.bf16.msra.mxu0 0
        %7190 = vmatprep.subr.bf16.mxu0 0
        %7191 = vmatpush1.bf16.msra.mxu0 0
        %7192 = vmatprep.subr.bf16.mxu0 0
        %7193 = vmatpush1.bf16.msra.mxu0 0
        %7194 = vmatprep.mubr.bf16.mxu0 0
        %7195 = vmatmul.mubr.bf16.gmra.mrb[0].mxu0 %v7115
        %v7196 = vpop.f32.mrb[0].mxu0
        %v7197 = vadd.f32 0.0, %v7196
        %v7198 = vpop.f32.mrb[0].mxu0
        %v7199 = vpop.f32.mrb[0].mxu0
        %v7200 = vadd.f32 0.0, %v7199
        %v7201 = vpop.f32.mrb[0].mxu0
        %7202 = vmatprep.mubr.bf16.mxu0 0
        %7203 = vmatmul.mubr.bf16.gmra.mrb[0].mxu0 %v7118
        %v7204 = vpop.f32.mrb[0].mxu0
        %v7205 = vadd.f32 0.0, %v7204
        %v7206 = vpop.f32.mrb[0].mxu0
        %v7207 = vpop.f32.mrb[0].mxu0
        %v7208 = vadd.f32 0.0, %v7207
        %v7209 = vpop.f32.mrb[0].mxu0
        %7210 = vmatprep.mubr.bf16.mxu0 0
        %7211 = vmatmul.mubr.bf16.gmra.mrb[0].mxu0 %v7121
        %v7212 = vpop.f32.mrb[0].mxu0
        %v7213 = vadd.f32 0.0, %v7212
        %v7214 = vpop.f32.mrb[0].mxu0
        %v7215 = vpop.f32.mrb[0].mxu0
        %v7216 = vadd.f32 0.0, %v7215
        %v7217 = vpop.f32.mrb[0].mxu0
        %7218 = vmatprep.mubr.bf16.mxu0 0
        %7219 = vmatmul.mubr.bf16.gmra.mrb[0].mxu0 %v7124
        %v7220 = vpop.f32.mrb[0].mxu0
        %v7221 = vadd.f32 0.0, %v7220
        %v7222 = vpop.f32.mrb[0].mxu0
        %v7223 = vpop.f32.mrb[0].mxu0
        %v7224 = vadd.f32 0.0, %v7223
        %v7225 = vpop.f32.mrb[0].mxu0
        %7226 = vmatprep.mubr.bf16.mxu0 0
        %7227 = vmatmul.mubr.bf16.gmra.mrb[0].mxu0 %v7127
        %v7228 = vpop.f32.mrb[0].mxu0
        %v7229 = vadd.f32 0.0, %v7228
        %v7230 = vpop.f32.mrb[0].mxu0
        %v7231 = vpop.f32.mrb[0].mxu0
        %v7232 = vadd.f32 0.0, %v7231
        %v7233 = vpop.f32.mrb[0].mxu0
        %7234 = vmatprep.mubr.bf16.mxu0 0
        %7235 = vmatmul.mubr.bf16.gmra.mrb[0].mxu0 %v7130
        %v7236 = vpop.f32.mrb[0].mxu0
        %v7237 = vadd.f32 0.0, %v7236
        %v7238 = vpop.f32.mrb[0].mxu0
        %v7239 = vpop.f32.mrb[0].mxu0
        %v7240 = vadd.f32 0.0, %v7239
        %v7241 = vpop.f32.mrb[0].mxu0
        %7242 = vmatprep.mubr.bf16.mxu0 0
        %7243 = vmatmul.mubr.bf16.gmra.mrb[0].mxu0 %v7133
        %v7244 = vpop.f32.mrb[0].mxu0
        %v7245 = vadd.f32 0.0, %v7244
        %v7246 = vpop.f32.mrb[0].mxu0
        %v7247 = vpop.f32.mrb[0].mxu0
        %v7248 = vadd.f32 0.0, %v7247
        %v7249 = vpop.f32.mrb[0].mxu0
        %7250 = vmatprep.mubr.bf16.mxu0 0
        %7251 = vmatmul.mubr.bf16.gmra.mrb[0].mxu0 %v7136
        %v7252 = vpop.f32.mrb[0].mxu0
        %v7253 = vadd.f32 0.0, %v7252
        %v7254 = vpop.f32.mrb[0].mxu0
        %v7255 = vpop.f32.mrb[0].mxu0
        %v7256 = vadd.f32 0.0, %v7255
        %v7257 = vpop.f32.mrb[0].mxu0
        %7258 = vmatprep.mubr.bf16.mxu0 0
        %7259 = vmatmul.mubr.bf16.gmra.mrb[0].mxu0 %v7139
        %v7260 = vpop.f32.mrb[0].mxu0
        %v7261 = vadd.f32 0.0, %v7260
        %v7262 = vpop.f32.mrb[0].mxu0
        %v7263 = vpop.f32.mrb[0].mxu0
        %v7264 = vadd.f32 0.0, %v7263
        %v7265 = vpop.f32.mrb[0].mxu0
        %7266 = vmatprep.mubr.bf16.mxu0 0
        %7267 = vmatmul.mubr.bf16.gmra.mrb[0].mxu0 %v7142
        %v7268 = vpop.f32.mrb[0].mxu0
        %v7269 = vadd.f32 0.0, %v7268
        %v7270 = vpop.f32.mrb[0].mxu0
        %v7271 = vpop.f32.mrb[0].mxu0
        %v7272 = vadd.f32 0.0, %v7271
        %v7273 = vpop.f32.mrb[0].mxu0
        %7274 = vmatprep.mubr.bf16.mxu0 0
        %7275 = vmatmul.mubr.bf16.gmra.mrb[0].mxu0 %v7145
        %v7276 = vpop.f32.mrb[0].mxu0
        %v7277 = vadd.f32 0.0, %v7276
        %v7278 = vpop.f32.mrb[0].mxu0
        %v7279 = vpop.f32.mrb[0].mxu0
        %v7280 = vadd.f32 0.0, %v7279
        %v7281 = vpop.f32.mrb[0].mxu0
        %7282 = vmatprep.mubr.bf16.mxu0 0
        %7283 = vmatmul.mubr.bf16.gmra.mrb[0].mxu0 %v7148
        %v7284 = vpop.f32.mrb[0].mxu0
        %v7285 = vadd.f32 0.0, %v7284
        %v7286 = vpop.f32.mrb[0].mxu0
        %v7287 = vpop.f32.mrb[0].mxu0
        %v7288 = vadd.f32 0.0, %v7287
        %v7289 = vpop.f32.mrb[0].mxu0
        %7290 = vmatprep.mubr.bf16.mxu0 0
        %7291 = vmatmul.mubr.bf16.gmra.mrb[0].mxu0 %v7151
        %v7292 = vpop.f32.mrb[0].mxu0
        %v7293 = vadd.f32 0.0, %v7292
        %v7294 = vpop.f32.mrb[0].mxu0
        %v7295 = vpop.f32.mrb[0].mxu0
        %v7296 = vadd.f32 0.0, %v7295
        %v7297 = vpop.f32.mrb[0].mxu0
        %7298 = vmatprep.mubr.bf16.mxu0 0
        %7299 = vmatmul.mubr.bf16.gmra.mrb[0].mxu0 %v7154
        %v7300 = vpop.f32.mrb[0].mxu0
        %v7301 = vadd.f32 0.0, %v7300
        %v7302 = vpop.f32.mrb[0].mxu0
        %v7303 = vpop.f32.mrb[0].mxu0
        %v7304 = vadd.f32 0.0, %v7303
        %v7305 = vpop.f32.mrb[0].mxu0
        %7306 = vmatprep.mubr.bf16.mxu0 0
        %7307 = vmatmul.mubr.bf16.gmra.mrb[0].mxu0 %v7157
        %v7308 = vpop.f32.mrb[0].mxu0
        %v7309 = vadd.f32 0.0, %v7308
        %v7310 = vpop.f32.mrb[0].mxu0
        %v7311 = vpop.f32.mrb[0].mxu0
        %v7312 = vadd.f32 0.0, %v7311
        %v7313 = vpop.f32.mrb[0].mxu0
        %7314 = vmatprep.mubr.bf16.mxu0 0
        %7315 = vmatmul.mubr.bf16.gmra.mrb[0].mxu0 %v7160
        %v7316 = vpop.f32.mrb[0].mxu0
        %v7317 = vadd.f32 0.0, %v7316
        %v7318 = vpop.f32.mrb[0].mxu0
        %v7319 = vpop.f32.mrb[0].mxu0
        %v7320 = vadd.f32 0.0, %v7319
        %v7321 = vpop.f32.mrb[0].mxu0
        %7322 = vdwg.mxu0
        %v7323 = vld [vmem:[%s324 + $0x2] sm:$0x1]
        %v7324 = vlaneseq
        %v7325 = vshrl.u32 %v7324, 7
        %v7326 = vsub.s32 0, %v7325
        %v7327 = vrot.slane %v7323, %v7326
        %v7328 = vmul.f32 %v7197, %v7327
        %v7329 = vmul.f32 %v7200, %v7327
        %v7330 = vmul.f32 %v7205, %v7327
        %v7331 = vmul.f32 %v7208, %v7327
        %v7332 = vmul.f32 %v7213, %v7327
        %v7333 = vmul.f32 %v7216, %v7327
        %v7334 = vmul.f32 %v7221, %v7327
        %v7335 = vmul.f32 %v7224, %v7327
        %v7336 = vmul.f32 %v7229, %v7327
        %v7337 = vmul.f32 %v7232, %v7327
        %v7338 = vmul.f32 %v7237, %v7327
        %v7339 = vmul.f32 %v7240, %v7327
        %v7340 = vmul.f32 %v7245, %v7327
        %v7341 = vmul.f32 %v7248, %v7327
        %v7342 = vmul.f32 %v7253, %v7327
        %v7343 = vmul.f32 %v7256, %v7327
        %v7344 = vmul.f32 %v7261, %v7327
        %v7345 = vmul.f32 %v7264, %v7327
        %v7346 = vmul.f32 %v7269, %v7327
        %v7347 = vmul.f32 %v7272, %v7327
        %v7348 = vmul.f32 %v7277, %v7327
        %v7349 = vmul.f32 %v7280, %v7327
        %v7350 = vmul.f32 %v7285, %v7327
        %v7351 = vmul.f32 %v7288, %v7327
        %v7352 = vmul.f32 %v7293, %v7327
        %v7353 = vmul.f32 %v7296, %v7327
        %v7354 = vmul.f32 %v7301, %v7327
        %v7355 = vmul.f32 %v7304, %v7327
        %v7356 = vmul.f32 %v7309, %v7327
        %v7357 = vmul.f32 %v7312, %v7327
        %v7358 = vmul.f32 %v7317, %v7327
        %v7359 = vmul.f32 %v7320, %v7327
        %v7360 = vld [vmem:[%s328 + $0x2] sm:$0x1]
        %v7361 = vlaneseq
        %v7362 = vshrl.u32 %v7361, 7
        %v7363 = vsub.s32 0, %v7362
        %v7364 = vrot.slane %v7360, %v7363
        %v7365 = vadd.f32 %v7328, %v7364
        %v7366 = vadd.f32 %v7329, %v7364
        %v7367 = vadd.f32 %v7330, %v7364
        %v7368 = vadd.f32 %v7331, %v7364
        %v7369 = vadd.f32 %v7332, %v7364
        %v7370 = vadd.f32 %v7333, %v7364
        %v7371 = vadd.f32 %v7334, %v7364
        %v7372 = vadd.f32 %v7335, %v7364
        %v7373 = vadd.f32 %v7336, %v7364
        %v7374 = vadd.f32 %v7337, %v7364
        %v7375 = vadd.f32 %v7338, %v7364
        %v7376 = vadd.f32 %v7339, %v7364
        %v7377 = vadd.f32 %v7340, %v7364
        %v7378 = vadd.f32 %v7341, %v7364
        %v7379 = vadd.f32 %v7342, %v7364
        %v7380 = vadd.f32 %v7343, %v7364
        %v7381 = vadd.f32 %v7344, %v7364
        %v7382 = vadd.f32 %v7345, %v7364
        %v7383 = vadd.f32 %v7346, %v7364
        %v7384 = vadd.f32 %v7347, %v7364
        %v7385 = vadd.f32 %v7348, %v7364
        %v7386 = vadd.f32 %v7349, %v7364
        %v7387 = vadd.f32 %v7350, %v7364
        %v7388 = vadd.f32 %v7351, %v7364
        %v7389 = vadd.f32 %v7352, %v7364
        %v7390 = vadd.f32 %v7353, %v7364
        %v7391 = vadd.f32 %v7354, %v7364
        %v7392 = vadd.f32 %v7355, %v7364
        %v7393 = vadd.f32 %v7356, %v7364
        %v7394 = vadd.f32 %v7357, %v7364
        %v7395 = vadd.f32 %v7358, %v7364
        %v7396 = vadd.f32 %v7359, %v7364
        %v7397 = vadd.f32 %v454, %v7365
        %v7398 = vadd.f32 %v455, %v7366
        %v7399 = vadd.f32 %v456, %v7367
        %v7400 = vadd.f32 %v457, %v7368
        %v7401 = vadd.f32 %v458, %v7369
        %v7402 = vadd.f32 %v459, %v7370
        %v7403 = vadd.f32 %v460, %v7371
        %v7404 = vadd.f32 %v461, %v7372
        %v7405 = vadd.f32 %v462, %v7373
        %v7406 = vadd.f32 %v463, %v7374
        %v7407 = vadd.f32 %v464, %v7375
        %v7408 = vadd.f32 %v465, %v7376
        %v7409 = vadd.f32 %v466, %v7377
        %v7410 = vadd.f32 %v467, %v7378
        %v7411 = vadd.f32 %v468, %v7379
        %v7412 = vadd.f32 %v469, %v7380
        %v7413 = vadd.f32 %v470, %v7381
        %v7414 = vadd.f32 %v471, %v7382
        %v7415 = vadd.f32 %v472, %v7383
        %v7416 = vadd.f32 %v473, %v7384
        %v7417 = vadd.f32 %v474, %v7385
        %v7418 = vadd.f32 %v475, %v7386
        %v7419 = vadd.f32 %v476, %v7387
        %v7420 = vadd.f32 %v477, %v7388
        %v7421 = vadd.f32 %v478, %v7389
        %v7422 = vadd.f32 %v479, %v7390
        %v7423 = vadd.f32 %v480, %v7391
        %v7424 = vadd.f32 %v481, %v7392
        %v7425 = vadd.f32 %v482, %v7393
        %v7426 = vadd.f32 %v483, %v7394
        %v7427 = vadd.f32 %v484, %v7395
        %v7428 = vadd.f32 %v485, %v7396
        %7429 = vst.msk [vmem:[%s310] sm:$0xff] %vm519, %v7397
        %7430 = vst.msk [vmem:[%s310 + $0x8] sm:$0xff] %vm519, %v7398
        %7431 = vst.msk [vmem:[%s310 + $0x10] sm:$0xff] %vm519, %v7399
        %7432 = vst.msk [vmem:[%s310 + $0x18] sm:$0xff] %vm519, %v7400
        %7433 = vst.msk [vmem:[%s310 + $0x20] sm:$0xff] %vm519, %v7401
        %7434 = vst.msk [vmem:[%s310 + $0x28] sm:$0xff] %vm519, %v7402
        %7435 = vst.msk [vmem:[%s310 + $0x30] sm:$0xff] %vm519, %v7403
        %7436 = vst.msk [vmem:[%s310 + $0x38] sm:$0xff] %vm519, %v7404
        %7437 = vst.msk [vmem:[%s310 + $0x40] sm:$0xff] %vm519, %v7405
        %7438 = vst.msk [vmem:[%s310 + $0x48] sm:$0xff] %vm519, %v7406
        %7439 = vst.msk [vmem:[%s310 + $0x50] sm:$0xff] %vm519, %v7407
        %7440 = vst.msk [vmem:[%s310 + $0x58] sm:$0xff] %vm519, %v7408
        %7441 = vst.msk [vmem:[%s310 + $0x60] sm:$0xff] %vm519, %v7409
        %7442 = vst.msk [vmem:[%s310 + $0x68] sm:$0xff] %vm519, %v7410
        %7443 = vst.msk [vmem:[%s310 + $0x70] sm:$0xff] %vm519, %v7411
        %7444 = vst.msk [vmem:[%s310 + $0x78] sm:$0xff] %vm519, %v7412
        %7445 = vst.msk [vmem:[%s310 + $0x80] sm:$0xff] %vm519, %v7413
        %7446 = vst.msk [vmem:[%s310 + $0x88] sm:$0xff] %vm519, %v7414
        %7447 = vst.msk [vmem:[%s310 + $0x90] sm:$0xff] %vm519, %v7415
        %7448 = vst.msk [vmem:[%s310 + $0x98] sm:$0xff] %vm519, %v7416
        %7449 = vst.msk [vmem:[%s310 + $0xa0] sm:$0xff] %vm519, %v7417
        %7450 = vst.msk [vmem:[%s310 + $0xa8] sm:$0xff] %vm519, %v7418
        %7451 = vst.msk [vmem:[%s310 + $0xb0] sm:$0xff] %vm519, %v7419
        %7452 = vst.msk [vmem:[%s310 + $0xb8] sm:$0xff] %vm519, %v7420
        %7453 = vst.msk [vmem:[%s310 + $0xc0] sm:$0xff] %vm519, %v7421
        %7454 = vst.msk [vmem:[%s310 + $0xc8] sm:$0xff] %vm519, %v7422
        %7455 = vst.msk [vmem:[%s310 + $0xd0] sm:$0xff] %vm519, %v7423
        %7456 = vst.msk [vmem:[%s310 + $0xd8] sm:$0xff] %vm519, %v7424
        %7457 = vst.msk [vmem:[%s310 + $0xe0] sm:$0xff] %vm519, %v7425
        %7458 = vst.msk [vmem:[%s310 + $0xe8] sm:$0xff] %vm519, %v7426
        %7459 = vst.msk [vmem:[%s310 + $0xf0] sm:$0xff] %vm519, %v7427
        %7460 = vst.msk [vmem:[%s310 + $0xf8] sm:$0xff] %vm519, %v7428
        %s7461 = sand.u32 %s172, 1
        %s7462 = scalar_lea.sflag [#allocation5], %s7461
        %s7463 = sand.u32 %s172, 1
        %s7464 = smul.addr %s7463, 256
        %s7465 = scalar_lea.vmem [#allocation6], %s7464
        // Predicated region
        $region49: #{middle_flow.1} parent=39 // pred_check
          %p7466 = pneg %p182
        $region50: #{middle_flow.1} parent=39 // pred_check_branch
          %7468 = sbr.rel (%p7466) target = $region52
        $region51: #{middle_flow.1} parent=39 // pred_region
          %s7470 = ssub.s32 4096, 4096
          %7471 = vsyncadd %s7462, %s7470
          %s7472 = smul.addr %s26, 32
          %s7473 = smul.addr %s7472, 128
          %s7474 = scalar_lea.hbm %s5, %s7473
          %s7475 = sshll.u32 %s7465, 4
          %s7476 = int_to_ptr.vmem [resolvable:$true] %s7475
          %7481 = dma.vmem_to_hbm [thread:$0]  %s7476, 4096, %s7474, %s7462, 128, 128, 8
        $region52: #{middle_flow.1} parent=39 // pred_fallthru
          _
      $region40: #{middle_flow.1} parent=5 // pred_fallthru
        _
      %p7482 = scmp.le.s32.totalorder 2, %s17
      // Predicated region
      $region53: #{middle_flow.1} parent=5 // pred_check
        %p7483 = pneg %p7482
      $region54: #{middle_flow.1} parent=5 // pred_check_branch
        %7485 = sbr.rel (%p7483) target = $region56
      $region55: #{middle_flow.1} parent=5 // pred_region
        %s7486 = ssub.s32 %s17, 2
        // Predicated region
        $region57: #{middle_flow.1} parent=55 // pred_check
          %p7487 = pneg %p188
        $region58: #{middle_flow.1} parent=55 // pred_check_branch
          %7489 = sbr.rel (%p7487) target = $region60
        $region59: #{middle_flow.1} parent=55 // pred_region
          %s7490 = sand.u32 %s173, 1
          %s7491 = scalar_lea.sflag [#allocation5], %s7490
          %s7492 = sand.u32 %s173, 1
          %s7493 = smul.addr %s7492, 256
          %s7494 = scalar_lea.vmem [#allocation6], %s7493
          %7495 = dma.done %s7491, 4096
        $region60: #{middle_flow.1} parent=55 // pred_fallthru
          _
      $region56: #{middle_flow.1} parent=5 // pred_fallthru
        _
    $region6: #{middle_flow.1} parent=1 // loop_footer
      %s21 = sadd.s32 1, %s17
    $region7: #{middle_flow.1} parent=1 // loop_footer_branch
      %16 = sbr.rel target = $region3
    $region8: #{middle_flow.1} parent=1 // loop_exit
      _
    %7496 = vsyncpa [#allocation4], 1
    %s7497 = scalar_lea.sflag [#allocation4], 1
    %7498 = vsyncpa %s7497, 1
    %7499 = vsyncpa [#allocation5], 1
    %s7500 = scalar_lea.sflag [#allocation5], 1
    %7501 = vsyncpa %s7500, 1

</llo_original>
